<compile_context>
chip_gen: v5e
topology: v5e:2x2
jax: 0.10.0
libtpu: 0.0.40
codegen_flags: <defaults>
</compile_context>

<pallas_src>
from functools import partial

import jax
import jax.numpy as jnp
from jax import lax
from jax.experimental import pallas as pl
from jax.experimental.pallas import tpu as pltpu


_NT_DIMS = (((1,), (1,)), ((), ()))     # contract the last dims of both operands


def _erf(x):
    # Abramowitz & Stegun 7.1.26 (max abs err ~1.5e-7); exp + reciprocal go to
    # the EUP slot, the rest is cheap VPU work.
    a1, a2, a3, a4, a5 = (0.254829592, -0.284496736, 1.421413741,
                          -1.453152027, 1.061405429)
    p = 0.3275911
    ax = jnp.abs(x)
    t = pl.reciprocal(1.0 + p * ax, approx=True)
    poly = ((((a5 * t + a4) * t + a3) * t + a2) * t + a1) * t
    y = 1.0 - poly * jnp.exp(-ax * ax)
    return jnp.where(x >= 0, y, -y)


def _transformer_kernel(x_ref, eye_ref, wq_ref, wk_ref, wv_ref, wo_ref, bo_ref,
                        w1_ref, b1_ref, w2_ref, b2_ref,
                        o_ref, act_ref, ho_ref, *, heads, dim_head, eps):
    """One (batch, layer) grid step of the fused transformer.

    x_ref   : (1, C, HW)   input features (only read at layer 0)
    eye_ref : (HW, HW)     bf16 identity used to build K^T via an NT matmul
    w*_ref  : per-layer weights/biases (leading depth axis selected by the grid)
    o_ref   : (1, C, HW)   output (only written at the last layer)
    act_ref : (C, HW) f32  VMEM scratch -- activation resident across layers
    ho_ref  : (hid, HW) f32 VMEM scratch -- per-layer head outputs
    """
    l = pl.program_id(1)
    bf16 = jnp.bfloat16
    eps2 = eps * eps

    @pl.when(l == 0)
    def _():
        act_ref[...] = x_ref[0].astype(jnp.float32)

    x = act_ref[...]                                             # (C, HW) f32

    # ---------------- attention branch ----------------
    # RMSNorm == F.normalize(x, dim=1) * g * sqrt(C); the g*sqrt(C) gain (and
    # the attention scale inside wq) is folded into the weights offline.
    inv = lax.rsqrt(jnp.maximum(jnp.sum(x * x, axis=0, keepdims=True), eps2))
    xu = (x * inv).astype(bf16)                                  # (C, HW)

    q_all = jnp.dot(wq_ref[0], xu, preferred_element_type=jnp.float32)
    k_all = jnp.dot(wk_ref[0], xu, preferred_element_type=jnp.float32)
    v_all = jnp.dot(wv_ref[0], xu, preferred_element_type=jnp.float32)

    eye = eye_ref[...]                                           # (HW, HW) bf16
    for h in range(heads):                                       # static unroll
        lo = h * dim_head
        q_h = q_all[lo:lo + dim_head].astype(bf16)               # (d, HW)
        k_h = k_all[lo:lo + dim_head].astype(bf16)               # (d, HW)
        v_h = v_all[lo:lo + dim_head].astype(bf16)               # (d, HW)
        # K^T via an NT matmul with the identity (keeps every contraction a
        # plain NN/NT MXU op -- no TN layout, no narrow XLU transpose).
        kt_h = lax.dot_general(eye, k_h, _NT_DIMS,
                               preferred_element_type=jnp.float32)   # (HW, d)
        # s^T[j, i] = <k_j, q_i>; softmax over keys j (sublane axis).
        st = jnp.dot(kt_h.astype(bf16), q_h,
                     preferred_element_type=jnp.float32)         # (HW, HW)
        st = st - jnp.max(st, axis=0, keepdims=True)
        p = jnp.exp(st)
        p = p * pl.reciprocal(jnp.sum(p, axis=0, keepdims=True), approx=True)
        # out_h[d, i] = sum_j v[d, j] * attn[i, j]
        out_h = jnp.dot(v_h, p.astype(bf16),
                        preferred_element_type=jnp.float32)      # (d, HW)
        ho_ref[lo:lo + dim_head, :] = out_h

    attn = jnp.dot(wo_ref[0], ho_ref[...].astype(bf16),
                   preferred_element_type=jnp.float32)
    attn = attn + bo_ref[0]                                      # (C, HW)+(C, 1)
    x = x + attn                                                 # residual

    # ---------------- feed-forward branch ----------------
    inv2 = lax.rsqrt(jnp.maximum(jnp.sum(x * x, axis=0, keepdims=True), eps2))
    xu2 = (x * inv2).astype(bf16)
    h1 = jnp.dot(w1_ref[0], xu2, preferred_element_type=jnp.float32)
    h1 = h1 + b1_ref[0]                                          # (Cm, HW)+(Cm, 1)
    # exact (erf-form) GELU; the 0.5 factor is folded into w2 offline.
    h1 = h1 * (1.0 + _erf(h1 * 0.7071067811865476))
    y = jnp.dot(w2_ref[0], h1.astype(bf16), preferred_element_type=jnp.float32)
    y = y + b2_ref[0]                                            # (C, HW)+(C, 1)
    x = x + y                                                    # residual

    act_ref[...] = x                                             # carry to next layer

    @pl.when(l == pl.num_programs(1) - 1)
    def _():
        o_ref[0] = x.astype(o_ref.dtype)


def _prep_params(params, C, dim_head):
    """Offline weight preprocessing: fold RMSNorm gains (g*sqrt(C)), the
    attention scale (d^-0.5) and GELU's 0.5 into the weights, stack layers on a
    leading depth axis, and cast matmul weights to bf16 (biases stay f32)."""
    bf16, f32 = jnp.bfloat16, jnp.float32
    sqrt_c = float(C) ** 0.5
    scale = float(dim_head) ** -0.5

    def stack(fn, dtype):
        return jnp.stack([fn(lp) for lp in params]).astype(dtype)

    return (
        stack(lambda lp: lp["wq"] * lp["g1"] * (sqrt_c * scale), bf16),  # (D,hid,C)
        stack(lambda lp: lp["wk"] * lp["g1"] * sqrt_c, bf16),            # (D,hid,C)
        stack(lambda lp: lp["wv"] * lp["g1"] * sqrt_c, bf16),            # (D,hid,C)
        stack(lambda lp: lp["wo"], bf16),                                # (D,C,hid)
        stack(lambda lp: lp["bo"], f32),                                 # (D,C,1)
        stack(lambda lp: lp["w1"] * lp["g2"] * sqrt_c, bf16),            # (D,Cm,C)
        stack(lambda lp: lp["b1"], f32),                                 # (D,Cm,1)
        stack(lambda lp: 0.5 * lp["w2"], bf16),                          # (D,C,Cm)
        stack(lambda lp: lp["b2"], f32),                                 # (D,C,1)
    )


def transformer_forward(x, params, *, heads, dim_head):
    """Pallas implementation of aura_sr Transformer.forward (NCHW input).

    x:      (B, C, H, W)
    params: list (one per layer) of dicts with keys
            g1 (1,C), wq/wk/wv (hidden,C), wo (C,hidden), bo (C,1),
            g2 (1,C), w1 (Cm,C), b1 (Cm,1), w2 (C,Cm), b2 (C,1)
    """
    B, C, H, W = x.shape
    HW = H * W
    depth = len(params)
    hidden = heads * dim_head

    xf = x.reshape(B, C, HW)                    # lane-dense: H*W on the lane axis
    weights = _prep_params(params, C, dim_head)
    eye = jnp.eye(HW, dtype=jnp.bfloat16)       # MXU-transpose helper

    def wspec(w):
        zeros = (0,) * (w.ndim - 1)
        return pl.BlockSpec((1,) + w.shape[1:], lambda b, l: (l,) + zeros)

    kernel = partial(_transformer_kernel, heads=heads, dim_head=dim_head,
                     eps=1e-12)

    out = pl.pallas_call(
        kernel,
        out_shape=jax.ShapeDtypeStruct((B, C, HW), x.dtype),
        grid=(B, depth),                        # depth innermost: activation stays in VMEM
        in_specs=[
            pl.BlockSpec((1, C, HW), lambda b, l: (b, 0, 0)),   # x: fetched once per b
            pl.BlockSpec((HW, HW), lambda b, l: (0, 0)),        # identity (constant block)
        ] + [wspec(w) for w in weights],
        out_specs=pl.BlockSpec((1, C, HW), lambda b, l: (b, 0, 0)),
        scratch_shapes=[
            pltpu.VMEM((C, HW), jnp.float32),           # resident activation
            pltpu.VMEM((hidden, HW), jnp.float32),      # per-layer head outputs
        ],
        compiler_params=pltpu.CompilerParams(
            dimension_semantics=("parallel", "arbitrary"),
            vmem_limit_bytes=32 * 1024 * 1024),
    )(xf, eye, *weights)
    # TODO(synk): for large H*W, tile the query axis (scores are HW^2) and swap
    # the identity-matmul transpose (HW^2 bf16) for an XLU transpose, and add a
    # second "parallel" grid axis over query tiles so both v7x TensorCores are
    # busy at batch==1.
    return out.reshape(B, C, H, W)


def _ref_transformer(x, params, *, heads, dim_head):
    """Pure-JAX reference mirroring the PyTorch module (f32, HIGHEST precision)."""
    B, C, H, W = x.shape
    HW = H * W
    eps = 1e-12
    prec = lax.Precision.HIGHEST
    hidden = heads * dim_head

    def rmsnorm(t, g):
        n = jnp.sqrt(jnp.sum(t * t, axis=1, keepdims=True))
        return t / jnp.maximum(n, eps) * g.reshape(1, C, 1, 1) * (C ** 0.5)

    def conv1x1(t, w, b=None):
        y = jnp.einsum("oc,bchw->bohw", w, t, precision=prec)
        if b is not None:
            y = y + b.reshape(1, -1, 1, 1)
        return y

    for lp in params:
        xn = rmsnorm(x, lp["g1"])
        q, k, v = (conv1x1(xn, lp["wq"]), conv1x1(xn, lp["wk"]),
                   conv1x1(xn, lp["wv"]))

        def split(t):  # b (h c) x y -> b h (x y) c
            return t.reshape(B, heads, dim_head, HW).transpose(0, 1, 3, 2)

        q, k, v = split(q), split(k), split(v)
        s = jnp.einsum("bhid,bhjd->bhij", q, k, precision=prec) * dim_head ** -0.5
        a = jax.nn.softmax(s, axis=-1)
        o = jnp.einsum("bhij,bhjd->bhid", a, v, precision=prec)
        o = o.transpose(0, 1, 3, 2).reshape(B, hidden, H, W)     # b (h d) x y
        x = x + conv1x1(o, lp["wo"], lp["bo"])

        xn2 = rmsnorm(x, lp["g2"])
        h1 = jax.nn.gelu(conv1x1(xn2, lp["w1"], lp["b1"]), approximate=False)
        x = x + conv1x1(h1, lp["w2"], lp["b2"])
    return x


if __name__ == "__main__":
    key = jax.random.PRNGKey(0)
    B, C, H, W = 2, 32, 16, 16                 # small shapes; H*W = 256 lanes
    heads, dim_head, ff_mult, depth = 4, 8, 4, 2
    hidden = heads * dim_head
    Cm = C * ff_mult

    keys = iter(jax.random.split(key, 1 + depth * 11))
    x = jax.random.normal(next(keys), (B, C, H, W), jnp.float32)

    params = []
    for _ in range(depth):
        lp = {
            "g1": 1.0 + 0.1 * jax.random.normal(next(keys), (1, C), jnp.float32),
            "wq": jax.random.normal(next(keys), (hidden, C), jnp.float32) * C ** -0.5,
            "wk": jax.random.normal(next(keys), (hidden, C), jnp.float32) * C ** -0.5,
            "wv": jax.random.normal(next(keys), (hidden, C), jnp.float32) * C ** -0.5,
            "wo": jax.random.normal(next(keys), (C, hidden), jnp.float32) * hidden ** -0.5,
            "bo": 0.05 * jax.random.normal(next(keys), (C, 1), jnp.float32),
            "g2": 1.0 + 0.1 * jax.random.normal(next(keys), (1, C), jnp.float32),
            "w1": jax.random.normal(next(keys), (Cm, C), jnp.float32) * C ** -0.5,
            "b1": 0.05 * jax.random.normal(next(keys), (Cm, 1), jnp.float32),
            "w2": jax.random.normal(next(keys), (C, Cm), jnp.float32) * Cm ** -0.5,
            "b2": 0.05 * jax.random.normal(next(keys), (C, 1), jnp.float32),
        }
        params.append(lp)

    y = transformer_forward(x, params, heads=heads, dim_head=dim_head)
    y = jax.block_until_ready(y)

    r = _ref_transformer(x, params, heads=heads, dim_head=dim_head)
    err = float(jnp.max(jnp.abs(y - r)))
    # Tolerance sized for bf16 MXU operands (f32 accumulation) and the EUP
    # approximate reciprocals vs the f32 HIGHEST-precision reference across two
    # layers; real bugs produce O(1) errors.
    assert err < 1e-1, f"mismatch vs reference: max abs err = {err}"
    print("KERNEL_OK")
</pallas_src>

<mosaic_0001>
module attributes {stable_mosaic.version = 11 : i64} {
  func.func @_transformer_kernel(%arg0: i32, %arg1: i32, %arg2: memref<1x32x256xf32, #tpu.memory_space<vmem>>, %arg3: memref<256x256xbf16, #tpu.memory_space<vmem>>, %arg4: memref<1x32x32xbf16, #tpu.memory_space<vmem>>, %arg5: memref<1x32x32xbf16, #tpu.memory_space<vmem>>, %arg6: memref<1x32x32xbf16, #tpu.memory_space<vmem>>, %arg7: memref<1x32x32xbf16, #tpu.memory_space<vmem>>, %arg8: memref<1x32x1xf32, #tpu.memory_space<vmem>>, %arg9: memref<1x128x32xbf16, #tpu.memory_space<vmem>>, %arg10: memref<1x128x1xf32, #tpu.memory_space<vmem>>, %arg11: memref<1x32x128xbf16, #tpu.memory_space<vmem>>, %arg12: memref<1x32x1xf32, #tpu.memory_space<vmem>>, %arg13: memref<1x32x256xf32, #tpu.memory_space<vmem>>, %arg14: memref<32x256xf32, #tpu.memory_space<vmem>>, %arg15: memref<32x256xf32, #tpu.memory_space<vmem>>) attributes {dimension_semantics = [#tpu.dimension_semantics<parallel>, #tpu.dimension_semantics<arbitrary>], iteration_bounds = array<i64: 2, 2>, scalar_prefetch = 0 : i64, scratch_operands = 2 : i64, tpu.core_type = #tpu.core_type<tc>, window_params = [{transform_indices = @transform_0, window_bounds = array<i64: 1, 32, 256>}, {pipeline_mode = #tpu.pipeline_mode<synchronous>, transform_indices = @transform_1, window_bounds = array<i64: 256, 256>}, {transform_indices = @transform_2, window_bounds = array<i64: 1, 32, 32>}, {transform_indices = @transform_3, window_bounds = array<i64: 1, 32, 32>}, {transform_indices = @transform_4, window_bounds = array<i64: 1, 32, 32>}, {transform_indices = @transform_5, window_bounds = array<i64: 1, 32, 32>}, {transform_indices = @transform_6, window_bounds = array<i64: 1, 32, 1>}, {transform_indices = @transform_7, window_bounds = array<i64: 1, 128, 32>}, {transform_indices = @transform_8, window_bounds = array<i64: 1, 128, 1>}, {transform_indices = @transform_9, window_bounds = array<i64: 1, 32, 128>}, {transform_indices = @transform_10, window_bounds = array<i64: 1, 32, 1>}, {transform_indices = @transform_11, window_bounds = array<i64: 1, 32, 256>}]} {
    %c0_i32 = arith.constant 0 : i32
    %0 = arith.cmpi eq, %arg1, %c0_i32 : i32
    %1 = arith.extui %0 : i1 to i32
    %c0_i32_0 = arith.constant 0 : i32
    %2 = arith.cmpi ne, %1, %c0_i32_0 : i32
    scf.if %2 {
      %c0_83 = arith.constant 0 : index
      %c0_84 = arith.constant 0 : index
      %c0_85 = arith.constant 0 : index
      %187 = vector.load %arg2[%c0_83, %c0_84, %c0_85] : memref<1x32x256xf32, #tpu.memory_space<vmem>>, vector<1x32x256xf32>
      %188 = vector.shape_cast %187 : vector<1x32x256xf32> to vector<32x256xf32>
      %c0_86 = arith.constant 0 : index
      %c0_87 = arith.constant 0 : index
      %189 = vector.load %arg14[%c0_86, %c0_87] : memref<32x256xf32, #tpu.memory_space<vmem>>, vector<32x256xf32>
      tpu.vector_store %arg14[%c0_86, %c0_87], %188 {strides = array<i32>} : memref<32x256xf32, #tpu.memory_space<vmem>>, vector<32x256xf32>,
    } else {
    }
    %c0 = arith.constant 0 : index
    %c0_1 = arith.constant 0 : index
    %3 = vector.load %arg14[%c0, %c0_1] : memref<32x256xf32, #tpu.memory_space<vmem>>, vector<32x256xf32>
    %4 = arith.mulf %3, %3 : vector<32x256xf32>
    %cst = arith.constant dense<0.000000e+00> : vector<256xf32>
    %5 = vector.multi_reduction <add>, %4, %cst [0] : vector<32x256xf32> to vector<256xf32>
    %6 = vector.shape_cast %5 : vector<256xf32> to vector<1x256xf32>
    %cst_2 = arith.constant 1.000000e-24 : f32
    %7 = vector.broadcast %cst_2 : f32 to vector<1x256xf32>
    %8 = arith.maximumf %6, %7 : vector<1x256xf32>
    %9 = math.rsqrt %8 : vector<1x256xf32>
    %10 = vector.broadcast %9 : vector<1x256xf32> to vector<32x256xf32>
    %11 = arith.mulf %3, %10 : vector<32x256xf32>
    %12 = arith.truncf %11 : vector<32x256xf32> to vector<32x256xbf16>
    %c0_3 = arith.constant 0 : index
    %c0_4 = arith.constant 0 : index
    %c0_5 = arith.constant 0 : index
    %13 = vector.load %arg4[%c0_3, %c0_4, %c0_5] : memref<1x32x32xbf16, #tpu.memory_space<vmem>>, vector<1x32x32xbf16>
    %14 = vector.shape_cast %13 : vector<1x32x32xbf16> to vector<32x32xbf16>
    %cst_6 = arith.constant dense<0.000000e+00> : vector<32x256xf32>
    %15 = tpu.matmul %14, %12, %cst_6 {dimension_numbers = #tpu.dot_dimension_numbers<[1], [0], [0], [1], [0, 0, 1, 1], [], []>} : vector<32x32xbf16>, vector<32x256xbf16>, vector<32x256xf32> -> vector<32x256xf32>
    %c0_7 = arith.constant 0 : index
    %c0_8 = arith.constant 0 : index
    %c0_9 = arith.constant 0 : index
    %16 = vector.load %arg5[%c0_7, %c0_8, %c0_9] : memref<1x32x32xbf16, #tpu.memory_space<vmem>>, vector<1x32x32xbf16>
    %17 = vector.shape_cast %16 : vector<1x32x32xbf16> to vector<32x32xbf16>
    %cst_10 = arith.constant dense<0.000000e+00> : vector<32x256xf32>
    %18 = tpu.matmul %17, %12, %cst_10 {dimension_numbers = #tpu.dot_dimension_numbers<[1], [0], [0], [1], [0, 0, 1, 1], [], []>} : vector<32x32xbf16>, vector<32x256xbf16>, vector<32x256xf32> -> vector<32x256xf32>
    %c0_11 = arith.constant 0 : index
    %c0_12 = arith.constant 0 : index
    %c0_13 = arith.constant 0 : index
    %19 = vector.load %arg6[%c0_11, %c0_12, %c0_13] : memref<1x32x32xbf16, #tpu.memory_space<vmem>>, vector<1x32x32xbf16>
    %20 = vector.shape_cast %19 : vector<1x32x32xbf16> to vector<32x32xbf16>
    %cst_14 = arith.constant dense<0.000000e+00> : vector<32x256xf32>
    %21 = tpu.matmul %20, %12, %cst_14 {dimension_numbers = #tpu.dot_dimension_numbers<[1], [0], [0], [1], [0, 0, 1, 1], [], []>} : vector<32x32xbf16>, vector<32x256xbf16>, vector<32x256xf32> -> vector<32x256xf32>
    %c0_15 = arith.constant 0 : index
    %c0_16 = arith.constant 0 : index
    %22 = vector.load %arg3[%c0_15, %c0_16] : memref<256x256xbf16, #tpu.memory_space<vmem>>, vector<256x256xbf16>
    %23 = vector.extract_strided_slice %15 {offsets = [0, 0], sizes = [8, 256], strides = [1, 1]} : vector<32x256xf32> to vector<8x256xf32>
    %24 = arith.truncf %23 : vector<8x256xf32> to vector<8x256xbf16>
    %25 = vector.extract_strided_slice %18 {offsets = [0, 0], sizes = [8, 256], strides = [1, 1]} : vector<32x256xf32> to vector<8x256xf32>
    %26 = arith.truncf %25 : vector<8x256xf32> to vector<8x256xbf16>
    %27 = vector.extract_strided_slice %21 {offsets = [0, 0], sizes = [8, 256], strides = [1, 1]} : vector<32x256xf32> to vector<8x256xf32>
    %28 = arith.truncf %27 : vector<8x256xf32> to vector<8x256xbf16>
    %cst_17 = arith.constant dense<0.000000e+00> : vector<256x8xf32>
    %29 = tpu.matmul %22, %26, %cst_17 {dimension_numbers = #tpu.dot_dimension_numbers<[1], [1], [0], [0], [0, 0, 1, 0], [], []>} : vector<256x256xbf16>, vector<8x256xbf16>, vector<256x8xf32> -> vector<256x8xf32>
    %30 = arith.truncf %29 : vector<256x8xf32> to vector<256x8xbf16>
    %cst_18 = arith.constant dense<0.000000e+00> : vector<256x256xf32>
    %31 = tpu.matmul %30, %24, %cst_18 {dimension_numbers = #tpu.dot_dimension_numbers<[1], [0], [0], [1], [0, 0, 1, 1], [], []>} : vector<256x8xbf16>, vector<8x256xbf16>, vector<256x256xf32> -> vector<256x256xf32>
    %cst_19 = arith.constant dense<0xFF800000> : vector<256xf32>
    %32 = vector.multi_reduction <maximumf>, %31, %cst_19 [0] : vector<256x256xf32> to vector<256xf32>
    %33 = vector.shape_cast %32 : vector<256xf32> to vector<1x256xf32>
    %34 = vector.broadcast %33 : vector<1x256xf32> to vector<256x256xf32>
    %35 = arith.subf %31, %34 : vector<256x256xf32>
    %36 = math.exp %35 : vector<256x256xf32>
    %cst_20 = arith.constant dense<0.000000e+00> : vector<256xf32>
    %37 = vector.multi_reduction <add>, %36, %cst_20 [0] : vector<256x256xf32> to vector<256xf32>
    %38 = vector.shape_cast %37 : vector<256xf32> to vector<1x256xf32>
    %39 = tpu.reciprocal %38 {approx = true} : vector<1x256xf32> -> vector<1x256xf32>
    %40 = vector.broadcast %39 : vector<1x256xf32> to vector<256x256xf32>
    %41 = arith.mulf %36, %40 : vector<256x256xf32>
    %42 = arith.truncf %41 : vector<256x256xf32> to vector<256x256xbf16>
    %cst_21 = arith.constant dense<0.000000e+00> : vector<8x256xf32>
    %43 = tpu.matmul %28, %42, %cst_21 {dimension_numbers = #tpu.dot_dimension_numbers<[1], [0], [0], [1], [0, 0, 1, 1], [], []>} : vector<8x256xbf16>, vector<256x256xbf16>, vector<8x256xf32> -> vector<8x256xf32>
    %c0_22 = arith.constant 0 : index
    %c0_23 = arith.constant 0 : index
    %44 = vector.load %arg15[%c0_22, %c0_23] : memref<32x256xf32, #tpu.memory_space<vmem>>, vector<8x256xf32>
    tpu.vector_store %arg15[%c0_22, %c0_23], %43 {strides = array<i32>} : memref<32x256xf32, #tpu.memory_space<vmem>>, vector<8x256xf32>,
    %45 = vector.extract_strided_slice %15 {offsets = [8, 0], sizes = [8, 256], strides = [1, 1]} : vector<32x256xf32> to vector<8x256xf32>
    %46 = arith.truncf %45 : vector<8x256xf32> to vector<8x256xbf16>
    %47 = vector.extract_strided_slice %18 {offsets = [8, 0], sizes = [8, 256], strides = [1, 1]} : vector<32x256xf32> to vector<8x256xf32>
    %48 = arith.truncf %47 : vector<8x256xf32> to vector<8x256xbf16>
    %49 = vector.extract_strided_slice %21 {offsets = [8, 0], sizes = [8, 256], strides = [1, 1]} : vector<32x256xf32> to vector<8x256xf32>
    %50 = arith.truncf %49 : vector<8x256xf32> to vector<8x256xbf16>
    %cst_24 = arith.constant dense<0.000000e+00> : vector<256x8xf32>
    %51 = tpu.matmul %22, %48, %cst_24 {dimension_numbers = #tpu.dot_dimension_numbers<[1], [1], [0], [0], [0, 0, 1, 0], [], []>} : vector<256x256xbf16>, vector<8x256xbf16>, vector<256x8xf32> -> vector<256x8xf32>
    %52 = arith.truncf %51 : vector<256x8xf32> to vector<256x8xbf16>
    %cst_25 = arith.constant dense<0.000000e+00> : vector<256x256xf32>
    %53 = tpu.matmul %52, %46, %cst_25 {dimension_numbers = #tpu.dot_dimension_numbers<[1], [0], [0], [1], [0, 0, 1, 1], [], []>} : vector<256x8xbf16>, vector<8x256xbf16>, vector<256x256xf32> -> vector<256x256xf32>
    %cst_26 = arith.constant dense<0xFF800000> : vector<256xf32>
    %54 = vector.multi_reduction <maximumf>, %53, %cst_26 [0] : vector<256x256xf32> to vector<256xf32>
    %55 = vector.shape_cast %54 : vector<256xf32> to vector<1x256xf32>
    %56 = vector.broadcast %55 : vector<1x256xf32> to vector<256x256xf32>
    %57 = arith.subf %53, %56 : vector<256x256xf32>
    %58 = math.exp %57 : vector<256x256xf32>
    %cst_27 = arith.constant dense<0.000000e+00> : vector<256xf32>
    %59 = vector.multi_reduction <add>, %58, %cst_27 [0] : vector<256x256xf32> to vector<256xf32>
    %60 = vector.shape_cast %59 : vector<256xf32> to vector<1x256xf32>
    %61 = tpu.reciprocal %60 {approx = true} : vector<1x256xf32> -> vector<1x256xf32>
    %62 = vector.broadcast %61 : vector<1x256xf32> to vector<256x256xf32>
    %63 = arith.mulf %58, %62 : vector<256x256xf32>
    %64 = arith.truncf %63 : vector<256x256xf32> to vector<256x256xbf16>
    %cst_28 = arith.constant dense<0.000000e+00> : vector<8x256xf32>
    %65 = tpu.matmul %50, %64, %cst_28 {dimension_numbers = #tpu.dot_dimension_numbers<[1], [0], [0], [1], [0, 0, 1, 1], [], []>} : vector<8x256xbf16>, vector<256x256xbf16>, vector<8x256xf32> -> vector<8x256xf32>
    %c8 = arith.constant 8 : index
    %c0_29 = arith.constant 0 : index
    %66 = vector.load %arg15[%c8, %c0_29] : memref<32x256xf32, #tpu.memory_space<vmem>>, vector<8x256xf32>
    tpu.vector_store %arg15[%c8, %c0_29], %65 {strides = array<i32>} : memref<32x256xf32, #tpu.memory_space<vmem>>, vector<8x256xf32>,
    %67 = vector.extract_strided_slice %15 {offsets = [16, 0], sizes = [8, 256], strides = [1, 1]} : vector<32x256xf32> to vector<8x256xf32>
    %68 = arith.truncf %67 : vector<8x256xf32> to vector<8x256xbf16>
    %69 = vector.extract_strided_slice %18 {offsets = [16, 0], sizes = [8, 256], strides = [1, 1]} : vector<32x256xf32> to vector<8x256xf32>
    %70 = arith.truncf %69 : vector<8x256xf32> to vector<8x256xbf16>
    %71 = vector.extract_strided_slice %21 {offsets = [16, 0], sizes = [8, 256], strides = [1, 1]} : vector<32x256xf32> to vector<8x256xf32>
    %72 = arith.truncf %71 : vector<8x256xf32> to vector<8x256xbf16>
    %cst_30 = arith.constant dense<0.000000e+00> : vector<256x8xf32>
    %73 = tpu.matmul %22, %70, %cst_30 {dimension_numbers = #tpu.dot_dimension_numbers<[1], [1], [0], [0], [0, 0, 1, 0], [], []>} : vector<256x256xbf16>, vector<8x256xbf16>, vector<256x8xf32> -> vector<256x8xf32>
    %74 = arith.truncf %73 : vector<256x8xf32> to vector<256x8xbf16>
    %cst_31 = arith.constant dense<0.000000e+00> : vector<256x256xf32>
    %75 = tpu.matmul %74, %68, %cst_31 {dimension_numbers = #tpu.dot_dimension_numbers<[1], [0], [0], [1], [0, 0, 1, 1], [], []>} : vector<256x8xbf16>, vector<8x256xbf16>, vector<256x256xf32> -> vector<256x256xf32>
    %cst_32 = arith.constant dense<0xFF800000> : vector<256xf32>
    %76 = vector.multi_reduction <maximumf>, %75, %cst_32 [0] : vector<256x256xf32> to vector<256xf32>
    %77 = vector.shape_cast %76 : vector<256xf32> to vector<1x256xf32>
    %78 = vector.broadcast %77 : vector<1x256xf32> to vector<256x256xf32>
    %79 = arith.subf %75, %78 : vector<256x256xf32>
    %80 = math.exp %79 : vector<256x256xf32>
    %cst_33 = arith.constant dense<0.000000e+00> : vector<256xf32>
    %81 = vector.multi_reduction <add>, %80, %cst_33 [0] : vector<256x256xf32> to vector<256xf32>
    %82 = vector.shape_cast %81 : vector<256xf32> to vector<1x256xf32>
    %83 = tpu.reciprocal %82 {approx = true} : vector<1x256xf32> -> vector<1x256xf32>
    %84 = vector.broadcast %83 : vector<1x256xf32> to vector<256x256xf32>
    %85 = arith.mulf %80, %84 : vector<256x256xf32>
    %86 = arith.truncf %85 : vector<256x256xf32> to vector<256x256xbf16>
    %cst_34 = arith.constant dense<0.000000e+00> : vector<8x256xf32>
    %87 = tpu.matmul %72, %86, %cst_34 {dimension_numbers = #tpu.dot_dimension_numbers<[1], [0], [0], [1], [0, 0, 1, 1], [], []>} : vector<8x256xbf16>, vector<256x256xbf16>, vector<8x256xf32> -> vector<8x256xf32>
    %c16 = arith.constant 16 : index
    %c0_35 = arith.constant 0 : index
    %88 = vector.load %arg15[%c16, %c0_35] : memref<32x256xf32, #tpu.memory_space<vmem>>, vector<8x256xf32>
    tpu.vector_store %arg15[%c16, %c0_35], %87 {strides = array<i32>} : memref<32x256xf32, #tpu.memory_space<vmem>>, vector<8x256xf32>,
    %89 = vector.extract_strided_slice %15 {offsets = [24, 0], sizes = [8, 256], strides = [1, 1]} : vector<32x256xf32> to vector<8x256xf32>
    %90 = arith.truncf %89 : vector<8x256xf32> to vector<8x256xbf16>
    %91 = vector.extract_strided_slice %18 {offsets = [24, 0], sizes = [8, 256], strides = [1, 1]} : vector<32x256xf32> to vector<8x256xf32>
    %92 = arith.truncf %91 : vector<8x256xf32> to vector<8x256xbf16>
    %93 = vector.extract_strided_slice %21 {offsets = [24, 0], sizes = [8, 256], strides = [1, 1]} : vector<32x256xf32> to vector<8x256xf32>
    %94 = arith.truncf %93 : vector<8x256xf32> to vector<8x256xbf16>
    %cst_36 = arith.constant dense<0.000000e+00> : vector<256x8xf32>
    %95 = tpu.matmul %22, %92, %cst_36 {dimension_numbers = #tpu.dot_dimension_numbers<[1], [1], [0], [0], [0, 0, 1, 0], [], []>} : vector<256x256xbf16>, vector<8x256xbf16>, vector<256x8xf32> -> vector<256x8xf32>
    %96 = arith.truncf %95 : vector<256x8xf32> to vector<256x8xbf16>
    %cst_37 = arith.constant dense<0.000000e+00> : vector<256x256xf32>
    %97 = tpu.matmul %96, %90, %cst_37 {dimension_numbers = #tpu.dot_dimension_numbers<[1], [0], [0], [1], [0, 0, 1, 1], [], []>} : vector<256x8xbf16>, vector<8x256xbf16>, vector<256x256xf32> -> vector<256x256xf32>
    %cst_38 = arith.constant dense<0xFF800000> : vector<256xf32>
    %98 = vector.multi_reduction <maximumf>, %97, %cst_38 [0] : vector<256x256xf32> to vector<256xf32>
    %99 = vector.shape_cast %98 : vector<256xf32> to vector<1x256xf32>
    %100 = vector.broadcast %99 : vector<1x256xf32> to vector<256x256xf32>
    %101 = arith.subf %97, %100 : vector<256x256xf32>
    %102 = math.exp %101 : vector<256x256xf32>
    %cst_39 = arith.constant dense<0.000000e+00> : vector<256xf32>
    %103 = vector.multi_reduction <add>, %102, %cst_39 [0] : vector<256x256xf32> to vector<256xf32>
    %104 = vector.shape_cast %103 : vector<256xf32> to vector<1x256xf32>
    %105 = tpu.reciprocal %104 {approx = true} : vector<1x256xf32> -> vector<1x256xf32>
    %106 = vector.broadcast %105 : vector<1x256xf32> to vector<256x256xf32>
    %107 = arith.mulf %102, %106 : vector<256x256xf32>
    %108 = arith.truncf %107 : vector<256x256xf32> to vector<256x256xbf16>
    %cst_40 = arith.constant dense<0.000000e+00> : vector<8x256xf32>
    %109 = tpu.matmul %94, %108, %cst_40 {dimension_numbers = #tpu.dot_dimension_numbers<[1], [0], [0], [1], [0, 0, 1, 1], [], []>} : vector<8x256xbf16>, vector<256x256xbf16>, vector<8x256xf32> -> vector<8x256xf32>
    %c24 = arith.constant 24 : index
    %c0_41 = arith.constant 0 : index
    %110 = vector.load %arg15[%c24, %c0_41] : memref<32x256xf32, #tpu.memory_space<vmem>>, vector<8x256xf32>
    tpu.vector_store %arg15[%c24, %c0_41], %109 {strides = array<i32>} : memref<32x256xf32, #tpu.memory_space<vmem>>, vector<8x256xf32>,
    %c0_42 = arith.constant 0 : index
    %c0_43 = arith.constant 0 : index
    %c0_44 = arith.constant 0 : index
    %111 = vector.load %arg7[%c0_42, %c0_43, %c0_44] : memref<1x32x32xbf16, #tpu.memory_space<vmem>>, vector<1x32x32xbf16>
    %112 = vector.shape_cast %111 : vector<1x32x32xbf16> to vector<32x32xbf16>
    %c0_45 = arith.constant 0 : index
    %c0_46 = arith.constant 0 : index
    %113 = vector.load %arg15[%c0_45, %c0_46] : memref<32x256xf32, #tpu.memory_space<vmem>>, vector<32x256xf32>
    %114 = arith.truncf %113 : vector<32x256xf32> to vector<32x256xbf16>
    %cst_47 = arith.constant dense<0.000000e+00> : vector<32x256xf32>
    %115 = tpu.matmul %112, %114, %cst_47 {dimension_numbers = #tpu.dot_dimension_numbers<[1], [0], [0], [1], [0, 0, 1, 1], [], []>} : vector<32x32xbf16>, vector<32x256xbf16>, vector<32x256xf32> -> vector<32x256xf32>
    %c0_48 = arith.constant 0 : index
    %c0_49 = arith.constant 0 : index
    %c0_50 = arith.constant 0 : index
    %116 = vector.load %arg8[%c0_48, %c0_49, %c0_50] : memref<1x32x1xf32, #tpu.memory_space<vmem>>, vector<1x32x1xf32>
    %117 = vector.shape_cast %116 : vector<1x32x1xf32> to vector<32x1xf32>
    %118 = vector.broadcast %117 : vector<32x1xf32> to vector<32x256xf32>
    %119 = arith.addf %115, %118 : vector<32x256xf32>
    %120 = arith.addf %3, %119 : vector<32x256xf32>
    %121 = arith.mulf %120, %120 : vector<32x256xf32>
    %cst_51 = arith.constant dense<0.000000e+00> : vector<256xf32>
    %122 = vector.multi_reduction <add>, %121, %cst_51 [0] : vector<32x256xf32> to vector<256xf32>
    %123 = vector.shape_cast %122 : vector<256xf32> to vector<1x256xf32>
    %cst_52 = arith.constant 1.000000e-24 : f32
    %124 = vector.broadcast %cst_52 : f32 to vector<1x256xf32>
    %125 = arith.maximumf %123, %124 : vector<1x256xf32>
    %126 = math.rsqrt %125 : vector<1x256xf32>
    %127 = vector.broadcast %126 : vector<1x256xf32> to vector<32x256xf32>
    %128 = arith.mulf %120, %127 : vector<32x256xf32>
    %129 = arith.truncf %128 : vector<32x256xf32> to vector<32x256xbf16>
    %c0_53 = arith.constant 0 : index
    %c0_54 = arith.constant 0 : index
    %c0_55 = arith.constant 0 : index
    %130 = vector.load %arg9[%c0_53, %c0_54, %c0_55] : memref<1x128x32xbf16, #tpu.memory_space<vmem>>, vector<1x128x32xbf16>
    %131 = vector.shape_cast %130 : vector<1x128x32xbf16> to vector<128x32xbf16>
    %cst_56 = arith.constant dense<0.000000e+00> : vector<128x256xf32>
    %132 = tpu.matmul %131, %129, %cst_56 {dimension_numbers = #tpu.dot_dimension_numbers<[1], [0], [0], [1], [0, 0, 1, 1], [], []>} : vector<128x32xbf16>, vector<32x256xbf16>, vector<128x256xf32> -> vector<128x256xf32>
    %c0_57 = arith.constant 0 : index
    %c0_58 = arith.constant 0 : index
    %c0_59 = arith.constant 0 : index
    %133 = vector.load %arg10[%c0_57, %c0_58, %c0_59] : memref<1x128x1xf32, #tpu.memory_space<vmem>>, vector<1x128x1xf32>
    %134 = vector.shape_cast %133 : vector<1x128x1xf32> to vector<128x1xf32>
    %135 = vector.broadcast %134 : vector<128x1xf32> to vector<128x256xf32>
    %136 = arith.addf %132, %135 : vector<128x256xf32>
    %cst_60 = arith.constant 0.707106769 : f32
    %137 = vector.broadcast %cst_60 : f32 to vector<128x256xf32>
    %138 = arith.mulf %136, %137 : vector<128x256xf32>
    %139 = math.absf %138 : vector<128x256xf32>
    %cst_61 = arith.constant 0.327591091 : f32
    %140 = vector.broadcast %cst_61 : f32 to vector<128x256xf32>
    %141 = arith.mulf %140, %139 : vector<128x256xf32>
    %cst_62 = arith.constant 1.000000e+00 : f32
    %142 = vector.broadcast %cst_62 : f32 to vector<128x256xf32>
    %143 = arith.addf %142, %141 : vector<128x256xf32>
    %144 = tpu.reciprocal %143 {approx = true} : vector<128x256xf32> -> vector<128x256xf32>
    %cst_63 = arith.constant 1.06140542 : f32
    %145 = vector.broadcast %cst_63 : f32 to vector<128x256xf32>
    %146 = arith.mulf %145, %144 : vector<128x256xf32>
    %cst_64 = arith.constant -1.45315206 : f32
    %147 = vector.broadcast %cst_64 : f32 to vector<128x256xf32>
    %148 = arith.addf %146, %147 : vector<128x256xf32>
    %149 = arith.mulf %148, %144 : vector<128x256xf32>
    %cst_65 = arith.constant 1.42141378 : f32
    %150 = vector.broadcast %cst_65 : f32 to vector<128x256xf32>
    %151 = arith.addf %149, %150 : vector<128x256xf32>
    %152 = arith.mulf %151, %144 : vector<128x256xf32>
    %cst_66 = arith.constant -0.284496725 : f32
    %153 = vector.broadcast %cst_66 : f32 to vector<128x256xf32>
    %154 = arith.addf %152, %153 : vector<128x256xf32>
    %155 = arith.mulf %154, %144 : vector<128x256xf32>
    %cst_67 = arith.constant 0.254829586 : f32
    %156 = vector.broadcast %cst_67 : f32 to vector<128x256xf32>
    %157 = arith.addf %155, %156 : vector<128x256xf32>
    %158 = arith.mulf %157, %144 : vector<128x256xf32>
    %cst_68 = arith.constant 0.000000e+00 : f32
    %159 = vector.broadcast %cst_68 : f32 to vector<128x256xf32>
    %160 = arith.subf %159, %139 : vector<128x256xf32>
    %161 = arith.mulf %160, %139 : vector<128x256xf32>
    %162 = math.exp %161 : vector<128x256xf32>
    %163 = arith.mulf %158, %162 : vector<128x256xf32>
    %cst_69 = arith.constant 1.000000e+00 : f32
    %164 = vector.broadcast %cst_69 : f32 to vector<128x256xf32>
    %165 = arith.subf %164, %163 : vector<128x256xf32>
    %cst_70 = arith.constant 0.000000e+00 : f32
    %166 = vector.broadcast %cst_70 : f32 to vector<128x256xf32>
    %167 = arith.cmpf oge, %138, %166 : vector<128x256xf32>
    %cst_71 = arith.constant 0.000000e+00 : f32
    %168 = vector.broadcast %cst_71 : f32 to vector<128x256xf32>
    %169 = arith.subf %168, %165 : vector<128x256xf32>
    %170 = arith.select %167, %165, %169 : vector<128x256xi1>, vector<128x256xf32>
    %cst_72 = arith.constant 1.000000e+00 : f32
    %171 = vector.broadcast %cst_72 : f32 to vector<128x256xf32>
    %172 = arith.addf %171, %170 : vector<128x256xf32>
    %173 = arith.mulf %136, %172 : vector<128x256xf32>
    %c0_73 = arith.constant 0 : index
    %c0_74 = arith.constant 0 : index
    %c0_75 = arith.constant 0 : index
    %174 = vector.load %arg11[%c0_73, %c0_74, %c0_75] : memref<1x32x128xbf16, #tpu.memory_space<vmem>>, vector<1x32x128xbf16>
    %175 = vector.shape_cast %174 : vector<1x32x128xbf16> to vector<32x128xbf16>
    %176 = arith.truncf %173 : vector<128x256xf32> to vector<128x256xbf16>
    %cst_76 = arith.constant dense<0.000000e+00> : vector<32x256xf32>
    %177 = tpu.matmul %175, %176, %cst_76 {dimension_numbers = #tpu.dot_dimension_numbers<[1], [0], [0], [1], [0, 0, 1, 1], [], []>} : vector<32x128xbf16>, vector<128x256xbf16>, vector<32x256xf32> -> vector<32x256xf32>
    %c0_77 = arith.constant 0 : index
    %c0_78 = arith.constant 0 : index
    %c0_79 = arith.constant 0 : index
    %178 = vector.load %arg12[%c0_77, %c0_78, %c0_79] : memref<1x32x1xf32, #tpu.memory_space<vmem>>, vector<1x32x1xf32>
    %179 = vector.shape_cast %178 : vector<1x32x1xf32> to vector<32x1xf32>
    %180 = vector.broadcast %179 : vector<32x1xf32> to vector<32x256xf32>
    %181 = arith.addf %177, %180 : vector<32x256xf32>
    %182 = arith.addf %120, %181 : vector<32x256xf32>
    %c0_80 = arith.constant 0 : index
    %c0_81 = arith.constant 0 : index
    %183 = vector.load %arg14[%c0_80, %c0_81] : memref<32x256xf32, #tpu.memory_space<vmem>>, vector<32x256xf32>
    tpu.vector_store %arg14[%c0_80, %c0_81], %182 {strides = array<i32>} : memref<32x256xf32, #tpu.memory_space<vmem>>, vector<32x256xf32>,
    %c1_i32 = arith.constant 1 : i32
    %184 = arith.cmpi eq, %arg1, %c1_i32 : i32
    %185 = arith.extui %184 : i1 to i32
    %c0_i32_82 = arith.constant 0 : i32
    %186 = arith.cmpi ne, %185, %c0_i32_82 : i32
    scf.if %186 {
      %c0_83 = arith.constant 0 : index
      %c0_84 = arith.constant 0 : index
      %c0_85 = arith.constant 0 : index
      %187 = vector.load %arg13[%c0_83, %c0_84, %c0_85] : memref<1x32x256xf32, #tpu.memory_space<vmem>>, vector<1x32x256xf32>
      %188 = vector.shape_cast %187 : vector<1x32x256xf32> to vector<32x256xf32>
      %189 = vector.shape_cast %182 : vector<32x256xf32> to vector<1x32x256xf32>
      tpu.vector_store %arg13[%c0_83, %c0_84, %c0_85], %189 {strides = array<i32>} : memref<1x32x256xf32, #tpu.memory_space<vmem>>, vector<1x32x256xf32>,
    } else {
    }
    return
  }
  func.func @transform_0(%arg0: i32, %arg1: i32) -> (i32, i32, i32) {
    %c0_i32 = arith.constant 0 : i32
    %c0_i32_0 = arith.constant 0 : i32
    %c0_i32_1 = arith.constant 0 : i32
    return %arg0, %c0_i32, %c0_i32_0 : i32, i32, i32
  }
  func.func @transform_1(%arg0: i32, %arg1: i32) -> (i32, i32) {
    %c0_i32 = arith.constant 0 : i32
    %c0_i32_0 = arith.constant 0 : i32
    %c0_i32_1 = arith.constant 0 : i32
    return %c0_i32, %c0_i32_0 : i32, i32
  }
  func.func @transform_2(%arg0: i32, %arg1: i32) -> (i32, i32, i32) {
    %c0_i32 = arith.constant 0 : i32
    %c0_i32_0 = arith.constant 0 : i32
    %c0_i32_1 = arith.constant 0 : i32
    return %arg1, %c0_i32, %c0_i32_0 : i32, i32, i32
  }
  func.func @transform_3(%arg0: i32, %arg1: i32) -> (i32, i32, i32) {
    %c0_i32 = arith.constant 0 : i32
    %c0_i32_0 = arith.constant 0 : i32
    %c0_i32_1 = arith.constant 0 : i32
    return %arg1, %c0_i32, %c0_i32_0 : i32, i32, i32
  }
  func.func @transform_4(%arg0: i32, %arg1: i32) -> (i32, i32, i32) {
    %c0_i32 = arith.constant 0 : i32
    %c0_i32_0 = arith.constant 0 : i32
    %c0_i32_1 = arith.constant 0 : i32
    return %arg1, %c0_i32, %c0_i32_0 : i32, i32, i32
  }
  func.func @transform_5(%arg0: i32, %arg1: i32) -> (i32, i32, i32) {
    %c0_i32 = arith.constant 0 : i32
    %c0_i32_0 = arith.constant 0 : i32
    %c0_i32_1 = arith.constant 0 : i32
    return %arg1, %c0_i32, %c0_i32_0 : i32, i32, i32
  }
  func.func @transform_6(%arg0: i32, %arg1: i32) -> (i32, i32, i32) {
    %c0_i32 = arith.constant 0 : i32
    %c0_i32_0 = arith.constant 0 : i32
    %c0_i32_1 = arith.constant 0 : i32
    return %arg1, %c0_i32, %c0_i32_0 : i32, i32, i32
  }
  func.func @transform_7(%arg0: i32, %arg1: i32) -> (i32, i32, i32) {
    %c0_i32 = arith.constant 0 : i32
    %c0_i32_0 = arith.constant 0 : i32
    %c0_i32_1 = arith.constant 0 : i32
    return %arg1, %c0_i32, %c0_i32_0 : i32, i32, i32
  }
  func.func @transform_8(%arg0: i32, %arg1: i32) -> (i32, i32, i32) {
    %c0_i32 = arith.constant 0 : i32
    %c0_i32_0 = arith.constant 0 : i32
    %c0_i32_1 = arith.constant 0 : i32
    return %arg1, %c0_i32, %c0_i32_0 : i32, i32, i32
  }
  func.func @transform_9(%arg0: i32, %arg1: i32) -> (i32, i32, i32) {
    %c0_i32 = arith.constant 0 : i32
    %c0_i32_0 = arith.constant 0 : i32
    %c0_i32_1 = arith.constant 0 : i32
    return %arg1, %c0_i32, %c0_i32_0 : i32, i32, i32
  }
  func.func @transform_10(%arg0: i32, %arg1: i32) -> (i32, i32, i32) {
    %c0_i32 = arith.constant 0 : i32
    %c0_i32_0 = arith.constant 0 : i32
    %c0_i32_1 = arith.constant 0 : i32
    return %arg1, %c0_i32, %c0_i32_0 : i32, i32, i32
  }
  func.func @transform_11(%arg0: i32, %arg1: i32) -> (i32, i32, i32) {
    %c0_i32 = arith.constant 0 : i32
    %c0_i32_0 = arith.constant 0 : i32
    %c0_i32_1 = arith.constant 0 : i32
    return %arg0, %c0_i32, %c0_i32_0 : i32, i32, i32
  }
}

</mosaic_0001>

<llo_original>
// kernel: tpu_custom_call.1
$region0: #{tpu_custom_call.1}
  #allocation0 [shape = 'u32[]', space=smem, size = 0x4, offset = 0x4, fixed_abs, tag = 'smem constant byte address 0x4 - core index']
  #allocation1 [shape = 'u32[72,128]{1,0:T(1,128)}', space=vmem, size = 0x9000, scoped, tag = 'internal scratch']
  #allocation2 [shape = 'f32[32,256]{1,0:T(8,128)}', space=vmem, size = 0x8000, scoped, tag = 'scratch operand']
  #allocation3 [shape = 'f32[32,256]{1,0:T(8,128)}', space=vmem, size = 0x8000, scoped, tag = 'scratch operand']
  %s0 = inlined_call_operand.vmem [shape: f32[2,32,256], index: 0, kind: input, shape index: {}]
  %s1 = inlined_call_operand.vmem [shape: bf16[256,256], index: 1, kind: input, shape index: {}]
  %s2 = inlined_call_operand.vmem [shape: bf16[2,32,32], index: 2, kind: input, shape index: {}]
  %s3 = inlined_call_operand.vmem [shape: bf16[2,32,32], index: 3, kind: input, shape index: {}]
  %s4 = inlined_call_operand.vmem [shape: bf16[2,32,32], index: 4, kind: input, shape index: {}]
  %s5 = inlined_call_operand.vmem [shape: bf16[2,32,32], index: 5, kind: input, shape index: {}]
  %s6 = inlined_call_operand.vmem [shape: f32[2,32,1], index: 6, kind: input, shape index: {}]
  %s7 = inlined_call_operand.vmem [shape: bf16[2,128,32], index: 7, kind: input, shape index: {}]
  %s8 = inlined_call_operand.vmem [shape: f32[2,128,1], index: 8, kind: input, shape index: {}]
  %s9 = inlined_call_operand.hbm [shape: bf16[2,32,128], index: 9, kind: input, shape index: {}]
  %s10 = inlined_call_operand.vmem [shape: f32[2,32,1], index: 10, kind: input, shape index: {}]
  %s11 = inlined_call_operand.hbm [shape: f32[2,32,256], index: 11, kind: output, shape index: {}]
  %s12 = sld [smem:[#allocation0]]
  $region89: #{tpu_custom_call.1} parent=0
    _
  %s14 = ssub.s32 1, %s12
  %s15 = scalar_select 0, %s14, %s12
  $region1: #{tpu_custom_call.1} parent=0
    #allocation4 [shape = 'u8[16384]{0}', space=vmem, size = 0x4000, scoped, tag = 'input window, operand 9']
    #allocation5 [shape = 's32[2]{0}', space=sflag, size = 0x8, scoped, tag = 'scoped memory for tpu_custom_call.1']
    #allocation6 [shape = 's32[2]{0}', space=sflag, size = 0x8, scoped, tag = 'scoped memory for tpu_custom_call.1']
    #allocation7 [shape = 'u8[65536]{0}', space=vmem, size = 0x10000, scoped, tag = 'output window, operand 0']
    %16 = vsyncpa [#allocation5], 0
    %s17 = scalar_lea.sflag [#allocation5], 1
    %18 = vsyncpa %s17, 0
    %19 = vsyncpa [#allocation6], 0
    %s20 = scalar_lea.sflag [#allocation6], 1
    %21 = vsyncpa %s20, 0
    loop: start=0, step=1, limit=6
    $region2: #{tpu_custom_call.1} parent=1 // loop_pre_header
      _
    $region3: #{tpu_custom_call.1} parent=1 // loop_header
      %s23 = sphi 0, %s27
      %p24 = scmp.ge.s32.totalorder %s23, 6
      %s30 = sphi 0, %s42
      %s31 = sphi 0, %s38
      %s32 = sphi 0, %s30
      %s33 = sphi 0, %s31
      %s34 = sphi 0, %s32
      %s35 = sphi 0, %s33
      %s45 = sphi 0, %s47
      %s48 = sphi 0, %s45
      %s49 = sphi 0, %s48
      %s65 = sphi 0, %s49
      %s69 = sphi 0, %s69
      %s71 = sphi 0, %s69
      %s72 = sphi 0, %s71
      %s86 = sphi 0, %s72
      %s92 = sphi 0, %s94
      %s95 = sphi 0, %s92
      %s96 = sphi 0, %s95
      %s112 = sphi 0, %s96
      %s118 = sphi 0, %s120
      %s121 = sphi 0, %s118
      %s122 = sphi 0, %s121
      %s138 = sphi 0, %s122
      %s144 = sphi 0, %s146
      %s147 = sphi 0, %s144
      %s148 = sphi 0, %s147
      %s164 = sphi 0, %s148
      %s170 = sphi 0, %s172
      %s173 = sphi 0, %s170
      %s174 = sphi 0, %s173
      %s190 = sphi 0, %s174
      %s196 = sphi 0, %s198
      %s199 = sphi 0, %s196
      %s200 = sphi 0, %s199
      %s216 = sphi 0, %s200
      %s222 = sphi 0, %s224
      %s225 = sphi 0, %s222
      %s226 = sphi 0, %s225
      %s242 = sphi 0, %s226
      %s248 = sphi 0, %s250
      %s251 = sphi 0, %s248
      %s252 = sphi 0, %s251
      %s268 = sphi 0, %s252
      %s274 = sphi 0, %s276
      %s277 = sphi 0, %s274
      %s278 = sphi 0, %s277
      %s294 = sphi 0, %s278
      %s300 = sphi 0, %s302
      %s303 = sphi 0, %s300
      %s304 = sphi 0, %s303
      %s320 = sphi 0, %s304
      %s326 = sphi 0, %s328
      %s329 = sphi 0, %s326
      %s330 = sphi 0, %s329
      %s346 = sphi 0, %s330
    $region4: #{tpu_custom_call.1} parent=1 // loop_header_branch
      %26 = sbr.rel (%p24) target = $region8
    $region5: #{tpu_custom_call.1} parent=1 // loop_body
      %s28 = ssub.s32 %s23, 1
      %s29 = ssub.s32 %s23, 2
      %s36 = sadd.s32 1, %s31
      %p37 = scmp.ge.s32.totalorder %s36, 2
      %s38 = scalar_select %p37, 0, %s36
      %s39 = sadd.s32 1, %s30
      %s40 = scalar_select %p37, %s39, %s30
      %p41 = scmp.ge.s32.totalorder %s40, 2
      %s42 = scalar_select %p41, 0, %s40
      %s43 = ssub.s32 %s30, %s42
      %p44 = scmp.eq.s32.totalorder %s43, 0
      %s46 = sadd.s32 %s45, 1
      %s47 = scalar_select %p44, %s45, %s46
      %p50 = pneg %p44
      %p51 = scmp.eq.s32.totalorder %s23, 3
      %p52 = por %p50, %p51
      %p53 = scmp.ne.s32.totalorder %s45, %s48
      %p54 = scmp.eq.s32.totalorder %s23, 0
      %p55 = por %p53, %p54
      %p56 = scmp.ne.s32.totalorder %s45, %s48
      %p57 = scmp.eq.s32.totalorder %s28, 3
      %p58 = por %p56, %p57
      %p59 = scmp.ne.s32.totalorder %s48, %s49
      %p60 = scmp.eq.s32.totalorder %s28, 0
      %p61 = por %p59, %p60
      %p62 = scmp.ne.s32.totalorder %s48, %s49
      %p63 = scmp.eq.s32.totalorder %s29, 3
      %p64 = por %p62, %p63
      %p66 = scmp.ne.s32.totalorder %s49, %s65
      %p67 = scmp.eq.s32.totalorder %s29, 0
      %p68 = por %p66, %p67
      %s70 = sadd.s32 %s69, 1
      %p73 = scmp.eq.s32.totalorder %s23, 3
      %p74 = scmp.ne.s32.totalorder %s69, %s71
      %p75 = scmp.eq.s32.totalorder %s23, 0
      %p76 = por %p74, %p75
      %p77 = scmp.ne.s32.totalorder %s69, %s71
      %p78 = scmp.eq.s32.totalorder %s28, 3
      %p79 = por %p77, %p78
      %p80 = scmp.ne.s32.totalorder %s71, %s72
      %p81 = scmp.eq.s32.totalorder %s28, 0
      %p82 = por %p80, %p81
      %p83 = scmp.ne.s32.totalorder %s71, %s72
      %p84 = scmp.eq.s32.totalorder %s29, 3
      %p85 = por %p83, %p84
      %p87 = scmp.ne.s32.totalorder %s72, %s86
      %p88 = scmp.eq.s32.totalorder %s29, 0
      %p89 = por %p87, %p88
      %s90 = ssub.s32 %s31, %s38
      %p91 = scmp.eq.s32.totalorder %s90, 0
      %s93 = sadd.s32 %s92, 1
      %s94 = scalar_select %p91, %s92, %s93
      %p97 = pneg %p91
      %p98 = scmp.eq.s32.totalorder %s23, 3
      %p99 = por %p97, %p98
      %p100 = scmp.ne.s32.totalorder %s92, %s95
      %p101 = scmp.eq.s32.totalorder %s23, 0
      %p102 = por %p100, %p101
      %p103 = scmp.ne.s32.totalorder %s92, %s95
      %p104 = scmp.eq.s32.totalorder %s28, 3
      %p105 = por %p103, %p104
      %p106 = scmp.ne.s32.totalorder %s95, %s96
      %p107 = scmp.eq.s32.totalorder %s28, 0
      %p108 = por %p106, %p107
      %p109 = scmp.ne.s32.totalorder %s95, %s96
      %p110 = scmp.eq.s32.totalorder %s29, 3
      %p111 = por %p109, %p110
      %p113 = scmp.ne.s32.totalorder %s96, %s112
      %p114 = scmp.eq.s32.totalorder %s29, 0
      %p115 = por %p113, %p114
      %s116 = ssub.s32 %s31, %s38
      %p117 = scmp.eq.s32.totalorder %s116, 0
      %s119 = sadd.s32 %s118, 1
      %s120 = scalar_select %p117, %s118, %s119
      %p123 = pneg %p117
      %p124 = scmp.eq.s32.totalorder %s23, 3
      %p125 = por %p123, %p124
      %p126 = scmp.ne.s32.totalorder %s118, %s121
      %p127 = scmp.eq.s32.totalorder %s23, 0
      %p128 = por %p126, %p127
      %p129 = scmp.ne.s32.totalorder %s118, %s121
      %p130 = scmp.eq.s32.totalorder %s28, 3
      %p131 = por %p129, %p130
      %p132 = scmp.ne.s32.totalorder %s121, %s122
      %p133 = scmp.eq.s32.totalorder %s28, 0
      %p134 = por %p132, %p133
      %p135 = scmp.ne.s32.totalorder %s121, %s122
      %p136 = scmp.eq.s32.totalorder %s29, 3
      %p137 = por %p135, %p136
      %p139 = scmp.ne.s32.totalorder %s122, %s138
      %p140 = scmp.eq.s32.totalorder %s29, 0
      %p141 = por %p139, %p140
      %s142 = ssub.s32 %s31, %s38
      %p143 = scmp.eq.s32.totalorder %s142, 0
      %s145 = sadd.s32 %s144, 1
      %s146 = scalar_select %p143, %s144, %s145
      %p149 = pneg %p143
      %p150 = scmp.eq.s32.totalorder %s23, 3
      %p151 = por %p149, %p150
      %p152 = scmp.ne.s32.totalorder %s144, %s147
      %p153 = scmp.eq.s32.totalorder %s23, 0
      %p154 = por %p152, %p153
      %p155 = scmp.ne.s32.totalorder %s144, %s147
      %p156 = scmp.eq.s32.totalorder %s28, 3
      %p157 = por %p155, %p156
      %p158 = scmp.ne.s32.totalorder %s147, %s148
      %p159 = scmp.eq.s32.totalorder %s28, 0
      %p160 = por %p158, %p159
      %p161 = scmp.ne.s32.totalorder %s147, %s148
      %p162 = scmp.eq.s32.totalorder %s29, 3
      %p163 = por %p161, %p162
      %p165 = scmp.ne.s32.totalorder %s148, %s164
      %p166 = scmp.eq.s32.totalorder %s29, 0
      %p167 = por %p165, %p166
      %s168 = ssub.s32 %s31, %s38
      %p169 = scmp.eq.s32.totalorder %s168, 0
      %s171 = sadd.s32 %s170, 1
      %s172 = scalar_select %p169, %s170, %s171
      %p175 = pneg %p169
      %p176 = scmp.eq.s32.totalorder %s23, 3
      %p177 = por %p175, %p176
      %p178 = scmp.ne.s32.totalorder %s170, %s173
      %p179 = scmp.eq.s32.totalorder %s23, 0
      %p180 = por %p178, %p179
      %p181 = scmp.ne.s32.totalorder %s170, %s173
      %p182 = scmp.eq.s32.totalorder %s28, 3
      %p183 = por %p181, %p182
      %p184 = scmp.ne.s32.totalorder %s173, %s174
      %p185 = scmp.eq.s32.totalorder %s28, 0
      %p186 = por %p184, %p185
      %p187 = scmp.ne.s32.totalorder %s173, %s174
      %p188 = scmp.eq.s32.totalorder %s29, 3
      %p189 = por %p187, %p188
      %p191 = scmp.ne.s32.totalorder %s174, %s190
      %p192 = scmp.eq.s32.totalorder %s29, 0
      %p193 = por %p191, %p192
      %s194 = ssub.s32 %s31, %s38
      %p195 = scmp.eq.s32.totalorder %s194, 0
      %s197 = sadd.s32 %s196, 1
      %s198 = scalar_select %p195, %s196, %s197
      %p201 = pneg %p195
      %p202 = scmp.eq.s32.totalorder %s23, 3
      %p203 = por %p201, %p202
      %p204 = scmp.ne.s32.totalorder %s196, %s199
      %p205 = scmp.eq.s32.totalorder %s23, 0
      %p206 = por %p204, %p205
      %p207 = scmp.ne.s32.totalorder %s196, %s199
      %p208 = scmp.eq.s32.totalorder %s28, 3
      %p209 = por %p207, %p208
      %p210 = scmp.ne.s32.totalorder %s199, %s200
      %p211 = scmp.eq.s32.totalorder %s28, 0
      %p212 = por %p210, %p211
      %p213 = scmp.ne.s32.totalorder %s199, %s200
      %p214 = scmp.eq.s32.totalorder %s29, 3
      %p215 = por %p213, %p214
      %p217 = scmp.ne.s32.totalorder %s200, %s216
      %p218 = scmp.eq.s32.totalorder %s29, 0
      %p219 = por %p217, %p218
      %s220 = ssub.s32 %s31, %s38
      %p221 = scmp.eq.s32.totalorder %s220, 0
      %s223 = sadd.s32 %s222, 1
      %s224 = scalar_select %p221, %s222, %s223
      %p227 = pneg %p221
      %p228 = scmp.eq.s32.totalorder %s23, 3
      %p229 = por %p227, %p228
      %p230 = scmp.ne.s32.totalorder %s222, %s225
      %p231 = scmp.eq.s32.totalorder %s23, 0
      %p232 = por %p230, %p231
      %p233 = scmp.ne.s32.totalorder %s222, %s225
      %p234 = scmp.eq.s32.totalorder %s28, 3
      %p235 = por %p233, %p234
      %p236 = scmp.ne.s32.totalorder %s225, %s226
      %p237 = scmp.eq.s32.totalorder %s28, 0
      %p238 = por %p236, %p237
      %p239 = scmp.ne.s32.totalorder %s225, %s226
      %p240 = scmp.eq.s32.totalorder %s29, 3
      %p241 = por %p239, %p240
      %p243 = scmp.ne.s32.totalorder %s226, %s242
      %p244 = scmp.eq.s32.totalorder %s29, 0
      %p245 = por %p243, %p244
      %s246 = ssub.s32 %s31, %s38
      %p247 = scmp.eq.s32.totalorder %s246, 0
      %s249 = sadd.s32 %s248, 1
      %s250 = scalar_select %p247, %s248, %s249
      %p253 = pneg %p247
      %p254 = scmp.eq.s32.totalorder %s23, 3
      %p255 = por %p253, %p254
      %p256 = scmp.ne.s32.totalorder %s248, %s251
      %p257 = scmp.eq.s32.totalorder %s23, 0
      %p258 = por %p256, %p257
      %p259 = scmp.ne.s32.totalorder %s248, %s251
      %p260 = scmp.eq.s32.totalorder %s28, 3
      %p261 = por %p259, %p260
      %p262 = scmp.ne.s32.totalorder %s251, %s252
      %p263 = scmp.eq.s32.totalorder %s28, 0
      %p264 = por %p262, %p263
      %p265 = scmp.ne.s32.totalorder %s251, %s252
      %p266 = scmp.eq.s32.totalorder %s29, 3
      %p267 = por %p265, %p266
      %p269 = scmp.ne.s32.totalorder %s252, %s268
      %p270 = scmp.eq.s32.totalorder %s29, 0
      %p271 = por %p269, %p270
      %s272 = ssub.s32 %s31, %s38
      %p273 = scmp.eq.s32.totalorder %s272, 0
      %s275 = sadd.s32 %s274, 1
      %s276 = scalar_select %p273, %s274, %s275
      %p279 = pneg %p273
      %p280 = scmp.eq.s32.totalorder %s23, 3
      %p281 = por %p279, %p280
      %p282 = scmp.ne.s32.totalorder %s274, %s277
      %p283 = scmp.eq.s32.totalorder %s23, 0
      %p284 = por %p282, %p283
      %p285 = scmp.ne.s32.totalorder %s274, %s277
      %p286 = scmp.eq.s32.totalorder %s28, 3
      %p287 = por %p285, %p286
      %p288 = scmp.ne.s32.totalorder %s277, %s278
      %p289 = scmp.eq.s32.totalorder %s28, 0
      %p290 = por %p288, %p289
      %p291 = scmp.ne.s32.totalorder %s277, %s278
      %p292 = scmp.eq.s32.totalorder %s29, 3
      %p293 = por %p291, %p292
      %p295 = scmp.ne.s32.totalorder %s278, %s294
      %p296 = scmp.eq.s32.totalorder %s29, 0
      %p297 = por %p295, %p296
      %s298 = ssub.s32 %s31, %s38
      %p299 = scmp.eq.s32.totalorder %s298, 0
      %s301 = sadd.s32 %s300, 1
      %s302 = scalar_select %p299, %s300, %s301
      %p305 = pneg %p299
      %p306 = scmp.eq.s32.totalorder %s23, 3
      %p307 = por %p305, %p306
      %p308 = scmp.ne.s32.totalorder %s300, %s303
      %p309 = scmp.eq.s32.totalorder %s23, 0
      %p310 = por %p308, %p309
      %p311 = scmp.ne.s32.totalorder %s300, %s303
      %p312 = scmp.eq.s32.totalorder %s28, 3
      %p313 = por %p311, %p312
      %p314 = scmp.ne.s32.totalorder %s303, %s304
      %p315 = scmp.eq.s32.totalorder %s28, 0
      %p316 = por %p314, %p315
      %p317 = scmp.ne.s32.totalorder %s303, %s304
      %p318 = scmp.eq.s32.totalorder %s29, 3
      %p319 = por %p317, %p318
      %p321 = scmp.ne.s32.totalorder %s304, %s320
      %p322 = scmp.eq.s32.totalorder %s29, 0
      %p323 = por %p321, %p322
      %s324 = ssub.s32 %s30, %s42
      %p325 = scmp.eq.s32.totalorder %s324, 0
      %s327 = sadd.s32 %s326, 1
      %s328 = scalar_select %p325, %s326, %s327
      %p331 = pneg %p325
      %p332 = scmp.eq.s32.totalorder %s23, 3
      %p333 = por %p331, %p332
      %p334 = scmp.ne.s32.totalorder %s326, %s329
      %p335 = scmp.eq.s32.totalorder %s23, 0
      %p336 = por %p334, %p335
      %p337 = scmp.ne.s32.totalorder %s326, %s329
      %p338 = scmp.eq.s32.totalorder %s28, 3
      %p339 = por %p337, %p338
      %p340 = scmp.ne.s32.totalorder %s329, %s330
      %p341 = scmp.eq.s32.totalorder %s28, 0
      %p342 = por %p340, %p341
      %p343 = scmp.ne.s32.totalorder %s329, %s330
      %p344 = scmp.eq.s32.totalorder %s29, 3
      %p345 = por %p343, %p344
      %p347 = scmp.ne.s32.totalorder %s330, %s346
      %p348 = scmp.eq.s32.totalorder %s29, 0
      %p349 = por %p347, %p348
      %p350 = scmp.le.s32.totalorder 1, %s23
      %p351 = scmp.lt.s32.totalorder %s23, 5
      %p352 = pnand %p350, %p351
      %p353 = pneg %p352
      // Predicated region
      $region9: #{tpu_custom_call.1} parent=5 // pred_check
        _
      $region10: #{tpu_custom_call.1} parent=5 // pred_check_branch
        %355 = sbr.rel (%p352) target = $region12
      $region11: #{tpu_custom_call.1} parent=5 // pred_region
        %s356 = ssub.s32 %s23, 1
        // Predicated region
        $region13: #{tpu_custom_call.1} parent=11 // pred_check
          %p357 = pneg %p82
        $region14: #{tpu_custom_call.1} parent=11 // pred_check_branch
          %359 = sbr.rel (%p357) target = $region16
        $region15: #{tpu_custom_call.1} parent=11 // pred_region
          _
        $region16: #{tpu_custom_call.1} parent=11 // pred_fallthru
          _
      $region12: #{tpu_custom_call.1} parent=5 // pred_fallthru
        _
      %p360 = scmp.lt.s32.totalorder %s23, 4
      // Predicated region
      $region17: #{tpu_custom_call.1} parent=5 // pred_check
        %p361 = pneg %p360
      $region18: #{tpu_custom_call.1} parent=5 // pred_check_branch
        %363 = sbr.rel (%p361) target = $region20
      $region19: #{tpu_custom_call.1} parent=5 // pred_region
        // Predicated region
        $region21: #{tpu_custom_call.1} parent=19 // pred_check
          %p364 = pneg %p55
        $region22: #{tpu_custom_call.1} parent=19 // pred_check_branch
          %366 = sbr.rel (%p364) target = $region24
        $region23: #{tpu_custom_call.1} parent=19 // pred_region
          %p367 = scmp.lt.s32.totalorder %s30, 1
          %s368 = scalar_select %p367, %s30, 1
          %s369 = smul.addr %s368, 8
          %s370 = smul.addr %s369, 8
          %s371 = scalar_lea.vmem %s0, %s370
        $region24: #{tpu_custom_call.1} parent=19 // pred_fallthru
          _
        // Predicated region
        $region25: #{tpu_custom_call.1} parent=19 // pred_check
          %p372 = pneg %p102
        $region26: #{tpu_custom_call.1} parent=19 // pred_check_branch
          %374 = sbr.rel (%p372) target = $region28
        $region27: #{tpu_custom_call.1} parent=19 // pred_region
          %p375 = scmp.lt.s32.totalorder %s31, 1
          %s376 = scalar_select %p375, %s31, 1
          %s377 = smul.addr %s376, 4
          %s378 = smul.addr %s377, 4
          %s379 = scalar_lea.vmem %s2, %s378
        $region28: #{tpu_custom_call.1} parent=19 // pred_fallthru
          _
        // Predicated region
        $region29: #{tpu_custom_call.1} parent=19 // pred_check
          %p380 = pneg %p128
        $region30: #{tpu_custom_call.1} parent=19 // pred_check_branch
          %382 = sbr.rel (%p380) target = $region32
        $region31: #{tpu_custom_call.1} parent=19 // pred_region
          %p383 = scmp.lt.s32.totalorder %s31, 1
          %s384 = scalar_select %p383, %s31, 1
          %s385 = smul.addr %s384, 4
          %s386 = smul.addr %s385, 4
          %s387 = scalar_lea.vmem %s3, %s386
        $region32: #{tpu_custom_call.1} parent=19 // pred_fallthru
          _
        // Predicated region
        $region33: #{tpu_custom_call.1} parent=19 // pred_check
          %p388 = pneg %p154
        $region34: #{tpu_custom_call.1} parent=19 // pred_check_branch
          %390 = sbr.rel (%p388) target = $region36
        $region35: #{tpu_custom_call.1} parent=19 // pred_region
          %p391 = scmp.lt.s32.totalorder %s31, 1
          %s392 = scalar_select %p391, %s31, 1
          %s393 = smul.addr %s392, 4
          %s394 = smul.addr %s393, 4
          %s395 = scalar_lea.vmem %s4, %s394
        $region36: #{tpu_custom_call.1} parent=19 // pred_fallthru
          _
        // Predicated region
        $region37: #{tpu_custom_call.1} parent=19 // pred_check
          %p396 = pneg %p180
        $region38: #{tpu_custom_call.1} parent=19 // pred_check_branch
          %398 = sbr.rel (%p396) target = $region40
        $region39: #{tpu_custom_call.1} parent=19 // pred_region
          %p399 = scmp.lt.s32.totalorder %s31, 1
          %s400 = scalar_select %p399, %s31, 1
          %s401 = smul.addr %s400, 4
          %s402 = smul.addr %s401, 4
          %s403 = scalar_lea.vmem %s5, %s402
        $region40: #{tpu_custom_call.1} parent=19 // pred_fallthru
          _
        // Predicated region
        $region41: #{tpu_custom_call.1} parent=19 // pred_check
          %p404 = pneg %p206
        $region42: #{tpu_custom_call.1} parent=19 // pred_check_branch
          %406 = sbr.rel (%p404) target = $region44
        $region43: #{tpu_custom_call.1} parent=19 // pred_region
          %p407 = scmp.lt.s32.totalorder %s31, 1
          %s408 = scalar_select %p407, %s31, 1
          %s409 = smul.addr %s408, 4
          %s410 = smul.addr %s409, 8
          %s411 = scalar_lea.vmem %s6, %s410
        $region44: #{tpu_custom_call.1} parent=19 // pred_fallthru
          _
        // Predicated region
        $region45: #{tpu_custom_call.1} parent=19 // pred_check
          %p412 = pneg %p232
        $region46: #{tpu_custom_call.1} parent=19 // pred_check_branch
          %414 = sbr.rel (%p412) target = $region48
        $region47: #{tpu_custom_call.1} parent=19 // pred_region
          %p415 = scmp.lt.s32.totalorder %s31, 1
          %s416 = scalar_select %p415, %s31, 1
          %s417 = smul.addr %s416, 16
          %s418 = smul.addr %s417, 4
          %s419 = scalar_lea.vmem %s7, %s418
        $region48: #{tpu_custom_call.1} parent=19 // pred_fallthru
          _
        // Predicated region
        $region49: #{tpu_custom_call.1} parent=19 // pred_check
          %p420 = pneg %p258
        $region50: #{tpu_custom_call.1} parent=19 // pred_check_branch
          %422 = sbr.rel (%p420) target = $region52
        $region51: #{tpu_custom_call.1} parent=19 // pred_region
          %p423 = scmp.lt.s32.totalorder %s31, 1
          %s424 = scalar_select %p423, %s31, 1
          %s425 = smul.addr %s424, 16
          %s426 = smul.addr %s425, 8
          %s427 = scalar_lea.vmem %s8, %s426
        $region52: #{tpu_custom_call.1} parent=19 // pred_fallthru
          _
        // Predicated region
        $region53: #{tpu_custom_call.1} parent=19 // pred_check
          %p428 = pneg %p284
        $region54: #{tpu_custom_call.1} parent=19 // pred_check_branch
          %430 = sbr.rel (%p428) target = $region56
        $region55: #{tpu_custom_call.1} parent=19 // pred_region
          %s431 = sand.u32 %s274, 1
          %s432 = scalar_lea.sflag [#allocation5], %s431
          %s433 = sand.u32 %s274, 1
          %s434 = smul.addr %s433, 16
          %s435 = scalar_lea.vmem [#allocation4], %s434
          %437 = vsyncadd %s432, 0
          %s438 = smul.addr %s31, 4
          %s439 = smul.addr %s438, 4
          %s440 = scalar_lea.hbm %s9, %s439
          %s441 = sshll.u32 %s440, 4
          %s442 = int_to_ptr.hbm [resolvable:$true] %s441
          %s443 = sshll.u32 %s435, 4
          %s444 = int_to_ptr.vmem [resolvable:$true] %s443
          %449 = dma.hbm_to_vmem [thread:$0]  %s442, 256, %s444, %s432, 64, 64, 4
        $region56: #{tpu_custom_call.1} parent=19 // pred_fallthru
          _
        // Predicated region
        $region57: #{tpu_custom_call.1} parent=19 // pred_check
          %p450 = pneg %p310
        $region58: #{tpu_custom_call.1} parent=19 // pred_check_branch
          %452 = sbr.rel (%p450) target = $region60
        $region59: #{tpu_custom_call.1} parent=19 // pred_region
          %p453 = scmp.lt.s32.totalorder %s31, 1
          %s454 = scalar_select %p453, %s31, 1
          %s455 = smul.addr %s454, 4
          %s456 = smul.addr %s455, 8
          %s457 = scalar_lea.vmem %s10, %s456
        $region60: #{tpu_custom_call.1} parent=19 // pred_fallthru
          _
      $region20: #{tpu_custom_call.1} parent=5 // pred_fallthru
        _
      %p458 = scmp.le.s32.totalorder 1, %s23
      %p459 = scmp.lt.s32.totalorder %s23, 5
      %p460 = pnand %p458, %p459
      %p461 = pneg %p460
      // Predicated region
      $region61: #{tpu_custom_call.1} parent=5 // pred_check
        _
      $region62: #{tpu_custom_call.1} parent=5 // pred_check_branch
        %463 = sbr.rel (%p460) target = $region64
      $region63: #{tpu_custom_call.1} parent=5 // pred_region
        %s464 = ssub.s32 %s23, 1
        %s465 = sand.u32 %s277, 1
        %s466 = scalar_lea.sflag [#allocation5], %s465
        %s467 = sand.u32 %s277, 1
        %s468 = smul.addr %s467, 16
        %s469 = scalar_lea.vmem [#allocation4], %s468
        // Predicated region
        $region65: #{tpu_custom_call.1} parent=63 // pred_check
          %p470 = pneg %p290
        $region66: #{tpu_custom_call.1} parent=63 // pred_check_branch
          %472 = sbr.rel (%p470) target = $region68
        $region67: #{tpu_custom_call.1} parent=63 // pred_region
          %474 = dma.done %s466, 256
        $region68: #{tpu_custom_call.1} parent=63 // pred_fallthru
          _
        %p475 = scmp.lt.s32.totalorder %s32, 1
        %s476 = scalar_select %p475, %s32, 1
        %s477 = smul.addr %s476, 8
        %s478 = smul.addr %s477, 8
        %s479 = scalar_lea.vmem %s0, %s478
        %p480 = pneg %p61
        %p481 = pneg %p58
        %p482 = pneg %p82
        %p483 = pneg %p79
        %p484 = scmp.lt.s32.totalorder %s33, 1
        %s485 = scalar_select %p484, %s33, 1
        %s486 = smul.addr %s485, 4
        %s487 = smul.addr %s486, 4
        %s488 = scalar_lea.vmem %s2, %s487
        %p489 = pneg %p108
        %p490 = pneg %p105
        %p491 = scmp.lt.s32.totalorder %s33, 1
        %s492 = scalar_select %p491, %s33, 1
        %s493 = smul.addr %s492, 4
        %s494 = smul.addr %s493, 4
        %s495 = scalar_lea.vmem %s3, %s494
        %p496 = pneg %p134
        %p497 = pneg %p131
        %p498 = scmp.lt.s32.totalorder %s33, 1
        %s499 = scalar_select %p498, %s33, 1
        %s500 = smul.addr %s499, 4
        %s501 = smul.addr %s500, 4
        %s502 = scalar_lea.vmem %s4, %s501
        %p503 = pneg %p160
        %p504 = pneg %p157
        %p505 = scmp.lt.s32.totalorder %s33, 1
        %s506 = scalar_select %p505, %s33, 1
        %s507 = smul.addr %s506, 4
        %s508 = smul.addr %s507, 4
        %s509 = scalar_lea.vmem %s5, %s508
        %p510 = pneg %p186
        %p511 = pneg %p183
        %p512 = scmp.lt.s32.totalorder %s33, 1
        %s513 = scalar_select %p512, %s33, 1
        %s514 = smul.addr %s513, 4
        %s515 = smul.addr %s514, 8
        %s516 = scalar_lea.vmem %s6, %s515
        %p517 = pneg %p212
        %p518 = pneg %p209
        %p519 = scmp.lt.s32.totalorder %s33, 1
        %s520 = scalar_select %p519, %s33, 1
        %s521 = smul.addr %s520, 16
        %s522 = smul.addr %s521, 4
        %s523 = scalar_lea.vmem %s7, %s522
        %p524 = pneg %p238
        %p525 = pneg %p235
        %p526 = scmp.lt.s32.totalorder %s33, 1
        %s527 = scalar_select %p526, %s33, 1
        %s528 = smul.addr %s527, 16
        %s529 = smul.addr %s528, 8
        %s530 = scalar_lea.vmem %s8, %s529
        %p531 = pneg %p264
        %p532 = pneg %p261
        %s533 = sand.u32 %s277, 1
        %s534 = scalar_lea.sflag [#allocation5], %s533
        %s535 = sand.u32 %s277, 1
        %s536 = smul.addr %s535, 16
        %s537 = scalar_lea.vmem [#allocation4], %s536
        %p538 = pneg %p290
        %p539 = pneg %p287
        %p540 = scmp.lt.s32.totalorder %s33, 1
        %s541 = scalar_select %p540, %s33, 1
        %s542 = smul.addr %s541, 4
        %s543 = smul.addr %s542, 8
        %s544 = scalar_lea.vmem %s10, %s543
        %p545 = pneg %p316
        %p546 = pneg %p313
        %p547 = pneg %p342
        %p548 = pneg %p339
        %s549 = sand.u32 %s329, 1
        %s550 = scalar_lea.sflag [#allocation6], %s549
        %s551 = sand.u32 %s329, 1
        %s552 = smul.addr %s551, 64
        %s553 = scalar_lea.vmem [#allocation7], %s552
        %p554 = scmp.lt.s32.totalorder %s32, 1
        %s555 = scalar_select %p554, %s32, 1
        %s556 = smul.addr %s555, 8
        %s557 = smul.addr %s556, 8
        %s558 = scalar_lea.vmem %s0, %s557
        %p559 = scmp.lt.s32.totalorder %s33, 1
        %s560 = scalar_select %p559, %s33, 1
        %s561 = smul.addr %s560, 4
        %s562 = smul.addr %s561, 4
        %s563 = scalar_lea.vmem %s2, %s562
        %p564 = scmp.lt.s32.totalorder %s33, 1
        %s565 = scalar_select %p564, %s33, 1
        %s566 = smul.addr %s565, 4
        %s567 = smul.addr %s566, 4
        %s568 = scalar_lea.vmem %s3, %s567
        %p569 = scmp.lt.s32.totalorder %s33, 1
        %s570 = scalar_select %p569, %s33, 1
        %s571 = smul.addr %s570, 4
        %s572 = smul.addr %s571, 4
        %s573 = scalar_lea.vmem %s4, %s572
        %p574 = scmp.lt.s32.totalorder %s33, 1
        %s575 = scalar_select %p574, %s33, 1
        %s576 = smul.addr %s575, 4
        %s577 = smul.addr %s576, 4
        %s578 = scalar_lea.vmem %s5, %s577
        %p579 = scmp.lt.s32.totalorder %s33, 1
        %s580 = scalar_select %p579, %s33, 1
        %s581 = smul.addr %s580, 4
        %s582 = smul.addr %s581, 8
        %s583 = scalar_lea.vmem %s6, %s582
        %p584 = scmp.lt.s32.totalorder %s33, 1
        %s585 = scalar_select %p584, %s33, 1
        %s586 = smul.addr %s585, 16
        %s587 = smul.addr %s586, 4
        %s588 = scalar_lea.vmem %s7, %s587
        %p589 = scmp.lt.s32.totalorder %s33, 1
        %s590 = scalar_select %p589, %s33, 1
        %s591 = smul.addr %s590, 16
        %s592 = smul.addr %s591, 8
        %s593 = scalar_lea.vmem %s8, %s592
        %p594 = scmp.lt.s32.totalorder %s33, 1
        %s595 = scalar_select %p594, %s33, 1
        %s596 = smul.addr %s595, 4
        %s597 = smul.addr %s596, 8
        %s598 = scalar_lea.vmem %s10, %s597
        %p600 = scmp.eq.s32.totalorder %s33, 0
        // Predicated region
        $region69: #{tpu_custom_call.1} parent=63 // pred_check
          %p601 = pneg %p600
        $region70: #{tpu_custom_call.1} parent=63 // pred_check_branch
          %603 = sbr.rel (%p601) target = $region72
        $region71: #{tpu_custom_call.1} parent=63 // pred_region
          %v604 = vld [vmem:[%s558] sm:$0xff]
          %v605 = vld [vmem:[%s558 + $0x8] sm:$0xff]
          %v606 = vld [vmem:[%s558 + $0x10] sm:$0xff]
          %v607 = vld [vmem:[%s558 + $0x18] sm:$0xff]
          %v608 = vld [vmem:[%s558 + $0x20] sm:$0xff]
          %v609 = vld [vmem:[%s558 + $0x28] sm:$0xff]
          %v610 = vld [vmem:[%s558 + $0x30] sm:$0xff]
          %v611 = vld [vmem:[%s558 + $0x38] sm:$0xff]
          %612 = vst [vmem:[#allocation2] sm:$0xff] %v604
          %613 = vst [vmem:[#allocation2 + $0x8] sm:$0xff] %v605
          %614 = vst [vmem:[#allocation2 + $0x10] sm:$0xff] %v606
          %615 = vst [vmem:[#allocation2 + $0x18] sm:$0xff] %v607
          %616 = vst [vmem:[#allocation2 + $0x20] sm:$0xff] %v608
          %617 = vst [vmem:[#allocation2 + $0x28] sm:$0xff] %v609
          %618 = vst [vmem:[#allocation2 + $0x30] sm:$0xff] %v610
          %619 = vst [vmem:[#allocation2 + $0x38] sm:$0xff] %v611
        $region72: #{tpu_custom_call.1} parent=63 // pred_fallthru
          _
        %v620 = vld [vmem:[#allocation2] sm:$0xff]
        %v621 = vld [vmem:[#allocation2 + $0x8] sm:$0xff]
        %v622 = vld [vmem:[#allocation2 + $0x10] sm:$0xff]
        %v623 = vld [vmem:[#allocation2 + $0x18] sm:$0xff]
        %v624 = vld [vmem:[#allocation2 + $0x20] sm:$0xff]
        %v625 = vld [vmem:[#allocation2 + $0x28] sm:$0xff]
        %v626 = vld [vmem:[#allocation2 + $0x30] sm:$0xff]
        %v627 = vld [vmem:[#allocation2 + $0x38] sm:$0xff]
        %v628 = vmul.f32 %v620, %v620
        %v629 = vmul.f32 %v621, %v621
        %v630 = vmul.f32 %v622, %v622
        %v631 = vmul.f32 %v623, %v623
        %v632 = vmul.f32 %v624, %v624
        %v633 = vmul.f32 %v625, %v625
        %v634 = vmul.f32 %v626, %v626
        %v635 = vmul.f32 %v627, %v627
        %v636 = vadd.f32 %v628, %v630
        %v637 = vadd.f32 %v636, %v632
        %v638 = vadd.f32 %v637, %v634
        %v639 = vrot.slane %v638, 4
        %v640 = vadd.f32 %v638, %v639
        %v641 = vrot.slane %v640, 2
        %v642 = vadd.f32 %v640, %v641
        %v643 = vrot.slane %v642, 1
        %v644 = vadd.f32 %v642, %v643
        %v645 = vadd.f32 %v629, %v631
        %v646 = vadd.f32 %v645, %v633
        %v647 = vadd.f32 %v646, %v635
        %v648 = vrot.slane %v647, 4
        %v649 = vadd.f32 %v647, %v648
        %v650 = vrot.slane %v649, 2
        %v651 = vadd.f32 %v649, %v650
        %v652 = vrot.slane %v651, 1
        %v653 = vadd.f32 %v651, %v652
        %v654 = vmax.f32 %v644, 1e-24
        %v655 = vmax.f32 %v653, 1e-24
        %v656 = vrsqrt.pop %v654
        %v657 = vmul.f32 %v656, %v654
        %v658 = vmul.f32 %v657, %v656
        %v659 = vmul.f32 0.5, %v658
        %v660 = vsub.f32 1.5, %v659
        %v661 = vmul.f32 %v656, %v660
        %vm662 = vweird.f32 %v654
        %vm663 = vweird.f32 %v656
        %vm664 = vmor %vm662, %vm663
        %v665 = vsel %vm664, %v656, %v661
        %v666 = vrsqrt.pop %v655
        %v667 = vmul.f32 %v666, %v655
        %v668 = vmul.f32 %v667, %v666
        %v669 = vmul.f32 0.5, %v668
        %v670 = vsub.f32 1.5, %v669
        %v671 = vmul.f32 %v666, %v670
        %vm672 = vweird.f32 %v655
        %vm673 = vweird.f32 %v666
        %vm674 = vmor %vm672, %vm673
        %v675 = vsel %vm674, %v666, %v671
        %v676 = vmul.f32 %v620, %v665
        %v677 = vmul.f32 %v621, %v675
        %v678 = vmul.f32 %v622, %v665
        %v679 = vmul.f32 %v623, %v675
        %v680 = vmul.f32 %v624, %v665
        %v681 = vmul.f32 %v625, %v675
        %v682 = vmul.f32 %v626, %v665
        %v683 = vmul.f32 %v627, %v675
        %v684 = vpack.c.bf16 %v678, %v676
        %v685 = vpack.c.bf16 %v679, %v677
        %v686 = vpack.c.bf16 %v682, %v680
        %v687 = vpack.c.bf16 %v683, %v681
        %v688 = vld [vmem:[%s563] sm:$0xf]
        %v689 = vld [vmem:[%s563 + $0x4] sm:$0xf]
        %v690 = vld [vmem:[%s563 + $0x8] sm:$0xf]
        %v691 = vld [vmem:[%s563 + $0xc] sm:$0xf]
        %v696 = vunpack.c.l.b16 %v688
        %v697 = vunpack.c.l.b16 %v689
        %v698 = vunpack.c.l.b16 %v690
        %v699 = vunpack.c.l.b16 %v691
        %v700 = vpack.c.b16 %v697, %v696
        %v701 = vpack.c.b16 %v699, %v698
        %vm702 = vcmask 261120
        %v704 = vsel %vm702, %v700, 0
        %v707 = vsel %vm702, %v701, 0
        %709 = vmatpush.bf16.msra.mxu0 0
        %710 = vmatpush.bf16.msra.mxu0 0
        %711 = vmatpush.bf16.msra.mxu0 0
        %712 = vmatpush.bf16.msra.mxu0 0
        %713 = vmatpush.bf16.msra.mxu0 0
        %714 = vmatpush.bf16.msra.mxu0 0
        %715 = vmatpush.bf16.msra.mxu0 %v686
        %716 = vmatpush.bf16.msra.mxu0 %v684
        %717 = vmatmul.bf16.gmra.mxu0 %v704
        %v718 = vpop.f32.mrf.mxu0
        %v719 = vadd.f32 0.0, %v718
        %v720 = vpop.f32.mrf.mxu0
        %v721 = vadd.f32 0.0, %v720
        %722 = vmatmul.bf16.gmra.mxu0 %v707
        %v723 = vpop.f32.mrf.mxu0
        %v724 = vadd.f32 0.0, %v723
        %v725 = vpop.f32.mrf.mxu0
        %v726 = vadd.f32 0.0, %v725
        %727 = vdwg.mxu0
        %728 = vmatpush.bf16.msra.mxu0 0
        %729 = vmatpush.bf16.msra.mxu0 0
        %730 = vmatpush.bf16.msra.mxu0 0
        %731 = vmatpush.bf16.msra.mxu0 0
        %732 = vmatpush.bf16.msra.mxu0 0
        %733 = vmatpush.bf16.msra.mxu0 0
        %734 = vmatpush.bf16.msra.mxu0 %v687
        %735 = vmatpush.bf16.msra.mxu0 %v685
        %736 = vmatmul.bf16.gmra.mxu0 %v704
        %v737 = vpop.f32.mrf.mxu0
        %v738 = vadd.f32 0.0, %v737
        %v739 = vpop.f32.mrf.mxu0
        %v740 = vadd.f32 0.0, %v739
        %741 = vmatmul.bf16.gmra.mxu0 %v707
        %v742 = vpop.f32.mrf.mxu0
        %v743 = vadd.f32 0.0, %v742
        %v744 = vpop.f32.mrf.mxu0
        %v745 = vadd.f32 0.0, %v744
        %746 = vdwg.mxu0
        %v747 = vld [vmem:[%s568] sm:$0xf]
        %v748 = vld [vmem:[%s568 + $0x4] sm:$0xf]
        %v749 = vld [vmem:[%s568 + $0x8] sm:$0xf]
        %v750 = vld [vmem:[%s568 + $0xc] sm:$0xf]
        %v755 = vunpack.c.l.b16 %v747
        %v756 = vunpack.c.l.b16 %v748
        %v757 = vunpack.c.l.b16 %v749
        %v758 = vunpack.c.l.b16 %v750
        %v759 = vpack.c.b16 %v756, %v755
        %v760 = vpack.c.b16 %v758, %v757
        %v762 = vsel %vm702, %v759, 0
        %v765 = vsel %vm702, %v760, 0
        %767 = vmatpush.bf16.msra.mxu0 0
        %768 = vmatpush.bf16.msra.mxu0 0
        %769 = vmatpush.bf16.msra.mxu0 0
        %770 = vmatpush.bf16.msra.mxu0 0
        %771 = vmatpush.bf16.msra.mxu0 0
        %772 = vmatpush.bf16.msra.mxu0 0
        %773 = vmatpush.bf16.msra.mxu0 %v686
        %774 = vmatpush.bf16.msra.mxu0 %v684
        %775 = vmatmul.bf16.gmra.mxu0 %v762
        %v776 = vpop.f32.mrf.mxu0
        %v777 = vadd.f32 0.0, %v776
        %v778 = vpop.f32.mrf.mxu0
        %v779 = vadd.f32 0.0, %v778
        %780 = vmatmul.bf16.gmra.mxu0 %v765
        %v781 = vpop.f32.mrf.mxu0
        %v782 = vadd.f32 0.0, %v781
        %v783 = vpop.f32.mrf.mxu0
        %v784 = vadd.f32 0.0, %v783
        %785 = vdwg.mxu0
        %786 = vmatpush.bf16.msra.mxu0 0
        %787 = vmatpush.bf16.msra.mxu0 0
        %788 = vmatpush.bf16.msra.mxu0 0
        %789 = vmatpush.bf16.msra.mxu0 0
        %790 = vmatpush.bf16.msra.mxu0 0
        %791 = vmatpush.bf16.msra.mxu0 0
        %792 = vmatpush.bf16.msra.mxu0 %v687
        %793 = vmatpush.bf16.msra.mxu0 %v685
        %794 = vmatmul.bf16.gmra.mxu0 %v762
        %v795 = vpop.f32.mrf.mxu0
        %v796 = vadd.f32 0.0, %v795
        %v797 = vpop.f32.mrf.mxu0
        %v798 = vadd.f32 0.0, %v797
        %799 = vmatmul.bf16.gmra.mxu0 %v765
        %v800 = vpop.f32.mrf.mxu0
        %v801 = vadd.f32 0.0, %v800
        %v802 = vpop.f32.mrf.mxu0
        %v803 = vadd.f32 0.0, %v802
        %804 = vdwg.mxu0
        %v805 = vld [vmem:[%s573] sm:$0xf]
        %v806 = vld [vmem:[%s573 + $0x4] sm:$0xf]
        %v807 = vld [vmem:[%s573 + $0x8] sm:$0xf]
        %v808 = vld [vmem:[%s573 + $0xc] sm:$0xf]
        %v813 = vunpack.c.l.b16 %v805
        %v814 = vunpack.c.l.b16 %v806
        %v815 = vunpack.c.l.b16 %v807
        %v816 = vunpack.c.l.b16 %v808
        %v817 = vpack.c.b16 %v814, %v813
        %v818 = vpack.c.b16 %v816, %v815
        %v820 = vsel %vm702, %v817, 0
        %v823 = vsel %vm702, %v818, 0
        %825 = vmatpush.bf16.msra.mxu0 0
        %826 = vmatpush.bf16.msra.mxu0 0
        %827 = vmatpush.bf16.msra.mxu0 0
        %828 = vmatpush.bf16.msra.mxu0 0
        %829 = vmatpush.bf16.msra.mxu0 0
        %830 = vmatpush.bf16.msra.mxu0 0
        %831 = vmatpush.bf16.msra.mxu0 %v686
        %832 = vmatpush.bf16.msra.mxu0 %v684
        %833 = vmatmul.bf16.gmra.mxu0 %v820
        %v834 = vpop.f32.mrf.mxu0
        %v835 = vadd.f32 0.0, %v834
        %v836 = vpop.f32.mrf.mxu0
        %v837 = vadd.f32 0.0, %v836
        %838 = vmatmul.bf16.gmra.mxu0 %v823
        %v839 = vpop.f32.mrf.mxu0
        %v840 = vadd.f32 0.0, %v839
        %v841 = vpop.f32.mrf.mxu0
        %v842 = vadd.f32 0.0, %v841
        %843 = vdwg.mxu0
        %844 = vmatpush.bf16.msra.mxu0 0
        %845 = vmatpush.bf16.msra.mxu0 0
        %846 = vmatpush.bf16.msra.mxu0 0
        %847 = vmatpush.bf16.msra.mxu0 0
        %848 = vmatpush.bf16.msra.mxu0 0
        %849 = vmatpush.bf16.msra.mxu0 0
        %850 = vmatpush.bf16.msra.mxu0 %v687
        %851 = vmatpush.bf16.msra.mxu0 %v685
        %852 = vmatmul.bf16.gmra.mxu0 %v820
        %v853 = vpop.f32.mrf.mxu0
        %v854 = vadd.f32 0.0, %v853
        %v855 = vpop.f32.mrf.mxu0
        %v856 = vadd.f32 0.0, %v855
        %857 = vmatmul.bf16.gmra.mxu0 %v823
        %v858 = vpop.f32.mrf.mxu0
        %v859 = vadd.f32 0.0, %v858
        %v860 = vpop.f32.mrf.mxu0
        %v861 = vadd.f32 0.0, %v860
        %862 = vdwg.mxu0
        %v863 = vld [vmem:[%s1] sm:$0xff]
        %v864 = vld [vmem:[%s1 + $0x8] sm:$0xff]
        %v865 = vld [vmem:[%s1 + $0x10] sm:$0xff]
        %v866 = vld [vmem:[%s1 + $0x18] sm:$0xff]
        %v867 = vld [vmem:[%s1 + $0x20] sm:$0xff]
        %v868 = vld [vmem:[%s1 + $0x28] sm:$0xff]
        %v869 = vld [vmem:[%s1 + $0x30] sm:$0xff]
        %v870 = vld [vmem:[%s1 + $0x38] sm:$0xff]
        %v871 = vld [vmem:[%s1 + $0x40] sm:$0xff]
        %v872 = vld [vmem:[%s1 + $0x48] sm:$0xff]
        %v873 = vld [vmem:[%s1 + $0x50] sm:$0xff]
        %v874 = vld [vmem:[%s1 + $0x58] sm:$0xff]
        %v875 = vld [vmem:[%s1 + $0x60] sm:$0xff]
        %v876 = vld [vmem:[%s1 + $0x68] sm:$0xff]
        %v877 = vld [vmem:[%s1 + $0x70] sm:$0xff]
        %v878 = vld [vmem:[%s1 + $0x78] sm:$0xff]
        %v879 = vld [vmem:[%s1 + $0x80] sm:$0xff]
        %v880 = vld [vmem:[%s1 + $0x88] sm:$0xff]
        %v881 = vld [vmem:[%s1 + $0x90] sm:$0xff]
        %v882 = vld [vmem:[%s1 + $0x98] sm:$0xff]
        %v883 = vld [vmem:[%s1 + $0xa0] sm:$0xff]
        %v884 = vld [vmem:[%s1 + $0xa8] sm:$0xff]
        %v885 = vld [vmem:[%s1 + $0xb0] sm:$0xff]
        %v886 = vld [vmem:[%s1 + $0xb8] sm:$0xff]
        %v887 = vld [vmem:[%s1 + $0xc0] sm:$0xff]
        %v888 = vld [vmem:[%s1 + $0xc8] sm:$0xff]
        %v889 = vld [vmem:[%s1 + $0xd0] sm:$0xff]
        %v890 = vld [vmem:[%s1 + $0xd8] sm:$0xff]
        %v891 = vld [vmem:[%s1 + $0xe0] sm:$0xff]
        %v892 = vld [vmem:[%s1 + $0xe8] sm:$0xff]
        %v893 = vld [vmem:[%s1 + $0xf0] sm:$0xff]
        %v894 = vld [vmem:[%s1 + $0xf8] sm:$0xff]
        %v895 = vpack.c.bf16 %v719, %v719
        %v896 = vpack.c.bf16 %v738, %v738
        %v897 = vpack.c.bf16 %v777, %v777
        %v898 = vpack.c.bf16 %v796, %v796
        %v899 = vpack.c.bf16 %v835, %v835
        %v900 = vpack.c.bf16 %v854, %v854
        %v933 = vunpack.c.l.b16 %v863
        %v934 = vunpack.c.h.b16 %v863
        %v935 = vunpack.c.l.b16 %v864
        %v936 = vunpack.c.h.b16 %v864
        %v937 = vunpack.c.l.b16 %v865
        %v938 = vunpack.c.h.b16 %v865
        %v939 = vunpack.c.l.b16 %v866
        %v940 = vunpack.c.h.b16 %v866
        %v941 = vunpack.c.l.b16 %v867
        %v942 = vunpack.c.h.b16 %v867
        %v943 = vunpack.c.l.b16 %v868
        %v944 = vunpack.c.h.b16 %v868
        %v945 = vunpack.c.l.b16 %v869
        %v946 = vunpack.c.h.b16 %v869
        %v947 = vunpack.c.l.b16 %v870
        %v948 = vunpack.c.h.b16 %v870
        %v949 = vunpack.c.l.b16 %v871
        %v950 = vunpack.c.h.b16 %v871
        %v951 = vunpack.c.l.b16 %v872
        %v952 = vunpack.c.h.b16 %v872
        %v953 = vunpack.c.l.b16 %v873
        %v954 = vunpack.c.h.b16 %v873
        %v955 = vunpack.c.l.b16 %v874
        %v956 = vunpack.c.h.b16 %v874
        %v957 = vunpack.c.l.b16 %v875
        %v958 = vunpack.c.h.b16 %v875
        %v959 = vunpack.c.l.b16 %v876
        %v960 = vunpack.c.h.b16 %v876
        %v961 = vunpack.c.l.b16 %v877
        %v962 = vunpack.c.h.b16 %v877
        %v963 = vunpack.c.l.b16 %v878
        %v964 = vunpack.c.h.b16 %v878
        %v965 = vunpack.c.l.b16 %v879
        %v966 = vunpack.c.h.b16 %v879
        %v967 = vunpack.c.l.b16 %v880
        %v968 = vunpack.c.h.b16 %v880
        %v969 = vunpack.c.l.b16 %v881
        %v970 = vunpack.c.h.b16 %v881
        %v971 = vunpack.c.l.b16 %v882
        %v972 = vunpack.c.h.b16 %v882
        %v973 = vunpack.c.l.b16 %v883
        %v974 = vunpack.c.h.b16 %v883
        %v975 = vunpack.c.l.b16 %v884
        %v976 = vunpack.c.h.b16 %v884
        %v977 = vunpack.c.l.b16 %v885
        %v978 = vunpack.c.h.b16 %v885
        %v979 = vunpack.c.l.b16 %v886
        %v980 = vunpack.c.h.b16 %v886
        %v981 = vunpack.c.l.b16 %v887
        %v982 = vunpack.c.h.b16 %v887
        %v983 = vunpack.c.l.b16 %v888
        %v984 = vunpack.c.h.b16 %v888
        %v985 = vunpack.c.l.b16 %v889
        %v986 = vunpack.c.h.b16 %v889
        %v987 = vunpack.c.l.b16 %v890
        %v988 = vunpack.c.h.b16 %v890
        %v989 = vunpack.c.l.b16 %v891
        %v990 = vunpack.c.h.b16 %v891
        %v991 = vunpack.c.l.b16 %v892
        %v992 = vunpack.c.h.b16 %v892
        %v993 = vunpack.c.l.b16 %v893
        %v994 = vunpack.c.h.b16 %v893
        %v995 = vunpack.c.l.b16 %v894
        %v996 = vunpack.c.h.b16 %v894
        %v997 = vpack.c.b16 %v935, %v933
        %v998 = vpack.c.b16 %v936, %v934
        %v999 = vpack.c.b16 %v939, %v937
        %v1000 = vpack.c.b16 %v940, %v938
        %v1001 = vpack.c.b16 %v943, %v941
        %v1002 = vpack.c.b16 %v944, %v942
        %v1003 = vpack.c.b16 %v947, %v945
        %v1004 = vpack.c.b16 %v948, %v946
        %v1005 = vpack.c.b16 %v951, %v949
        %v1006 = vpack.c.b16 %v952, %v950
        %v1007 = vpack.c.b16 %v955, %v953
        %v1008 = vpack.c.b16 %v956, %v954
        %v1009 = vpack.c.b16 %v959, %v957
        %v1010 = vpack.c.b16 %v960, %v958
        %v1011 = vpack.c.b16 %v963, %v961
        %v1012 = vpack.c.b16 %v964, %v962
        %v1013 = vpack.c.b16 %v967, %v965
        %v1014 = vpack.c.b16 %v968, %v966
        %v1015 = vpack.c.b16 %v971, %v969
        %v1016 = vpack.c.b16 %v972, %v970
        %v1017 = vpack.c.b16 %v975, %v973
        %v1018 = vpack.c.b16 %v976, %v974
        %v1019 = vpack.c.b16 %v979, %v977
        %v1020 = vpack.c.b16 %v980, %v978
        %v1021 = vpack.c.b16 %v983, %v981
        %v1022 = vpack.c.b16 %v984, %v982
        %v1023 = vpack.c.b16 %v987, %v985
        %v1024 = vpack.c.b16 %v988, %v986
        %v1025 = vpack.c.b16 %v991, %v989
        %v1026 = vpack.c.b16 %v992, %v990
        %v1027 = vpack.c.b16 %v995, %v993
        %v1028 = vpack.c.b16 %v996, %v994
        %1061 = vmatpush.bf16.xpose.msra.mxu0 0
        %1062 = vmatpush.bf16.xpose.msra.mxu0 0
        %1063 = vmatpush.bf16.xpose.msra.mxu0 0
        %1064 = vmatpush.bf16.xpose.msra.mxu0 0
        %1065 = vmatpush.bf16.xpose.msra.mxu0 0
        %1066 = vmatpush.bf16.xpose.msra.mxu0 0
        %1067 = vmatpush.bf16.xpose.msra.mxu0 0
        %1068 = vmatpush.bf16.xpose.msra.mxu0 %v897
        %1069 = vmatmul.bf16.gmra.mxu0 %v997
        %v1070 = vpop.f32.mrf.mxu0
        %v1071 = vadd.f32 0.0, %v1070
        %v1072 = vpop.f32.mrf.mxu0
        %v1073 = vadd.f32 0.0, %v1072
        %1074 = vmatmul.bf16.gmra.mxu0 %v999
        %v1075 = vpop.f32.mrf.mxu0
        %v1076 = vadd.f32 0.0, %v1075
        %v1077 = vpop.f32.mrf.mxu0
        %v1078 = vadd.f32 0.0, %v1077
        %1079 = vmatmul.bf16.gmra.mxu0 %v1001
        %v1080 = vpop.f32.mrf.mxu0
        %v1081 = vadd.f32 0.0, %v1080
        %v1082 = vpop.f32.mrf.mxu0
        %v1083 = vadd.f32 0.0, %v1082
        %1084 = vmatmul.bf16.gmra.mxu0 %v1003
        %v1085 = vpop.f32.mrf.mxu0
        %v1086 = vadd.f32 0.0, %v1085
        %v1087 = vpop.f32.mrf.mxu0
        %v1088 = vadd.f32 0.0, %v1087
        %1089 = vmatmul.bf16.gmra.mxu0 %v1005
        %v1090 = vpop.f32.mrf.mxu0
        %v1091 = vadd.f32 0.0, %v1090
        %v1092 = vpop.f32.mrf.mxu0
        %v1093 = vadd.f32 0.0, %v1092
        %1094 = vmatmul.bf16.gmra.mxu0 %v1007
        %v1095 = vpop.f32.mrf.mxu0
        %v1096 = vadd.f32 0.0, %v1095
        %v1097 = vpop.f32.mrf.mxu0
        %v1098 = vadd.f32 0.0, %v1097
        %1099 = vmatmul.bf16.gmra.mxu0 %v1009
        %v1100 = vpop.f32.mrf.mxu0
        %v1101 = vadd.f32 0.0, %v1100
        %v1102 = vpop.f32.mrf.mxu0
        %v1103 = vadd.f32 0.0, %v1102
        %1104 = vmatmul.bf16.gmra.mxu0 %v1011
        %v1105 = vpop.f32.mrf.mxu0
        %v1106 = vadd.f32 0.0, %v1105
        %v1107 = vpop.f32.mrf.mxu0
        %v1108 = vadd.f32 0.0, %v1107
        %1109 = vmatmul.bf16.gmra.mxu0 %v1013
        %v1110 = vpop.f32.mrf.mxu0
        %v1111 = vadd.f32 0.0, %v1110
        %v1112 = vpop.f32.mrf.mxu0
        %v1113 = vadd.f32 0.0, %v1112
        %1114 = vmatmul.bf16.gmra.mxu0 %v1015
        %v1115 = vpop.f32.mrf.mxu0
        %v1116 = vadd.f32 0.0, %v1115
        %v1117 = vpop.f32.mrf.mxu0
        %v1118 = vadd.f32 0.0, %v1117
        %1119 = vmatmul.bf16.gmra.mxu0 %v1017
        %v1120 = vpop.f32.mrf.mxu0
        %v1121 = vadd.f32 0.0, %v1120
        %v1122 = vpop.f32.mrf.mxu0
        %v1123 = vadd.f32 0.0, %v1122
        %1124 = vmatmul.bf16.gmra.mxu0 %v1019
        %v1125 = vpop.f32.mrf.mxu0
        %v1126 = vadd.f32 0.0, %v1125
        %v1127 = vpop.f32.mrf.mxu0
        %v1128 = vadd.f32 0.0, %v1127
        %1129 = vmatmul.bf16.gmra.mxu0 %v1021
        %v1130 = vpop.f32.mrf.mxu0
        %v1131 = vadd.f32 0.0, %v1130
        %v1132 = vpop.f32.mrf.mxu0
        %v1133 = vadd.f32 0.0, %v1132
        %1134 = vmatmul.bf16.gmra.mxu0 %v1023
        %v1135 = vpop.f32.mrf.mxu0
        %v1136 = vadd.f32 0.0, %v1135
        %v1137 = vpop.f32.mrf.mxu0
        %v1138 = vadd.f32 0.0, %v1137
        %1139 = vmatmul.bf16.gmra.mxu0 %v1025
        %v1140 = vpop.f32.mrf.mxu0
        %v1141 = vadd.f32 0.0, %v1140
        %v1142 = vpop.f32.mrf.mxu0
        %v1143 = vadd.f32 0.0, %v1142
        %1144 = vmatmul.bf16.gmra.mxu0 %v1027
        %v1145 = vpop.f32.mrf.mxu0
        %v1146 = vadd.f32 0.0, %v1145
        %v1147 = vpop.f32.mrf.mxu0
        %v1148 = vadd.f32 0.0, %v1147
        %1149 = vdwg.mxu0
        %1150 = vmatpush.bf16.xpose.msra.mxu0 0
        %1151 = vmatpush.bf16.xpose.msra.mxu0 0
        %1152 = vmatpush.bf16.xpose.msra.mxu0 0
        %1153 = vmatpush.bf16.xpose.msra.mxu0 0
        %1154 = vmatpush.bf16.xpose.msra.mxu0 0
        %1155 = vmatpush.bf16.xpose.msra.mxu0 0
        %1156 = vmatpush.bf16.xpose.msra.mxu0 0
        %1157 = vmatpush.bf16.xpose.msra.mxu0 %v898
        %1158 = vmatmul.bf16.gmra.mxu0 %v998
        %v1159 = vpop.f32.mrf.mxu0
        %v1160 = vadd.f32 %v1071, %v1159
        %v1161 = vpop.f32.mrf.mxu0
        %v1162 = vadd.f32 %v1073, %v1161
        %1163 = vmatmul.bf16.gmra.mxu0 %v1000
        %v1164 = vpop.f32.mrf.mxu0
        %v1165 = vadd.f32 %v1076, %v1164
        %v1166 = vpop.f32.mrf.mxu0
        %v1167 = vadd.f32 %v1078, %v1166
        %1168 = vmatmul.bf16.gmra.mxu0 %v1002
        %v1169 = vpop.f32.mrf.mxu0
        %v1170 = vadd.f32 %v1081, %v1169
        %v1171 = vpop.f32.mrf.mxu0
        %v1172 = vadd.f32 %v1083, %v1171
        %1173 = vmatmul.bf16.gmra.mxu0 %v1004
        %v1174 = vpop.f32.mrf.mxu0
        %v1175 = vadd.f32 %v1086, %v1174
        %v1176 = vpop.f32.mrf.mxu0
        %v1177 = vadd.f32 %v1088, %v1176
        %1178 = vmatmul.bf16.gmra.mxu0 %v1006
        %v1179 = vpop.f32.mrf.mxu0
        %v1180 = vadd.f32 %v1091, %v1179
        %v1181 = vpop.f32.mrf.mxu0
        %v1182 = vadd.f32 %v1093, %v1181
        %1183 = vmatmul.bf16.gmra.mxu0 %v1008
        %v1184 = vpop.f32.mrf.mxu0
        %v1185 = vadd.f32 %v1096, %v1184
        %v1186 = vpop.f32.mrf.mxu0
        %v1187 = vadd.f32 %v1098, %v1186
        %1188 = vmatmul.bf16.gmra.mxu0 %v1010
        %v1189 = vpop.f32.mrf.mxu0
        %v1190 = vadd.f32 %v1101, %v1189
        %v1191 = vpop.f32.mrf.mxu0
        %v1192 = vadd.f32 %v1103, %v1191
        %1193 = vmatmul.bf16.gmra.mxu0 %v1012
        %v1194 = vpop.f32.mrf.mxu0
        %v1195 = vadd.f32 %v1106, %v1194
        %v1196 = vpop.f32.mrf.mxu0
        %v1197 = vadd.f32 %v1108, %v1196
        %1198 = vmatmul.bf16.gmra.mxu0 %v1014
        %v1199 = vpop.f32.mrf.mxu0
        %v1200 = vadd.f32 %v1111, %v1199
        %v1201 = vpop.f32.mrf.mxu0
        %v1202 = vadd.f32 %v1113, %v1201
        %1203 = vmatmul.bf16.gmra.mxu0 %v1016
        %v1204 = vpop.f32.mrf.mxu0
        %v1205 = vadd.f32 %v1116, %v1204
        %v1206 = vpop.f32.mrf.mxu0
        %v1207 = vadd.f32 %v1118, %v1206
        %1208 = vmatmul.bf16.gmra.mxu0 %v1018
        %v1209 = vpop.f32.mrf.mxu0
        %v1210 = vadd.f32 %v1121, %v1209
        %v1211 = vpop.f32.mrf.mxu0
        %v1212 = vadd.f32 %v1123, %v1211
        %1213 = vmatmul.bf16.gmra.mxu0 %v1020
        %v1214 = vpop.f32.mrf.mxu0
        %v1215 = vadd.f32 %v1126, %v1214
        %v1216 = vpop.f32.mrf.mxu0
        %v1217 = vadd.f32 %v1128, %v1216
        %1218 = vmatmul.bf16.gmra.mxu0 %v1022
        %v1219 = vpop.f32.mrf.mxu0
        %v1220 = vadd.f32 %v1131, %v1219
        %v1221 = vpop.f32.mrf.mxu0
        %v1222 = vadd.f32 %v1133, %v1221
        %1223 = vmatmul.bf16.gmra.mxu0 %v1024
        %v1224 = vpop.f32.mrf.mxu0
        %v1225 = vadd.f32 %v1136, %v1224
        %v1226 = vpop.f32.mrf.mxu0
        %v1227 = vadd.f32 %v1138, %v1226
        %1228 = vmatmul.bf16.gmra.mxu0 %v1026
        %v1229 = vpop.f32.mrf.mxu0
        %v1230 = vadd.f32 %v1141, %v1229
        %v1231 = vpop.f32.mrf.mxu0
        %v1232 = vadd.f32 %v1143, %v1231
        %1233 = vmatmul.bf16.gmra.mxu0 %v1028
        %v1234 = vpop.f32.mrf.mxu0
        %v1235 = vadd.f32 %v1146, %v1234
        %v1236 = vpop.f32.mrf.mxu0
        %v1237 = vadd.f32 %v1148, %v1236
        %1238 = vdwg.mxu0
        %v1239 = vpack.c.bf16 %v1162, %v1160
        %v1240 = vpack.c.bf16 %v1167, %v1165
        %v1241 = vpack.c.bf16 %v1172, %v1170
        %v1242 = vpack.c.bf16 %v1177, %v1175
        %v1243 = vpack.c.bf16 %v1182, %v1180
        %v1244 = vpack.c.bf16 %v1187, %v1185
        %v1245 = vpack.c.bf16 %v1192, %v1190
        %v1246 = vpack.c.bf16 %v1197, %v1195
        %v1247 = vpack.c.bf16 %v1202, %v1200
        %v1248 = vpack.c.bf16 %v1207, %v1205
        %v1249 = vpack.c.bf16 %v1212, %v1210
        %v1250 = vpack.c.bf16 %v1217, %v1215
        %v1251 = vpack.c.bf16 %v1222, %v1220
        %v1252 = vpack.c.bf16 %v1227, %v1225
        %v1253 = vpack.c.bf16 %v1232, %v1230
        %v1254 = vpack.c.bf16 %v1237, %v1235
        %vm1255 = vcmask 64512
        %v1257 = vsel %vm1255, %v1239, 0
        %v1260 = vsel %vm1255, %v1240, 0
        %v1263 = vsel %vm1255, %v1241, 0
        %v1266 = vsel %vm1255, %v1242, 0
        %v1269 = vsel %vm1255, %v1243, 0
        %v1272 = vsel %vm1255, %v1244, 0
        %v1275 = vsel %vm1255, %v1245, 0
        %v1278 = vsel %vm1255, %v1246, 0
        %v1281 = vsel %vm1255, %v1247, 0
        %v1284 = vsel %vm1255, %v1248, 0
        %v1287 = vsel %vm1255, %v1249, 0
        %v1290 = vsel %vm1255, %v1250, 0
        %v1293 = vsel %vm1255, %v1251, 0
        %v1296 = vsel %vm1255, %v1252, 0
        %v1299 = vsel %vm1255, %v1253, 0
        %v1302 = vsel %vm1255, %v1254, 0
        %vm1304 = vcmask 1043456
        %v1306 = vsel %vm1304, %v895, 0
        %v1309 = vsel %vm1304, %v896, 0
        %1311 = vmatpush.bf16.msra.mxu0 0
        %1312 = vmatpush.bf16.msra.mxu0 0
        %1313 = vmatpush.bf16.msra.mxu0 0
        %1314 = vmatpush.bf16.msra.mxu0 0
        %1315 = vmatpush.bf16.msra.mxu0 0
        %1316 = vmatpush.bf16.msra.mxu0 0
        %1317 = vmatpush.bf16.msra.mxu0 0
        %1318 = vmatpush.bf16.msra.mxu0 %v1306
        %1319 = vmatmul.bf16.gmra.mxu0 %v1257
        %v1320 = vpop.f32.mrf.mxu0
        %v1321 = vadd.f32 0.0, %v1320
        %v1322 = vpop.f32.mrf.mxu0
        %v1323 = vadd.f32 0.0, %v1322
        %1324 = vmatmul.bf16.gmra.mxu0 %v1260
        %v1325 = vpop.f32.mrf.mxu0
        %v1326 = vadd.f32 0.0, %v1325
        %v1327 = vpop.f32.mrf.mxu0
        %v1328 = vadd.f32 0.0, %v1327
        %1329 = vmatmul.bf16.gmra.mxu0 %v1263
        %v1330 = vpop.f32.mrf.mxu0
        %v1331 = vadd.f32 0.0, %v1330
        %v1332 = vpop.f32.mrf.mxu0
        %v1333 = vadd.f32 0.0, %v1332
        %1334 = vmatmul.bf16.gmra.mxu0 %v1266
        %v1335 = vpop.f32.mrf.mxu0
        %v1336 = vadd.f32 0.0, %v1335
        %v1337 = vpop.f32.mrf.mxu0
        %v1338 = vadd.f32 0.0, %v1337
        %1339 = vmatmul.bf16.gmra.mxu0 %v1269
        %v1340 = vpop.f32.mrf.mxu0
        %v1341 = vadd.f32 0.0, %v1340
        %v1342 = vpop.f32.mrf.mxu0
        %v1343 = vadd.f32 0.0, %v1342
        %1344 = vmatmul.bf16.gmra.mxu0 %v1272
        %v1345 = vpop.f32.mrf.mxu0
        %v1346 = vadd.f32 0.0, %v1345
        %v1347 = vpop.f32.mrf.mxu0
        %v1348 = vadd.f32 0.0, %v1347
        %1349 = vmatmul.bf16.gmra.mxu0 %v1275
        %v1350 = vpop.f32.mrf.mxu0
        %v1351 = vadd.f32 0.0, %v1350
        %v1352 = vpop.f32.mrf.mxu0
        %v1353 = vadd.f32 0.0, %v1352
        %1354 = vmatmul.bf16.gmra.mxu0 %v1278
        %v1355 = vpop.f32.mrf.mxu0
        %v1356 = vadd.f32 0.0, %v1355
        %v1357 = vpop.f32.mrf.mxu0
        %v1358 = vadd.f32 0.0, %v1357
        %1359 = vmatmul.bf16.gmra.mxu0 %v1281
        %v1360 = vpop.f32.mrf.mxu0
        %v1361 = vadd.f32 0.0, %v1360
        %v1362 = vpop.f32.mrf.mxu0
        %v1363 = vadd.f32 0.0, %v1362
        %1364 = vmatmul.bf16.gmra.mxu0 %v1284
        %v1365 = vpop.f32.mrf.mxu0
        %v1366 = vadd.f32 0.0, %v1365
        %v1367 = vpop.f32.mrf.mxu0
        %v1368 = vadd.f32 0.0, %v1367
        %1369 = vmatmul.bf16.gmra.mxu0 %v1287
        %v1370 = vpop.f32.mrf.mxu0
        %v1371 = vadd.f32 0.0, %v1370
        %v1372 = vpop.f32.mrf.mxu0
        %v1373 = vadd.f32 0.0, %v1372
        %1374 = vmatmul.bf16.gmra.mxu0 %v1290
        %v1375 = vpop.f32.mrf.mxu0
        %v1376 = vadd.f32 0.0, %v1375
        %v1377 = vpop.f32.mrf.mxu0
        %v1378 = vadd.f32 0.0, %v1377
        %1379 = vmatmul.bf16.gmra.mxu0 %v1293
        %v1380 = vpop.f32.mrf.mxu0
        %v1381 = vadd.f32 0.0, %v1380
        %v1382 = vpop.f32.mrf.mxu0
        %v1383 = vadd.f32 0.0, %v1382
        %1384 = vmatmul.bf16.gmra.mxu0 %v1296
        %v1385 = vpop.f32.mrf.mxu0
        %v1386 = vadd.f32 0.0, %v1385
        %v1387 = vpop.f32.mrf.mxu0
        %v1388 = vadd.f32 0.0, %v1387
        %1389 = vmatmul.bf16.gmra.mxu0 %v1299
        %v1390 = vpop.f32.mrf.mxu0
        %v1391 = vadd.f32 0.0, %v1390
        %v1392 = vpop.f32.mrf.mxu0
        %v1393 = vadd.f32 0.0, %v1392
        %1394 = vmatmul.bf16.gmra.mxu0 %v1302
        %v1395 = vpop.f32.mrf.mxu0
        %v1396 = vadd.f32 0.0, %v1395
        %v1397 = vpop.f32.mrf.mxu0
        %v1398 = vadd.f32 0.0, %v1397
        %1399 = vdwg.mxu0
        %1400 = vmatpush.bf16.msra.mxu0 0
        %1401 = vmatpush.bf16.msra.mxu0 0
        %1402 = vmatpush.bf16.msra.mxu0 0
        %1403 = vmatpush.bf16.msra.mxu0 0
        %1404 = vmatpush.bf16.msra.mxu0 0
        %1405 = vmatpush.bf16.msra.mxu0 0
        %1406 = vmatpush.bf16.msra.mxu0 0
        %1407 = vmatpush.bf16.msra.mxu0 %v1309
        %1408 = vmatmul.bf16.gmra.mxu0 %v1257
        %v1409 = vpop.f32.mrf.mxu0
        %v1410 = vadd.f32 0.0, %v1409
        %v1411 = vpop.f32.mrf.mxu0
        %v1412 = vadd.f32 0.0, %v1411
        %1413 = vmatmul.bf16.gmra.mxu0 %v1260
        %v1414 = vpop.f32.mrf.mxu0
        %v1415 = vadd.f32 0.0, %v1414
        %v1416 = vpop.f32.mrf.mxu0
        %v1417 = vadd.f32 0.0, %v1416
        %1418 = vmatmul.bf16.gmra.mxu0 %v1263
        %v1419 = vpop.f32.mrf.mxu0
        %v1420 = vadd.f32 0.0, %v1419
        %v1421 = vpop.f32.mrf.mxu0
        %v1422 = vadd.f32 0.0, %v1421
        %1423 = vmatmul.bf16.gmra.mxu0 %v1266
        %v1424 = vpop.f32.mrf.mxu0
        %v1425 = vadd.f32 0.0, %v1424
        %v1426 = vpop.f32.mrf.mxu0
        %v1427 = vadd.f32 0.0, %v1426
        %1428 = vmatmul.bf16.gmra.mxu0 %v1269
        %v1429 = vpop.f32.mrf.mxu0
        %v1430 = vadd.f32 0.0, %v1429
        %v1431 = vpop.f32.mrf.mxu0
        %v1432 = vadd.f32 0.0, %v1431
        %1433 = vmatmul.bf16.gmra.mxu0 %v1272
        %v1434 = vpop.f32.mrf.mxu0
        %v1435 = vadd.f32 0.0, %v1434
        %v1436 = vpop.f32.mrf.mxu0
        %v1437 = vadd.f32 0.0, %v1436
        %1438 = vmatmul.bf16.gmra.mxu0 %v1275
        %v1439 = vpop.f32.mrf.mxu0
        %v1440 = vadd.f32 0.0, %v1439
        %v1441 = vpop.f32.mrf.mxu0
        %v1442 = vadd.f32 0.0, %v1441
        %1443 = vmatmul.bf16.gmra.mxu0 %v1278
        %v1444 = vpop.f32.mrf.mxu0
        %v1445 = vadd.f32 0.0, %v1444
        %v1446 = vpop.f32.mrf.mxu0
        %v1447 = vadd.f32 0.0, %v1446
        %1448 = vmatmul.bf16.gmra.mxu0 %v1281
        %v1449 = vpop.f32.mrf.mxu0
        %v1450 = vadd.f32 0.0, %v1449
        %v1451 = vpop.f32.mrf.mxu0
        %v1452 = vadd.f32 0.0, %v1451
        %1453 = vmatmul.bf16.gmra.mxu0 %v1284
        %v1454 = vpop.f32.mrf.mxu0
        %v1455 = vadd.f32 0.0, %v1454
        %v1456 = vpop.f32.mrf.mxu0
        %v1457 = vadd.f32 0.0, %v1456
        %1458 = vmatmul.bf16.gmra.mxu0 %v1287
        %v1459 = vpop.f32.mrf.mxu0
        %v1460 = vadd.f32 0.0, %v1459
        %v1461 = vpop.f32.mrf.mxu0
        %v1462 = vadd.f32 0.0, %v1461
        %1463 = vmatmul.bf16.gmra.mxu0 %v1290
        %v1464 = vpop.f32.mrf.mxu0
        %v1465 = vadd.f32 0.0, %v1464
        %v1466 = vpop.f32.mrf.mxu0
        %v1467 = vadd.f32 0.0, %v1466
        %1468 = vmatmul.bf16.gmra.mxu0 %v1293
        %v1469 = vpop.f32.mrf.mxu0
        %v1470 = vadd.f32 0.0, %v1469
        %v1471 = vpop.f32.mrf.mxu0
        %v1472 = vadd.f32 0.0, %v1471
        %1473 = vmatmul.bf16.gmra.mxu0 %v1296
        %v1474 = vpop.f32.mrf.mxu0
        %v1475 = vadd.f32 0.0, %v1474
        %v1476 = vpop.f32.mrf.mxu0
        %v1477 = vadd.f32 0.0, %v1476
        %1478 = vmatmul.bf16.gmra.mxu0 %v1299
        %v1479 = vpop.f32.mrf.mxu0
        %v1480 = vadd.f32 0.0, %v1479
        %v1481 = vpop.f32.mrf.mxu0
        %v1482 = vadd.f32 0.0, %v1481
        %1483 = vmatmul.bf16.gmra.mxu0 %v1302
        %v1484 = vpop.f32.mrf.mxu0
        %v1485 = vadd.f32 0.0, %v1484
        %v1486 = vpop.f32.mrf.mxu0
        %v1487 = vadd.f32 0.0, %v1486
        %1488 = vdwg.mxu0
        %v1489 = vmax.f32 %v1321, %v1326
        %v1490 = vmax.f32 %v1323, %v1328
        %v1491 = vmax.f32 %v1489, %v1331
        %v1492 = vmax.f32 %v1490, %v1333
        %v1493 = vmax.f32 %v1491, %v1336
        %v1494 = vmax.f32 %v1492, %v1338
        %v1495 = vmax.f32 %v1493, %v1341
        %v1496 = vmax.f32 %v1494, %v1343
        %v1497 = vmax.f32 %v1495, %v1346
        %v1498 = vmax.f32 %v1496, %v1348
        %v1499 = vmax.f32 %v1497, %v1351
        %v1500 = vmax.f32 %v1498, %v1353
        %v1501 = vmax.f32 %v1499, %v1356
        %v1502 = vmax.f32 %v1500, %v1358
        %v1503 = vmax.f32 %v1501, %v1361
        %v1504 = vmax.f32 %v1502, %v1363
        %v1505 = vmax.f32 %v1503, %v1366
        %v1506 = vmax.f32 %v1504, %v1368
        %v1507 = vmax.f32 %v1505, %v1371
        %v1508 = vmax.f32 %v1506, %v1373
        %v1509 = vmax.f32 %v1507, %v1376
        %v1510 = vmax.f32 %v1508, %v1378
        %v1511 = vmax.f32 %v1509, %v1381
        %v1512 = vmax.f32 %v1510, %v1383
        %v1513 = vmax.f32 %v1511, %v1386
        %v1514 = vmax.f32 %v1512, %v1388
        %v1515 = vmax.f32 %v1513, %v1391
        %v1516 = vmax.f32 %v1514, %v1393
        %v1517 = vmax.f32 %v1515, %v1396
        %v1518 = vmax.f32 %v1516, %v1398
        %v1519 = vmax.f32 %v1517, %v1518
        %v1520 = vrot.slane %v1519, 4
        %v1521 = vmax.f32 %v1519, %v1520
        %v1522 = vrot.slane %v1521, 2
        %v1523 = vmax.f32 %v1521, %v1522
        %v1524 = vrot.slane %v1523, 1
        %v1525 = vmax.f32 %v1523, %v1524
        %v1526 = vmax.f32 %v1410, %v1415
        %v1527 = vmax.f32 %v1412, %v1417
        %v1528 = vmax.f32 %v1526, %v1420
        %v1529 = vmax.f32 %v1527, %v1422
        %v1530 = vmax.f32 %v1528, %v1425
        %v1531 = vmax.f32 %v1529, %v1427
        %v1532 = vmax.f32 %v1530, %v1430
        %v1533 = vmax.f32 %v1531, %v1432
        %v1534 = vmax.f32 %v1532, %v1435
        %v1535 = vmax.f32 %v1533, %v1437
        %v1536 = vmax.f32 %v1534, %v1440
        %v1537 = vmax.f32 %v1535, %v1442
        %v1538 = vmax.f32 %v1536, %v1445
        %v1539 = vmax.f32 %v1537, %v1447
        %v1540 = vmax.f32 %v1538, %v1450
        %v1541 = vmax.f32 %v1539, %v1452
        %v1542 = vmax.f32 %v1540, %v1455
        %v1543 = vmax.f32 %v1541, %v1457
        %v1544 = vmax.f32 %v1542, %v1460
        %v1545 = vmax.f32 %v1543, %v1462
        %v1546 = vmax.f32 %v1544, %v1465
        %v1547 = vmax.f32 %v1545, %v1467
        %v1548 = vmax.f32 %v1546, %v1470
        %v1549 = vmax.f32 %v1547, %v1472
        %v1550 = vmax.f32 %v1548, %v1475
        %v1551 = vmax.f32 %v1549, %v1477
        %v1552 = vmax.f32 %v1550, %v1480
        %v1553 = vmax.f32 %v1551, %v1482
        %v1554 = vmax.f32 %v1552, %v1485
        %v1555 = vmax.f32 %v1553, %v1487
        %v1556 = vmax.f32 %v1554, %v1555
        %v1557 = vrot.slane %v1556, 4
        %v1558 = vmax.f32 %v1556, %v1557
        %v1559 = vrot.slane %v1558, 2
        %v1560 = vmax.f32 %v1558, %v1559
        %v1561 = vrot.slane %v1560, 1
        %v1562 = vmax.f32 %v1560, %v1561
        %v1563 = vsub.f32 %v1321, %v1525
        %v1564 = vsub.f32 %v1410, %v1562
        %v1565 = vsub.f32 %v1323, %v1525
        %v1566 = vsub.f32 %v1412, %v1562
        %v1567 = vsub.f32 %v1326, %v1525
        %v1568 = vsub.f32 %v1415, %v1562
        %v1569 = vsub.f32 %v1328, %v1525
        %v1570 = vsub.f32 %v1417, %v1562
        %v1571 = vsub.f32 %v1331, %v1525
        %v1572 = vsub.f32 %v1420, %v1562
        %v1573 = vsub.f32 %v1333, %v1525
        %v1574 = vsub.f32 %v1422, %v1562
        %v1575 = vsub.f32 %v1336, %v1525
        %v1576 = vsub.f32 %v1425, %v1562
        %v1577 = vsub.f32 %v1338, %v1525
        %v1578 = vsub.f32 %v1427, %v1562
        %v1579 = vsub.f32 %v1341, %v1525
        %v1580 = vsub.f32 %v1430, %v1562
        %v1581 = vsub.f32 %v1343, %v1525
        %v1582 = vsub.f32 %v1432, %v1562
        %v1583 = vsub.f32 %v1346, %v1525
        %v1584 = vsub.f32 %v1435, %v1562
        %v1585 = vsub.f32 %v1348, %v1525
        %v1586 = vsub.f32 %v1437, %v1562
        %v1587 = vsub.f32 %v1351, %v1525
        %v1588 = vsub.f32 %v1440, %v1562
        %v1589 = vsub.f32 %v1353, %v1525
        %v1590 = vsub.f32 %v1442, %v1562
        %v1591 = vsub.f32 %v1356, %v1525
        %v1592 = vsub.f32 %v1445, %v1562
        %v1593 = vsub.f32 %v1358, %v1525
        %v1594 = vsub.f32 %v1447, %v1562
        %v1595 = vsub.f32 %v1361, %v1525
        %v1596 = vsub.f32 %v1450, %v1562
        %v1597 = vsub.f32 %v1363, %v1525
        %v1598 = vsub.f32 %v1452, %v1562
        %v1599 = vsub.f32 %v1366, %v1525
        %v1600 = vsub.f32 %v1455, %v1562
        %v1601 = vsub.f32 %v1368, %v1525
        %v1602 = vsub.f32 %v1457, %v1562
        %v1603 = vsub.f32 %v1371, %v1525
        %v1604 = vsub.f32 %v1460, %v1562
        %v1605 = vsub.f32 %v1373, %v1525
        %v1606 = vsub.f32 %v1462, %v1562
        %v1607 = vsub.f32 %v1376, %v1525
        %v1608 = vsub.f32 %v1465, %v1562
        %v1609 = vsub.f32 %v1378, %v1525
        %v1610 = vsub.f32 %v1467, %v1562
        %v1611 = vsub.f32 %v1381, %v1525
        %v1612 = vsub.f32 %v1470, %v1562
        %v1613 = vsub.f32 %v1383, %v1525
        %v1614 = vsub.f32 %v1472, %v1562
        %v1615 = vsub.f32 %v1386, %v1525
        %v1616 = vsub.f32 %v1475, %v1562
        %v1617 = vsub.f32 %v1388, %v1525
        %v1618 = vsub.f32 %v1477, %v1562
        %v1619 = vsub.f32 %v1391, %v1525
        %v1620 = vsub.f32 %v1480, %v1562
        %v1621 = vsub.f32 %v1393, %v1525
        %v1622 = vsub.f32 %v1482, %v1562
        %v1623 = vsub.f32 %v1396, %v1525
        %v1624 = vsub.f32 %v1485, %v1562
        %v1625 = vsub.f32 %v1398, %v1525
        %v1626 = vsub.f32 %v1487, %v1562
        %v1627 = vmul.f32 %v1563, 1.442695
        %v1628 = vpow.pop %v1627
        %v1629 = vmul.f32 %v1564, 1.442695
        %v1630 = vpow.pop %v1629
        %v1631 = vmul.f32 %v1565, 1.442695
        %v1632 = vpow.pop %v1631
        %v1633 = vmul.f32 %v1566, 1.442695
        %v1634 = vpow.pop %v1633
        %v1635 = vmul.f32 %v1567, 1.442695
        %v1636 = vpow.pop %v1635
        %v1637 = vmul.f32 %v1568, 1.442695
        %v1638 = vpow.pop %v1637
        %v1639 = vmul.f32 %v1569, 1.442695
        %v1640 = vpow.pop %v1639
        %v1641 = vmul.f32 %v1570, 1.442695
        %v1642 = vpow.pop %v1641
        %v1643 = vmul.f32 %v1571, 1.442695
        %v1644 = vpow.pop %v1643
        %v1645 = vmul.f32 %v1572, 1.442695
        %v1646 = vpow.pop %v1645
        %v1647 = vmul.f32 %v1573, 1.442695
        %v1648 = vpow.pop %v1647
        %v1649 = vmul.f32 %v1574, 1.442695
        %v1650 = vpow.pop %v1649
        %v1651 = vmul.f32 %v1575, 1.442695
        %v1652 = vpow.pop %v1651
        %v1653 = vmul.f32 %v1576, 1.442695
        %v1654 = vpow.pop %v1653
        %v1655 = vmul.f32 %v1577, 1.442695
        %v1656 = vpow.pop %v1655
        %v1657 = vmul.f32 %v1578, 1.442695
        %v1658 = vpow.pop %v1657
        %v1659 = vmul.f32 %v1579, 1.442695
        %v1660 = vpow.pop %v1659
        %v1661 = vmul.f32 %v1580, 1.442695
        %v1662 = vpow.pop %v1661
        %v1663 = vmul.f32 %v1581, 1.442695
        %v1664 = vpow.pop %v1663
        %v1665 = vmul.f32 %v1582, 1.442695
        %v1666 = vpow.pop %v1665
        %v1667 = vmul.f32 %v1583, 1.442695
        %v1668 = vpow.pop %v1667
        %v1669 = vmul.f32 %v1584, 1.442695
        %v1670 = vpow.pop %v1669
        %v1671 = vmul.f32 %v1585, 1.442695
        %v1672 = vpow.pop %v1671
        %v1673 = vmul.f32 %v1586, 1.442695
        %v1674 = vpow.pop %v1673
        %v1675 = vmul.f32 %v1587, 1.442695
        %v1676 = vpow.pop %v1675
        %v1677 = vmul.f32 %v1588, 1.442695
        %v1678 = vpow.pop %v1677
        %v1679 = vmul.f32 %v1589, 1.442695
        %v1680 = vpow.pop %v1679
        %v1681 = vmul.f32 %v1590, 1.442695
        %v1682 = vpow.pop %v1681
        %v1683 = vmul.f32 %v1591, 1.442695
        %v1684 = vpow.pop %v1683
        %v1685 = vmul.f32 %v1592, 1.442695
        %v1686 = vpow.pop %v1685
        %v1687 = vmul.f32 %v1593, 1.442695
        %v1688 = vpow.pop %v1687
        %v1689 = vmul.f32 %v1594, 1.442695
        %v1690 = vpow.pop %v1689
        %v1691 = vmul.f32 %v1595, 1.442695
        %v1692 = vpow.pop %v1691
        %v1693 = vmul.f32 %v1596, 1.442695
        %v1694 = vpow.pop %v1693
        %v1695 = vmul.f32 %v1597, 1.442695
        %v1696 = vpow.pop %v1695
        %v1697 = vmul.f32 %v1598, 1.442695
        %v1698 = vpow.pop %v1697
        %v1699 = vmul.f32 %v1599, 1.442695
        %v1700 = vpow.pop %v1699
        %v1701 = vmul.f32 %v1600, 1.442695
        %v1702 = vpow.pop %v1701
        %v1703 = vmul.f32 %v1601, 1.442695
        %v1704 = vpow.pop %v1703
        %v1705 = vmul.f32 %v1602, 1.442695
        %v1706 = vpow.pop %v1705
        %v1707 = vmul.f32 %v1603, 1.442695
        %v1708 = vpow.pop %v1707
        %v1709 = vmul.f32 %v1604, 1.442695
        %v1710 = vpow.pop %v1709
        %v1711 = vmul.f32 %v1605, 1.442695
        %v1712 = vpow.pop %v1711
        %v1713 = vmul.f32 %v1606, 1.442695
        %v1714 = vpow.pop %v1713
        %v1715 = vmul.f32 %v1607, 1.442695
        %v1716 = vpow.pop %v1715
        %v1717 = vmul.f32 %v1608, 1.442695
        %v1718 = vpow.pop %v1717
        %v1719 = vmul.f32 %v1609, 1.442695
        %v1720 = vpow.pop %v1719
        %v1721 = vmul.f32 %v1610, 1.442695
        %v1722 = vpow.pop %v1721
        %v1723 = vmul.f32 %v1611, 1.442695
        %v1724 = vpow.pop %v1723
        %v1725 = vmul.f32 %v1612, 1.442695
        %v1726 = vpow.pop %v1725
        %v1727 = vmul.f32 %v1613, 1.442695
        %v1728 = vpow.pop %v1727
        %v1729 = vmul.f32 %v1614, 1.442695
        %v1730 = vpow.pop %v1729
        %v1731 = vmul.f32 %v1615, 1.442695
        %v1732 = vpow.pop %v1731
        %v1733 = vmul.f32 %v1616, 1.442695
        %v1734 = vpow.pop %v1733
        %v1735 = vmul.f32 %v1617, 1.442695
        %v1736 = vpow.pop %v1735
        %v1737 = vmul.f32 %v1618, 1.442695
        %v1738 = vpow.pop %v1737
        %v1739 = vmul.f32 %v1619, 1.442695
        %v1740 = vpow.pop %v1739
        %v1741 = vmul.f32 %v1620, 1.442695
        %v1742 = vpow.pop %v1741
        %v1743 = vmul.f32 %v1621, 1.442695
        %v1744 = vpow.pop %v1743
        %v1745 = vmul.f32 %v1622, 1.442695
        %v1746 = vpow.pop %v1745
        %v1747 = vmul.f32 %v1623, 1.442695
        %v1748 = vpow.pop %v1747
        %v1749 = vmul.f32 %v1624, 1.442695
        %v1750 = vpow.pop %v1749
        %v1751 = vmul.f32 %v1625, 1.442695
        %v1752 = vpow.pop %v1751
        %v1753 = vmul.f32 %v1626, 1.442695
        %v1754 = vpow.pop %v1753
        %v1755 = vadd.f32 %v1628, %v1632
        %v1756 = vadd.f32 %v1755, %v1636
        %v1757 = vadd.f32 %v1756, %v1640
        %v1758 = vadd.f32 %v1757, %v1644
        %v1759 = vadd.f32 %v1758, %v1648
        %v1760 = vadd.f32 %v1759, %v1652
        %v1761 = vadd.f32 %v1760, %v1656
        %v1762 = vadd.f32 %v1761, %v1660
        %v1763 = vadd.f32 %v1762, %v1664
        %v1764 = vadd.f32 %v1763, %v1668
        %v1765 = vadd.f32 %v1764, %v1672
        %v1766 = vadd.f32 %v1765, %v1676
        %v1767 = vadd.f32 %v1766, %v1680
        %v1768 = vadd.f32 %v1767, %v1684
        %v1769 = vadd.f32 %v1768, %v1688
        %v1770 = vadd.f32 %v1769, %v1692
        %v1771 = vadd.f32 %v1770, %v1696
        %v1772 = vadd.f32 %v1771, %v1700
        %v1773 = vadd.f32 %v1772, %v1704
        %v1774 = vadd.f32 %v1773, %v1708
        %v1775 = vadd.f32 %v1774, %v1712
        %v1776 = vadd.f32 %v1775, %v1716
        %v1777 = vadd.f32 %v1776, %v1720
        %v1778 = vadd.f32 %v1777, %v1724
        %v1779 = vadd.f32 %v1778, %v1728
        %v1780 = vadd.f32 %v1779, %v1732
        %v1781 = vadd.f32 %v1780, %v1736
        %v1782 = vadd.f32 %v1781, %v1740
        %v1783 = vadd.f32 %v1782, %v1744
        %v1784 = vadd.f32 %v1783, %v1748
        %v1785 = vadd.f32 %v1784, %v1752
        %v1786 = vrot.slane %v1785, 4
        %v1787 = vadd.f32 %v1785, %v1786
        %v1788 = vrot.slane %v1787, 2
        %v1789 = vadd.f32 %v1787, %v1788
        %v1790 = vrot.slane %v1789, 1
        %v1791 = vadd.f32 %v1789, %v1790
        %v1792 = vadd.f32 %v1630, %v1634
        %v1793 = vadd.f32 %v1792, %v1638
        %v1794 = vadd.f32 %v1793, %v1642
        %v1795 = vadd.f32 %v1794, %v1646
        %v1796 = vadd.f32 %v1795, %v1650
        %v1797 = vadd.f32 %v1796, %v1654
        %v1798 = vadd.f32 %v1797, %v1658
        %v1799 = vadd.f32 %v1798, %v1662
        %v1800 = vadd.f32 %v1799, %v1666
        %v1801 = vadd.f32 %v1800, %v1670
        %v1802 = vadd.f32 %v1801, %v1674
        %v1803 = vadd.f32 %v1802, %v1678
        %v1804 = vadd.f32 %v1803, %v1682
        %v1805 = vadd.f32 %v1804, %v1686
        %v1806 = vadd.f32 %v1805, %v1690
        %v1807 = vadd.f32 %v1806, %v1694
        %v1808 = vadd.f32 %v1807, %v1698
        %v1809 = vadd.f32 %v1808, %v1702
        %v1810 = vadd.f32 %v1809, %v1706
        %v1811 = vadd.f32 %v1810, %v1710
        %v1812 = vadd.f32 %v1811, %v1714
        %v1813 = vadd.f32 %v1812, %v1718
        %v1814 = vadd.f32 %v1813, %v1722
        %v1815 = vadd.f32 %v1814, %v1726
        %v1816 = vadd.f32 %v1815, %v1730
        %v1817 = vadd.f32 %v1816, %v1734
        %v1818 = vadd.f32 %v1817, %v1738
        %v1819 = vadd.f32 %v1818, %v1742
        %v1820 = vadd.f32 %v1819, %v1746
        %v1821 = vadd.f32 %v1820, %v1750
        %v1822 = vadd.f32 %v1821, %v1754
        %v1823 = vrot.slane %v1822, 4
        %v1824 = vadd.f32 %v1822, %v1823
        %v1825 = vrot.slane %v1824, 2
        %v1826 = vadd.f32 %v1824, %v1825
        %v1827 = vrot.slane %v1826, 1
        %v1828 = vadd.f32 %v1826, %v1827
        %v1829 = vrcp.pop %v1791
        %v1830 = vrcp.pop %v1828
        %v1831 = vmul.f32 %v1628, %v1829
        %v1832 = vmul.f32 %v1630, %v1830
        %v1833 = vmul.f32 %v1632, %v1829
        %v1834 = vmul.f32 %v1634, %v1830
        %v1835 = vmul.f32 %v1636, %v1829
        %v1836 = vmul.f32 %v1638, %v1830
        %v1837 = vmul.f32 %v1640, %v1829
        %v1838 = vmul.f32 %v1642, %v1830
        %v1839 = vmul.f32 %v1644, %v1829
        %v1840 = vmul.f32 %v1646, %v1830
        %v1841 = vmul.f32 %v1648, %v1829
        %v1842 = vmul.f32 %v1650, %v1830
        %v1843 = vmul.f32 %v1652, %v1829
        %v1844 = vmul.f32 %v1654, %v1830
        %v1845 = vmul.f32 %v1656, %v1829
        %v1846 = vmul.f32 %v1658, %v1830
        %v1847 = vmul.f32 %v1660, %v1829
        %v1848 = vmul.f32 %v1662, %v1830
        %v1849 = vmul.f32 %v1664, %v1829
        %v1850 = vmul.f32 %v1666, %v1830
        %v1851 = vmul.f32 %v1668, %v1829
        %v1852 = vmul.f32 %v1670, %v1830
        %v1853 = vmul.f32 %v1672, %v1829
        %v1854 = vmul.f32 %v1674, %v1830
        %v1855 = vmul.f32 %v1676, %v1829
        %v1856 = vmul.f32 %v1678, %v1830
        %v1857 = vmul.f32 %v1680, %v1829
        %v1858 = vmul.f32 %v1682, %v1830
        %v1859 = vmul.f32 %v1684, %v1829
        %v1860 = vmul.f32 %v1686, %v1830
        %v1861 = vmul.f32 %v1688, %v1829
        %v1862 = vmul.f32 %v1690, %v1830
        %v1863 = vmul.f32 %v1692, %v1829
        %v1864 = vmul.f32 %v1694, %v1830
        %v1865 = vmul.f32 %v1696, %v1829
        %v1866 = vmul.f32 %v1698, %v1830
        %v1867 = vmul.f32 %v1700, %v1829
        %v1868 = vmul.f32 %v1702, %v1830
        %v1869 = vmul.f32 %v1704, %v1829
        %v1870 = vmul.f32 %v1706, %v1830
        %v1871 = vmul.f32 %v1708, %v1829
        %v1872 = vmul.f32 %v1710, %v1830
        %v1873 = vmul.f32 %v1712, %v1829
        %v1874 = vmul.f32 %v1714, %v1830
        %v1875 = vmul.f32 %v1716, %v1829
        %v1876 = vmul.f32 %v1718, %v1830
        %v1877 = vmul.f32 %v1720, %v1829
        %v1878 = vmul.f32 %v1722, %v1830
        %v1879 = vmul.f32 %v1724, %v1829
        %v1880 = vmul.f32 %v1726, %v1830
        %v1881 = vmul.f32 %v1728, %v1829
        %v1882 = vmul.f32 %v1730, %v1830
        %v1883 = vmul.f32 %v1732, %v1829
        %v1884 = vmul.f32 %v1734, %v1830
        %v1885 = vmul.f32 %v1736, %v1829
        %v1886 = vmul.f32 %v1738, %v1830
        %v1887 = vmul.f32 %v1740, %v1829
        %v1888 = vmul.f32 %v1742, %v1830
        %v1889 = vmul.f32 %v1744, %v1829
        %v1890 = vmul.f32 %v1746, %v1830
        %v1891 = vmul.f32 %v1748, %v1829
        %v1892 = vmul.f32 %v1750, %v1830
        %v1893 = vmul.f32 %v1752, %v1829
        %v1894 = vmul.f32 %v1754, %v1830
        %v1895 = vpack.c.bf16 %v1833, %v1831
        %v1896 = vpack.c.bf16 %v1834, %v1832
        %v1897 = vpack.c.bf16 %v1837, %v1835
        %v1898 = vpack.c.bf16 %v1838, %v1836
        %v1899 = vpack.c.bf16 %v1841, %v1839
        %v1900 = vpack.c.bf16 %v1842, %v1840
        %v1901 = vpack.c.bf16 %v1845, %v1843
        %v1902 = vpack.c.bf16 %v1846, %v1844
        %v1903 = vpack.c.bf16 %v1849, %v1847
        %v1904 = vpack.c.bf16 %v1850, %v1848
        %v1905 = vpack.c.bf16 %v1853, %v1851
        %v1906 = vpack.c.bf16 %v1854, %v1852
        %v1907 = vpack.c.bf16 %v1857, %v1855
        %v1908 = vpack.c.bf16 %v1858, %v1856
        %v1909 = vpack.c.bf16 %v1861, %v1859
        %v1910 = vpack.c.bf16 %v1862, %v1860
        %v1911 = vpack.c.bf16 %v1865, %v1863
        %v1912 = vpack.c.bf16 %v1866, %v1864
        %v1913 = vpack.c.bf16 %v1869, %v1867
        %v1914 = vpack.c.bf16 %v1870, %v1868
        %v1915 = vpack.c.bf16 %v1873, %v1871
        %v1916 = vpack.c.bf16 %v1874, %v1872
        %v1917 = vpack.c.bf16 %v1877, %v1875
        %v1918 = vpack.c.bf16 %v1878, %v1876
        %v1919 = vpack.c.bf16 %v1881, %v1879
        %v1920 = vpack.c.bf16 %v1882, %v1880
        %v1921 = vpack.c.bf16 %v1885, %v1883
        %v1922 = vpack.c.bf16 %v1886, %v1884
        %v1923 = vpack.c.bf16 %v1889, %v1887
        %v1924 = vpack.c.bf16 %v1890, %v1888
        %v1925 = vpack.c.bf16 %v1893, %v1891
        %v1926 = vpack.c.bf16 %v1894, %v1892
        %1927 = vmatpush.bf16.msra.mxu0 %v1909
        %1928 = vmatpush.bf16.msra.mxu0 %v1907
        %1929 = vmatpush.bf16.msra.mxu0 %v1905
        %1930 = vmatpush.bf16.msra.mxu0 %v1903
        %1931 = vmatpush.bf16.msra.mxu0 %v1901
        %1932 = vmatpush.bf16.msra.mxu0 %v1899
        %1933 = vmatpush.bf16.msra.mxu0 %v1897
        %1934 = vmatpush.bf16.msra.mxu0 %v1895
        %1935 = vmatmul.bf16.gmra.mxu0 %v899
        %v1936 = vpop.f32.mrf.mxu0
        %v1937 = vadd.f32 0.0, %v1936
        %v1938 = vpop.f32.mrf.mxu0
        %1939 = vdwg.mxu0
        %1940 = vmatpush.bf16.msra.mxu0 %v1925
        %1941 = vmatpush.bf16.msra.mxu0 %v1923
        %1942 = vmatpush.bf16.msra.mxu0 %v1921
        %1943 = vmatpush.bf16.msra.mxu0 %v1919
        %1944 = vmatpush.bf16.msra.mxu0 %v1917
        %1945 = vmatpush.bf16.msra.mxu0 %v1915
        %1946 = vmatpush.bf16.msra.mxu0 %v1913
        %1947 = vmatpush.bf16.msra.mxu0 %v1911
        %1948 = vmatmul.bf16.gmra.mxu0 %v900
        %v1949 = vpop.f32.mrf.mxu0
        %v1950 = vadd.f32 %v1937, %v1949
        %v1951 = vpop.f32.mrf.mxu0
        %1952 = vdwg.mxu0
        %1953 = vmatpush.bf16.msra.mxu0 %v1910
        %1954 = vmatpush.bf16.msra.mxu0 %v1908
        %1955 = vmatpush.bf16.msra.mxu0 %v1906
        %1956 = vmatpush.bf16.msra.mxu0 %v1904
        %1957 = vmatpush.bf16.msra.mxu0 %v1902
        %1958 = vmatpush.bf16.msra.mxu0 %v1900
        %1959 = vmatpush.bf16.msra.mxu0 %v1898
        %1960 = vmatpush.bf16.msra.mxu0 %v1896
        %1961 = vmatmul.bf16.gmra.mxu0 %v899
        %v1962 = vpop.f32.mrf.mxu0
        %v1963 = vadd.f32 0.0, %v1962
        %v1964 = vpop.f32.mrf.mxu0
        %1965 = vdwg.mxu0
        %1966 = vmatpush.bf16.msra.mxu0 %v1926
        %1967 = vmatpush.bf16.msra.mxu0 %v1924
        %1968 = vmatpush.bf16.msra.mxu0 %v1922
        %1969 = vmatpush.bf16.msra.mxu0 %v1920
        %1970 = vmatpush.bf16.msra.mxu0 %v1918
        %1971 = vmatpush.bf16.msra.mxu0 %v1916
        %1972 = vmatpush.bf16.msra.mxu0 %v1914
        %1973 = vmatpush.bf16.msra.mxu0 %v1912
        %1974 = vmatmul.bf16.gmra.mxu0 %v900
        %v1975 = vpop.f32.mrf.mxu0
        %v1976 = vadd.f32 %v1963, %v1975
        %v1977 = vpop.f32.mrf.mxu0
        %1978 = vdwg.mxu0
        %1979 = vst [vmem:[#allocation3] sm:$0xff] %v1950
        %1980 = vst [vmem:[#allocation3 + $0x8] sm:$0xff] %v1976
        %v1981 = vpack.c.bf16 %v721, %v721
        %v1982 = vpack.c.bf16 %v740, %v740
        %v1983 = vpack.c.bf16 %v779, %v779
        %v1984 = vpack.c.bf16 %v798, %v798
        %v1985 = vpack.c.bf16 %v837, %v837
        %v1986 = vpack.c.bf16 %v856, %v856
        %1987 = vmatpush.bf16.xpose.msra.mxu0 0
        %1988 = vmatpush.bf16.xpose.msra.mxu0 0
        %1989 = vmatpush.bf16.xpose.msra.mxu0 0
        %1990 = vmatpush.bf16.xpose.msra.mxu0 0
        %1991 = vmatpush.bf16.xpose.msra.mxu0 0
        %1992 = vmatpush.bf16.xpose.msra.mxu0 0
        %1993 = vmatpush.bf16.xpose.msra.mxu0 0
        %1994 = vmatpush.bf16.xpose.msra.mxu0 %v1983
        %1995 = vmatmul.bf16.gmra.mxu0 %v997
        %v1996 = vpop.f32.mrf.mxu0
        %v1997 = vadd.f32 0.0, %v1996
        %v1998 = vpop.f32.mrf.mxu0
        %v1999 = vadd.f32 0.0, %v1998
        %2000 = vmatmul.bf16.gmra.mxu0 %v999
        %v2001 = vpop.f32.mrf.mxu0
        %v2002 = vadd.f32 0.0, %v2001
        %v2003 = vpop.f32.mrf.mxu0
        %v2004 = vadd.f32 0.0, %v2003
        %2005 = vmatmul.bf16.gmra.mxu0 %v1001
        %v2006 = vpop.f32.mrf.mxu0
        %v2007 = vadd.f32 0.0, %v2006
        %v2008 = vpop.f32.mrf.mxu0
        %v2009 = vadd.f32 0.0, %v2008
        %2010 = vmatmul.bf16.gmra.mxu0 %v1003
        %v2011 = vpop.f32.mrf.mxu0
        %v2012 = vadd.f32 0.0, %v2011
        %v2013 = vpop.f32.mrf.mxu0
        %v2014 = vadd.f32 0.0, %v2013
        %2015 = vmatmul.bf16.gmra.mxu0 %v1005
        %v2016 = vpop.f32.mrf.mxu0
        %v2017 = vadd.f32 0.0, %v2016
        %v2018 = vpop.f32.mrf.mxu0
        %v2019 = vadd.f32 0.0, %v2018
        %2020 = vmatmul.bf16.gmra.mxu0 %v1007
        %v2021 = vpop.f32.mrf.mxu0
        %v2022 = vadd.f32 0.0, %v2021
        %v2023 = vpop.f32.mrf.mxu0
        %v2024 = vadd.f32 0.0, %v2023
        %2025 = vmatmul.bf16.gmra.mxu0 %v1009
        %v2026 = vpop.f32.mrf.mxu0
        %v2027 = vadd.f32 0.0, %v2026
        %v2028 = vpop.f32.mrf.mxu0
        %v2029 = vadd.f32 0.0, %v2028
        %2030 = vmatmul.bf16.gmra.mxu0 %v1011
        %v2031 = vpop.f32.mrf.mxu0
        %v2032 = vadd.f32 0.0, %v2031
        %v2033 = vpop.f32.mrf.mxu0
        %v2034 = vadd.f32 0.0, %v2033
        %2035 = vmatmul.bf16.gmra.mxu0 %v1013
        %v2036 = vpop.f32.mrf.mxu0
        %v2037 = vadd.f32 0.0, %v2036
        %v2038 = vpop.f32.mrf.mxu0
        %v2039 = vadd.f32 0.0, %v2038
        %2040 = vmatmul.bf16.gmra.mxu0 %v1015
        %v2041 = vpop.f32.mrf.mxu0
        %v2042 = vadd.f32 0.0, %v2041
        %v2043 = vpop.f32.mrf.mxu0
        %v2044 = vadd.f32 0.0, %v2043
        %2045 = vmatmul.bf16.gmra.mxu0 %v1017
        %v2046 = vpop.f32.mrf.mxu0
        %v2047 = vadd.f32 0.0, %v2046
        %v2048 = vpop.f32.mrf.mxu0
        %v2049 = vadd.f32 0.0, %v2048
        %2050 = vmatmul.bf16.gmra.mxu0 %v1019
        %v2051 = vpop.f32.mrf.mxu0
        %v2052 = vadd.f32 0.0, %v2051
        %v2053 = vpop.f32.mrf.mxu0
        %v2054 = vadd.f32 0.0, %v2053
        %2055 = vmatmul.bf16.gmra.mxu0 %v1021
        %v2056 = vpop.f32.mrf.mxu0
        %v2057 = vadd.f32 0.0, %v2056
        %v2058 = vpop.f32.mrf.mxu0
        %v2059 = vadd.f32 0.0, %v2058
        %2060 = vmatmul.bf16.gmra.mxu0 %v1023
        %v2061 = vpop.f32.mrf.mxu0
        %v2062 = vadd.f32 0.0, %v2061
        %v2063 = vpop.f32.mrf.mxu0
        %v2064 = vadd.f32 0.0, %v2063
        %2065 = vmatmul.bf16.gmra.mxu0 %v1025
        %v2066 = vpop.f32.mrf.mxu0
        %v2067 = vadd.f32 0.0, %v2066
        %v2068 = vpop.f32.mrf.mxu0
        %v2069 = vadd.f32 0.0, %v2068
        %2070 = vmatmul.bf16.gmra.mxu0 %v1027
        %v2071 = vpop.f32.mrf.mxu0
        %v2072 = vadd.f32 0.0, %v2071
        %v2073 = vpop.f32.mrf.mxu0
        %v2074 = vadd.f32 0.0, %v2073
        %2075 = vdwg.mxu0
        %2076 = vmatpush.bf16.xpose.msra.mxu0 0
        %2077 = vmatpush.bf16.xpose.msra.mxu0 0
        %2078 = vmatpush.bf16.xpose.msra.mxu0 0
        %2079 = vmatpush.bf16.xpose.msra.mxu0 0
        %2080 = vmatpush.bf16.xpose.msra.mxu0 0
        %2081 = vmatpush.bf16.xpose.msra.mxu0 0
        %2082 = vmatpush.bf16.xpose.msra.mxu0 0
        %2083 = vmatpush.bf16.xpose.msra.mxu0 %v1984
        %2084 = vmatmul.bf16.gmra.mxu0 %v998
        %v2085 = vpop.f32.mrf.mxu0
        %v2086 = vadd.f32 %v1997, %v2085
        %v2087 = vpop.f32.mrf.mxu0
        %v2088 = vadd.f32 %v1999, %v2087
        %2089 = vmatmul.bf16.gmra.mxu0 %v1000
        %v2090 = vpop.f32.mrf.mxu0
        %v2091 = vadd.f32 %v2002, %v2090
        %v2092 = vpop.f32.mrf.mxu0
        %v2093 = vadd.f32 %v2004, %v2092
        %2094 = vmatmul.bf16.gmra.mxu0 %v1002
        %v2095 = vpop.f32.mrf.mxu0
        %v2096 = vadd.f32 %v2007, %v2095
        %v2097 = vpop.f32.mrf.mxu0
        %v2098 = vadd.f32 %v2009, %v2097
        %2099 = vmatmul.bf16.gmra.mxu0 %v1004
        %v2100 = vpop.f32.mrf.mxu0
        %v2101 = vadd.f32 %v2012, %v2100
        %v2102 = vpop.f32.mrf.mxu0
        %v2103 = vadd.f32 %v2014, %v2102
        %2104 = vmatmul.bf16.gmra.mxu0 %v1006
        %v2105 = vpop.f32.mrf.mxu0
        %v2106 = vadd.f32 %v2017, %v2105
        %v2107 = vpop.f32.mrf.mxu0
        %v2108 = vadd.f32 %v2019, %v2107
        %2109 = vmatmul.bf16.gmra.mxu0 %v1008
        %v2110 = vpop.f32.mrf.mxu0
        %v2111 = vadd.f32 %v2022, %v2110
        %v2112 = vpop.f32.mrf.mxu0
        %v2113 = vadd.f32 %v2024, %v2112
        %2114 = vmatmul.bf16.gmra.mxu0 %v1010
        %v2115 = vpop.f32.mrf.mxu0
        %v2116 = vadd.f32 %v2027, %v2115
        %v2117 = vpop.f32.mrf.mxu0
        %v2118 = vadd.f32 %v2029, %v2117
        %2119 = vmatmul.bf16.gmra.mxu0 %v1012
        %v2120 = vpop.f32.mrf.mxu0
        %v2121 = vadd.f32 %v2032, %v2120
        %v2122 = vpop.f32.mrf.mxu0
        %v2123 = vadd.f32 %v2034, %v2122
        %2124 = vmatmul.bf16.gmra.mxu0 %v1014
        %v2125 = vpop.f32.mrf.mxu0
        %v2126 = vadd.f32 %v2037, %v2125
        %v2127 = vpop.f32.mrf.mxu0
        %v2128 = vadd.f32 %v2039, %v2127
        %2129 = vmatmul.bf16.gmra.mxu0 %v1016
        %v2130 = vpop.f32.mrf.mxu0
        %v2131 = vadd.f32 %v2042, %v2130
        %v2132 = vpop.f32.mrf.mxu0
        %v2133 = vadd.f32 %v2044, %v2132
        %2134 = vmatmul.bf16.gmra.mxu0 %v1018
        %v2135 = vpop.f32.mrf.mxu0
        %v2136 = vadd.f32 %v2047, %v2135
        %v2137 = vpop.f32.mrf.mxu0
        %v2138 = vadd.f32 %v2049, %v2137
        %2139 = vmatmul.bf16.gmra.mxu0 %v1020
        %v2140 = vpop.f32.mrf.mxu0
        %v2141 = vadd.f32 %v2052, %v2140
        %v2142 = vpop.f32.mrf.mxu0
        %v2143 = vadd.f32 %v2054, %v2142
        %2144 = vmatmul.bf16.gmra.mxu0 %v1022
        %v2145 = vpop.f32.mrf.mxu0
        %v2146 = vadd.f32 %v2057, %v2145
        %v2147 = vpop.f32.mrf.mxu0
        %v2148 = vadd.f32 %v2059, %v2147
        %2149 = vmatmul.bf16.gmra.mxu0 %v1024
        %v2150 = vpop.f32.mrf.mxu0
        %v2151 = vadd.f32 %v2062, %v2150
        %v2152 = vpop.f32.mrf.mxu0
        %v2153 = vadd.f32 %v2064, %v2152
        %2154 = vmatmul.bf16.gmra.mxu0 %v1026
        %v2155 = vpop.f32.mrf.mxu0
        %v2156 = vadd.f32 %v2067, %v2155
        %v2157 = vpop.f32.mrf.mxu0
        %v2158 = vadd.f32 %v2069, %v2157
        %2159 = vmatmul.bf16.gmra.mxu0 %v1028
        %v2160 = vpop.f32.mrf.mxu0
        %v2161 = vadd.f32 %v2072, %v2160
        %v2162 = vpop.f32.mrf.mxu0
        %v2163 = vadd.f32 %v2074, %v2162
        %2164 = vdwg.mxu0
        %v2165 = vpack.c.bf16 %v2088, %v2086
        %v2166 = vpack.c.bf16 %v2093, %v2091
        %v2167 = vpack.c.bf16 %v2098, %v2096
        %v2168 = vpack.c.bf16 %v2103, %v2101
        %v2169 = vpack.c.bf16 %v2108, %v2106
        %v2170 = vpack.c.bf16 %v2113, %v2111
        %v2171 = vpack.c.bf16 %v2118, %v2116
        %v2172 = vpack.c.bf16 %v2123, %v2121
        %v2173 = vpack.c.bf16 %v2128, %v2126
        %v2174 = vpack.c.bf16 %v2133, %v2131
        %v2175 = vpack.c.bf16 %v2138, %v2136
        %v2176 = vpack.c.bf16 %v2143, %v2141
        %v2177 = vpack.c.bf16 %v2148, %v2146
        %v2178 = vpack.c.bf16 %v2153, %v2151
        %v2179 = vpack.c.bf16 %v2158, %v2156
        %v2180 = vpack.c.bf16 %v2163, %v2161
        %v2182 = vsel %vm1255, %v2165, 0
        %v2185 = vsel %vm1255, %v2166, 0
        %v2188 = vsel %vm1255, %v2167, 0
        %v2191 = vsel %vm1255, %v2168, 0
        %v2194 = vsel %vm1255, %v2169, 0
        %v2197 = vsel %vm1255, %v2170, 0
        %v2200 = vsel %vm1255, %v2171, 0
        %v2203 = vsel %vm1255, %v2172, 0
        %v2206 = vsel %vm1255, %v2173, 0
        %v2209 = vsel %vm1255, %v2174, 0
        %v2212 = vsel %vm1255, %v2175, 0
        %v2215 = vsel %vm1255, %v2176, 0
        %v2218 = vsel %vm1255, %v2177, 0
        %v2221 = vsel %vm1255, %v2178, 0
        %v2224 = vsel %vm1255, %v2179, 0
        %v2227 = vsel %vm1255, %v2180, 0
        %v2230 = vsel %vm1304, %v1981, 0
        %v2233 = vsel %vm1304, %v1982, 0
        %2235 = vmatpush.bf16.msra.mxu0 0
        %2236 = vmatpush.bf16.msra.mxu0 0
        %2237 = vmatpush.bf16.msra.mxu0 0
        %2238 = vmatpush.bf16.msra.mxu0 0
        %2239 = vmatpush.bf16.msra.mxu0 0
        %2240 = vmatpush.bf16.msra.mxu0 0
        %2241 = vmatpush.bf16.msra.mxu0 0
        %2242 = vmatpush.bf16.msra.mxu0 %v2230
        %2243 = vmatmul.bf16.gmra.mxu0 %v2182
        %v2244 = vpop.f32.mrf.mxu0
        %v2245 = vadd.f32 0.0, %v2244
        %v2246 = vpop.f32.mrf.mxu0
        %v2247 = vadd.f32 0.0, %v2246
        %2248 = vmatmul.bf16.gmra.mxu0 %v2185
        %v2249 = vpop.f32.mrf.mxu0
        %v2250 = vadd.f32 0.0, %v2249
        %v2251 = vpop.f32.mrf.mxu0
        %v2252 = vadd.f32 0.0, %v2251
        %2253 = vmatmul.bf16.gmra.mxu0 %v2188
        %v2254 = vpop.f32.mrf.mxu0
        %v2255 = vadd.f32 0.0, %v2254
        %v2256 = vpop.f32.mrf.mxu0
        %v2257 = vadd.f32 0.0, %v2256
        %2258 = vmatmul.bf16.gmra.mxu0 %v2191
        %v2259 = vpop.f32.mrf.mxu0
        %v2260 = vadd.f32 0.0, %v2259
        %v2261 = vpop.f32.mrf.mxu0
        %v2262 = vadd.f32 0.0, %v2261
        %2263 = vmatmul.bf16.gmra.mxu0 %v2194
        %v2264 = vpop.f32.mrf.mxu0
        %v2265 = vadd.f32 0.0, %v2264
        %v2266 = vpop.f32.mrf.mxu0
        %v2267 = vadd.f32 0.0, %v2266
        %2268 = vmatmul.bf16.gmra.mxu0 %v2197
        %v2269 = vpop.f32.mrf.mxu0
        %v2270 = vadd.f32 0.0, %v2269
        %v2271 = vpop.f32.mrf.mxu0
        %v2272 = vadd.f32 0.0, %v2271
        %2273 = vmatmul.bf16.gmra.mxu0 %v2200
        %v2274 = vpop.f32.mrf.mxu0
        %v2275 = vadd.f32 0.0, %v2274
        %v2276 = vpop.f32.mrf.mxu0
        %v2277 = vadd.f32 0.0, %v2276
        %2278 = vmatmul.bf16.gmra.mxu0 %v2203
        %v2279 = vpop.f32.mrf.mxu0
        %v2280 = vadd.f32 0.0, %v2279
        %v2281 = vpop.f32.mrf.mxu0
        %v2282 = vadd.f32 0.0, %v2281
        %2283 = vmatmul.bf16.gmra.mxu0 %v2206
        %v2284 = vpop.f32.mrf.mxu0
        %v2285 = vadd.f32 0.0, %v2284
        %v2286 = vpop.f32.mrf.mxu0
        %v2287 = vadd.f32 0.0, %v2286
        %2288 = vmatmul.bf16.gmra.mxu0 %v2209
        %v2289 = vpop.f32.mrf.mxu0
        %v2290 = vadd.f32 0.0, %v2289
        %v2291 = vpop.f32.mrf.mxu0
        %v2292 = vadd.f32 0.0, %v2291
        %2293 = vmatmul.bf16.gmra.mxu0 %v2212
        %v2294 = vpop.f32.mrf.mxu0
        %v2295 = vadd.f32 0.0, %v2294
        %v2296 = vpop.f32.mrf.mxu0
        %v2297 = vadd.f32 0.0, %v2296
        %2298 = vmatmul.bf16.gmra.mxu0 %v2215
        %v2299 = vpop.f32.mrf.mxu0
        %v2300 = vadd.f32 0.0, %v2299
        %v2301 = vpop.f32.mrf.mxu0
        %v2302 = vadd.f32 0.0, %v2301
        %2303 = vmatmul.bf16.gmra.mxu0 %v2218
        %v2304 = vpop.f32.mrf.mxu0
        %v2305 = vadd.f32 0.0, %v2304
        %v2306 = vpop.f32.mrf.mxu0
        %v2307 = vadd.f32 0.0, %v2306
        %2308 = vmatmul.bf16.gmra.mxu0 %v2221
        %v2309 = vpop.f32.mrf.mxu0
        %v2310 = vadd.f32 0.0, %v2309
        %v2311 = vpop.f32.mrf.mxu0
        %v2312 = vadd.f32 0.0, %v2311
        %2313 = vmatmul.bf16.gmra.mxu0 %v2224
        %v2314 = vpop.f32.mrf.mxu0
        %v2315 = vadd.f32 0.0, %v2314
        %v2316 = vpop.f32.mrf.mxu0
        %v2317 = vadd.f32 0.0, %v2316
        %2318 = vmatmul.bf16.gmra.mxu0 %v2227
        %v2319 = vpop.f32.mrf.mxu0
        %v2320 = vadd.f32 0.0, %v2319
        %v2321 = vpop.f32.mrf.mxu0
        %v2322 = vadd.f32 0.0, %v2321
        %2323 = vdwg.mxu0
        %2324 = vmatpush.bf16.msra.mxu0 0
        %2325 = vmatpush.bf16.msra.mxu0 0
        %2326 = vmatpush.bf16.msra.mxu0 0
        %2327 = vmatpush.bf16.msra.mxu0 0
        %2328 = vmatpush.bf16.msra.mxu0 0
        %2329 = vmatpush.bf16.msra.mxu0 0
        %2330 = vmatpush.bf16.msra.mxu0 0
        %2331 = vmatpush.bf16.msra.mxu0 %v2233
        %2332 = vmatmul.bf16.gmra.mxu0 %v2182
        %v2333 = vpop.f32.mrf.mxu0
        %v2334 = vadd.f32 0.0, %v2333
        %v2335 = vpop.f32.mrf.mxu0
        %v2336 = vadd.f32 0.0, %v2335
        %2337 = vmatmul.bf16.gmra.mxu0 %v2185
        %v2338 = vpop.f32.mrf.mxu0
        %v2339 = vadd.f32 0.0, %v2338
        %v2340 = vpop.f32.mrf.mxu0
        %v2341 = vadd.f32 0.0, %v2340
        %2342 = vmatmul.bf16.gmra.mxu0 %v2188
        %v2343 = vpop.f32.mrf.mxu0
        %v2344 = vadd.f32 0.0, %v2343
        %v2345 = vpop.f32.mrf.mxu0
        %v2346 = vadd.f32 0.0, %v2345
        %2347 = vmatmul.bf16.gmra.mxu0 %v2191
        %v2348 = vpop.f32.mrf.mxu0
        %v2349 = vadd.f32 0.0, %v2348
        %v2350 = vpop.f32.mrf.mxu0
        %v2351 = vadd.f32 0.0, %v2350
        %2352 = vmatmul.bf16.gmra.mxu0 %v2194
        %v2353 = vpop.f32.mrf.mxu0
        %v2354 = vadd.f32 0.0, %v2353
        %v2355 = vpop.f32.mrf.mxu0
        %v2356 = vadd.f32 0.0, %v2355
        %2357 = vmatmul.bf16.gmra.mxu0 %v2197
        %v2358 = vpop.f32.mrf.mxu0
        %v2359 = vadd.f32 0.0, %v2358
        %v2360 = vpop.f32.mrf.mxu0
        %v2361 = vadd.f32 0.0, %v2360
        %2362 = vmatmul.bf16.gmra.mxu0 %v2200
        %v2363 = vpop.f32.mrf.mxu0
        %v2364 = vadd.f32 0.0, %v2363
        %v2365 = vpop.f32.mrf.mxu0
        %v2366 = vadd.f32 0.0, %v2365
        %2367 = vmatmul.bf16.gmra.mxu0 %v2203
        %v2368 = vpop.f32.mrf.mxu0
        %v2369 = vadd.f32 0.0, %v2368
        %v2370 = vpop.f32.mrf.mxu0
        %v2371 = vadd.f32 0.0, %v2370
        %2372 = vmatmul.bf16.gmra.mxu0 %v2206
        %v2373 = vpop.f32.mrf.mxu0
        %v2374 = vadd.f32 0.0, %v2373
        %v2375 = vpop.f32.mrf.mxu0
        %v2376 = vadd.f32 0.0, %v2375
        %2377 = vmatmul.bf16.gmra.mxu0 %v2209
        %v2378 = vpop.f32.mrf.mxu0
        %v2379 = vadd.f32 0.0, %v2378
        %v2380 = vpop.f32.mrf.mxu0
        %v2381 = vadd.f32 0.0, %v2380
        %2382 = vmatmul.bf16.gmra.mxu0 %v2212
        %v2383 = vpop.f32.mrf.mxu0
        %v2384 = vadd.f32 0.0, %v2383
        %v2385 = vpop.f32.mrf.mxu0
        %v2386 = vadd.f32 0.0, %v2385
        %2387 = vmatmul.bf16.gmra.mxu0 %v2215
        %v2388 = vpop.f32.mrf.mxu0
        %v2389 = vadd.f32 0.0, %v2388
        %v2390 = vpop.f32.mrf.mxu0
        %v2391 = vadd.f32 0.0, %v2390
        %2392 = vmatmul.bf16.gmra.mxu0 %v2218
        %v2393 = vpop.f32.mrf.mxu0
        %v2394 = vadd.f32 0.0, %v2393
        %v2395 = vpop.f32.mrf.mxu0
        %v2396 = vadd.f32 0.0, %v2395
        %2397 = vmatmul.bf16.gmra.mxu0 %v2221
        %v2398 = vpop.f32.mrf.mxu0
        %v2399 = vadd.f32 0.0, %v2398
        %v2400 = vpop.f32.mrf.mxu0
        %v2401 = vadd.f32 0.0, %v2400
        %2402 = vmatmul.bf16.gmra.mxu0 %v2224
        %v2403 = vpop.f32.mrf.mxu0
        %v2404 = vadd.f32 0.0, %v2403
        %v2405 = vpop.f32.mrf.mxu0
        %v2406 = vadd.f32 0.0, %v2405
        %2407 = vmatmul.bf16.gmra.mxu0 %v2227
        %v2408 = vpop.f32.mrf.mxu0
        %v2409 = vadd.f32 0.0, %v2408
        %v2410 = vpop.f32.mrf.mxu0
        %v2411 = vadd.f32 0.0, %v2410
        %2412 = vdwg.mxu0
        %v2413 = vmax.f32 %v2245, %v2250
        %v2414 = vmax.f32 %v2247, %v2252
        %v2415 = vmax.f32 %v2413, %v2255
        %v2416 = vmax.f32 %v2414, %v2257
        %v2417 = vmax.f32 %v2415, %v2260
        %v2418 = vmax.f32 %v2416, %v2262
        %v2419 = vmax.f32 %v2417, %v2265
        %v2420 = vmax.f32 %v2418, %v2267
        %v2421 = vmax.f32 %v2419, %v2270
        %v2422 = vmax.f32 %v2420, %v2272
        %v2423 = vmax.f32 %v2421, %v2275
        %v2424 = vmax.f32 %v2422, %v2277
        %v2425 = vmax.f32 %v2423, %v2280
        %v2426 = vmax.f32 %v2424, %v2282
        %v2427 = vmax.f32 %v2425, %v2285
        %v2428 = vmax.f32 %v2426, %v2287
        %v2429 = vmax.f32 %v2427, %v2290
        %v2430 = vmax.f32 %v2428, %v2292
        %v2431 = vmax.f32 %v2429, %v2295
        %v2432 = vmax.f32 %v2430, %v2297
        %v2433 = vmax.f32 %v2431, %v2300
        %v2434 = vmax.f32 %v2432, %v2302
        %v2435 = vmax.f32 %v2433, %v2305
        %v2436 = vmax.f32 %v2434, %v2307
        %v2437 = vmax.f32 %v2435, %v2310
        %v2438 = vmax.f32 %v2436, %v2312
        %v2439 = vmax.f32 %v2437, %v2315
        %v2440 = vmax.f32 %v2438, %v2317
        %v2441 = vmax.f32 %v2439, %v2320
        %v2442 = vmax.f32 %v2440, %v2322
        %v2443 = vmax.f32 %v2441, %v2442
        %v2444 = vrot.slane %v2443, 4
        %v2445 = vmax.f32 %v2443, %v2444
        %v2446 = vrot.slane %v2445, 2
        %v2447 = vmax.f32 %v2445, %v2446
        %v2448 = vrot.slane %v2447, 1
        %v2449 = vmax.f32 %v2447, %v2448
        %v2450 = vmax.f32 %v2334, %v2339
        %v2451 = vmax.f32 %v2336, %v2341
        %v2452 = vmax.f32 %v2450, %v2344
        %v2453 = vmax.f32 %v2451, %v2346
        %v2454 = vmax.f32 %v2452, %v2349
        %v2455 = vmax.f32 %v2453, %v2351
        %v2456 = vmax.f32 %v2454, %v2354
        %v2457 = vmax.f32 %v2455, %v2356
        %v2458 = vmax.f32 %v2456, %v2359
        %v2459 = vmax.f32 %v2457, %v2361
        %v2460 = vmax.f32 %v2458, %v2364
        %v2461 = vmax.f32 %v2459, %v2366
        %v2462 = vmax.f32 %v2460, %v2369
        %v2463 = vmax.f32 %v2461, %v2371
        %v2464 = vmax.f32 %v2462, %v2374
        %v2465 = vmax.f32 %v2463, %v2376
        %v2466 = vmax.f32 %v2464, %v2379
        %v2467 = vmax.f32 %v2465, %v2381
        %v2468 = vmax.f32 %v2466, %v2384
        %v2469 = vmax.f32 %v2467, %v2386
        %v2470 = vmax.f32 %v2468, %v2389
        %v2471 = vmax.f32 %v2469, %v2391
        %v2472 = vmax.f32 %v2470, %v2394
        %v2473 = vmax.f32 %v2471, %v2396
        %v2474 = vmax.f32 %v2472, %v2399
        %v2475 = vmax.f32 %v2473, %v2401
        %v2476 = vmax.f32 %v2474, %v2404
        %v2477 = vmax.f32 %v2475, %v2406
        %v2478 = vmax.f32 %v2476, %v2409
        %v2479 = vmax.f32 %v2477, %v2411
        %v2480 = vmax.f32 %v2478, %v2479
        %v2481 = vrot.slane %v2480, 4
        %v2482 = vmax.f32 %v2480, %v2481
        %v2483 = vrot.slane %v2482, 2
        %v2484 = vmax.f32 %v2482, %v2483
        %v2485 = vrot.slane %v2484, 1
        %v2486 = vmax.f32 %v2484, %v2485
        %v2487 = vsub.f32 %v2245, %v2449
        %v2488 = vsub.f32 %v2334, %v2486
        %v2489 = vsub.f32 %v2247, %v2449
        %v2490 = vsub.f32 %v2336, %v2486
        %v2491 = vsub.f32 %v2250, %v2449
        %v2492 = vsub.f32 %v2339, %v2486
        %v2493 = vsub.f32 %v2252, %v2449
        %v2494 = vsub.f32 %v2341, %v2486
        %v2495 = vsub.f32 %v2255, %v2449
        %v2496 = vsub.f32 %v2344, %v2486
        %v2497 = vsub.f32 %v2257, %v2449
        %v2498 = vsub.f32 %v2346, %v2486
        %v2499 = vsub.f32 %v2260, %v2449
        %v2500 = vsub.f32 %v2349, %v2486
        %v2501 = vsub.f32 %v2262, %v2449
        %v2502 = vsub.f32 %v2351, %v2486
        %v2503 = vsub.f32 %v2265, %v2449
        %v2504 = vsub.f32 %v2354, %v2486
        %v2505 = vsub.f32 %v2267, %v2449
        %v2506 = vsub.f32 %v2356, %v2486
        %v2507 = vsub.f32 %v2270, %v2449
        %v2508 = vsub.f32 %v2359, %v2486
        %v2509 = vsub.f32 %v2272, %v2449
        %v2510 = vsub.f32 %v2361, %v2486
        %v2511 = vsub.f32 %v2275, %v2449
        %v2512 = vsub.f32 %v2364, %v2486
        %v2513 = vsub.f32 %v2277, %v2449
        %v2514 = vsub.f32 %v2366, %v2486
        %v2515 = vsub.f32 %v2280, %v2449
        %v2516 = vsub.f32 %v2369, %v2486
        %v2517 = vsub.f32 %v2282, %v2449
        %v2518 = vsub.f32 %v2371, %v2486
        %v2519 = vsub.f32 %v2285, %v2449
        %v2520 = vsub.f32 %v2374, %v2486
        %v2521 = vsub.f32 %v2287, %v2449
        %v2522 = vsub.f32 %v2376, %v2486
        %v2523 = vsub.f32 %v2290, %v2449
        %v2524 = vsub.f32 %v2379, %v2486
        %v2525 = vsub.f32 %v2292, %v2449
        %v2526 = vsub.f32 %v2381, %v2486
        %v2527 = vsub.f32 %v2295, %v2449
        %v2528 = vsub.f32 %v2384, %v2486
        %v2529 = vsub.f32 %v2297, %v2449
        %v2530 = vsub.f32 %v2386, %v2486
        %v2531 = vsub.f32 %v2300, %v2449
        %v2532 = vsub.f32 %v2389, %v2486
        %v2533 = vsub.f32 %v2302, %v2449
        %v2534 = vsub.f32 %v2391, %v2486
        %v2535 = vsub.f32 %v2305, %v2449
        %v2536 = vsub.f32 %v2394, %v2486
        %v2537 = vsub.f32 %v2307, %v2449
        %v2538 = vsub.f32 %v2396, %v2486
        %v2539 = vsub.f32 %v2310, %v2449
        %v2540 = vsub.f32 %v2399, %v2486
        %v2541 = vsub.f32 %v2312, %v2449
        %v2542 = vsub.f32 %v2401, %v2486
        %v2543 = vsub.f32 %v2315, %v2449
        %v2544 = vsub.f32 %v2404, %v2486
        %v2545 = vsub.f32 %v2317, %v2449
        %v2546 = vsub.f32 %v2406, %v2486
        %v2547 = vsub.f32 %v2320, %v2449
        %v2548 = vsub.f32 %v2409, %v2486
        %v2549 = vsub.f32 %v2322, %v2449
        %v2550 = vsub.f32 %v2411, %v2486
        %v2551 = vmul.f32 %v2487, 1.442695
        %v2552 = vpow.pop %v2551
        %v2553 = vmul.f32 %v2488, 1.442695
        %v2554 = vpow.pop %v2553
        %v2555 = vmul.f32 %v2489, 1.442695
        %v2556 = vpow.pop %v2555
        %v2557 = vmul.f32 %v2490, 1.442695
        %v2558 = vpow.pop %v2557
        %v2559 = vmul.f32 %v2491, 1.442695
        %v2560 = vpow.pop %v2559
        %v2561 = vmul.f32 %v2492, 1.442695
        %v2562 = vpow.pop %v2561
        %v2563 = vmul.f32 %v2493, 1.442695
        %v2564 = vpow.pop %v2563
        %v2565 = vmul.f32 %v2494, 1.442695
        %v2566 = vpow.pop %v2565
        %v2567 = vmul.f32 %v2495, 1.442695
        %v2568 = vpow.pop %v2567
        %v2569 = vmul.f32 %v2496, 1.442695
        %v2570 = vpow.pop %v2569
        %v2571 = vmul.f32 %v2497, 1.442695
        %v2572 = vpow.pop %v2571
        %v2573 = vmul.f32 %v2498, 1.442695
        %v2574 = vpow.pop %v2573
        %v2575 = vmul.f32 %v2499, 1.442695
        %v2576 = vpow.pop %v2575
        %v2577 = vmul.f32 %v2500, 1.442695
        %v2578 = vpow.pop %v2577
        %v2579 = vmul.f32 %v2501, 1.442695
        %v2580 = vpow.pop %v2579
        %v2581 = vmul.f32 %v2502, 1.442695
        %v2582 = vpow.pop %v2581
        %v2583 = vmul.f32 %v2503, 1.442695
        %v2584 = vpow.pop %v2583
        %v2585 = vmul.f32 %v2504, 1.442695
        %v2586 = vpow.pop %v2585
        %v2587 = vmul.f32 %v2505, 1.442695
        %v2588 = vpow.pop %v2587
        %v2589 = vmul.f32 %v2506, 1.442695
        %v2590 = vpow.pop %v2589
        %v2591 = vmul.f32 %v2507, 1.442695
        %v2592 = vpow.pop %v2591
        %v2593 = vmul.f32 %v2508, 1.442695
        %v2594 = vpow.pop %v2593
        %v2595 = vmul.f32 %v2509, 1.442695
        %v2596 = vpow.pop %v2595
        %v2597 = vmul.f32 %v2510, 1.442695
        %v2598 = vpow.pop %v2597
        %v2599 = vmul.f32 %v2511, 1.442695
        %v2600 = vpow.pop %v2599
        %v2601 = vmul.f32 %v2512, 1.442695
        %v2602 = vpow.pop %v2601
        %v2603 = vmul.f32 %v2513, 1.442695
        %v2604 = vpow.pop %v2603
        %v2605 = vmul.f32 %v2514, 1.442695
        %v2606 = vpow.pop %v2605
        %v2607 = vmul.f32 %v2515, 1.442695
        %v2608 = vpow.pop %v2607
        %v2609 = vmul.f32 %v2516, 1.442695
        %v2610 = vpow.pop %v2609
        %v2611 = vmul.f32 %v2517, 1.442695
        %v2612 = vpow.pop %v2611
        %v2613 = vmul.f32 %v2518, 1.442695
        %v2614 = vpow.pop %v2613
        %v2615 = vmul.f32 %v2519, 1.442695
        %v2616 = vpow.pop %v2615
        %v2617 = vmul.f32 %v2520, 1.442695
        %v2618 = vpow.pop %v2617
        %v2619 = vmul.f32 %v2521, 1.442695
        %v2620 = vpow.pop %v2619
        %v2621 = vmul.f32 %v2522, 1.442695
        %v2622 = vpow.pop %v2621
        %v2623 = vmul.f32 %v2523, 1.442695
        %v2624 = vpow.pop %v2623
        %v2625 = vmul.f32 %v2524, 1.442695
        %v2626 = vpow.pop %v2625
        %v2627 = vmul.f32 %v2525, 1.442695
        %v2628 = vpow.pop %v2627
        %v2629 = vmul.f32 %v2526, 1.442695
        %v2630 = vpow.pop %v2629
        %v2631 = vmul.f32 %v2527, 1.442695
        %v2632 = vpow.pop %v2631
        %v2633 = vmul.f32 %v2528, 1.442695
        %v2634 = vpow.pop %v2633
        %v2635 = vmul.f32 %v2529, 1.442695
        %v2636 = vpow.pop %v2635
        %v2637 = vmul.f32 %v2530, 1.442695
        %v2638 = vpow.pop %v2637
        %v2639 = vmul.f32 %v2531, 1.442695
        %v2640 = vpow.pop %v2639
        %v2641 = vmul.f32 %v2532, 1.442695
        %v2642 = vpow.pop %v2641
        %v2643 = vmul.f32 %v2533, 1.442695
        %v2644 = vpow.pop %v2643
        %v2645 = vmul.f32 %v2534, 1.442695
        %v2646 = vpow.pop %v2645
        %v2647 = vmul.f32 %v2535, 1.442695
        %v2648 = vpow.pop %v2647
        %v2649 = vmul.f32 %v2536, 1.442695
        %v2650 = vpow.pop %v2649
        %v2651 = vmul.f32 %v2537, 1.442695
        %v2652 = vpow.pop %v2651
        %v2653 = vmul.f32 %v2538, 1.442695
        %v2654 = vpow.pop %v2653
        %v2655 = vmul.f32 %v2539, 1.442695
        %v2656 = vpow.pop %v2655
        %v2657 = vmul.f32 %v2540, 1.442695
        %v2658 = vpow.pop %v2657
        %v2659 = vmul.f32 %v2541, 1.442695
        %v2660 = vpow.pop %v2659
        %v2661 = vmul.f32 %v2542, 1.442695
        %v2662 = vpow.pop %v2661
        %v2663 = vmul.f32 %v2543, 1.442695
        %v2664 = vpow.pop %v2663
        %v2665 = vmul.f32 %v2544, 1.442695
        %v2666 = vpow.pop %v2665
        %v2667 = vmul.f32 %v2545, 1.442695
        %v2668 = vpow.pop %v2667
        %v2669 = vmul.f32 %v2546, 1.442695
        %v2670 = vpow.pop %v2669
        %v2671 = vmul.f32 %v2547, 1.442695
        %v2672 = vpow.pop %v2671
        %v2673 = vmul.f32 %v2548, 1.442695
        %v2674 = vpow.pop %v2673
        %v2675 = vmul.f32 %v2549, 1.442695
        %v2676 = vpow.pop %v2675
        %v2677 = vmul.f32 %v2550, 1.442695
        %v2678 = vpow.pop %v2677
        %v2679 = vadd.f32 %v2552, %v2556
        %v2680 = vadd.f32 %v2679, %v2560
        %v2681 = vadd.f32 %v2680, %v2564
        %v2682 = vadd.f32 %v2681, %v2568
        %v2683 = vadd.f32 %v2682, %v2572
        %v2684 = vadd.f32 %v2683, %v2576
        %v2685 = vadd.f32 %v2684, %v2580
        %v2686 = vadd.f32 %v2685, %v2584
        %v2687 = vadd.f32 %v2686, %v2588
        %v2688 = vadd.f32 %v2687, %v2592
        %v2689 = vadd.f32 %v2688, %v2596
        %v2690 = vadd.f32 %v2689, %v2600
        %v2691 = vadd.f32 %v2690, %v2604
        %v2692 = vadd.f32 %v2691, %v2608
        %v2693 = vadd.f32 %v2692, %v2612
        %v2694 = vadd.f32 %v2693, %v2616
        %v2695 = vadd.f32 %v2694, %v2620
        %v2696 = vadd.f32 %v2695, %v2624
        %v2697 = vadd.f32 %v2696, %v2628
        %v2698 = vadd.f32 %v2697, %v2632
        %v2699 = vadd.f32 %v2698, %v2636
        %v2700 = vadd.f32 %v2699, %v2640
        %v2701 = vadd.f32 %v2700, %v2644
        %v2702 = vadd.f32 %v2701, %v2648
        %v2703 = vadd.f32 %v2702, %v2652
        %v2704 = vadd.f32 %v2703, %v2656
        %v2705 = vadd.f32 %v2704, %v2660
        %v2706 = vadd.f32 %v2705, %v2664
        %v2707 = vadd.f32 %v2706, %v2668
        %v2708 = vadd.f32 %v2707, %v2672
        %v2709 = vadd.f32 %v2708, %v2676
        %v2710 = vrot.slane %v2709, 4
        %v2711 = vadd.f32 %v2709, %v2710
        %v2712 = vrot.slane %v2711, 2
        %v2713 = vadd.f32 %v2711, %v2712
        %v2714 = vrot.slane %v2713, 1
        %v2715 = vadd.f32 %v2713, %v2714
        %v2716 = vadd.f32 %v2554, %v2558
        %v2717 = vadd.f32 %v2716, %v2562
        %v2718 = vadd.f32 %v2717, %v2566
        %v2719 = vadd.f32 %v2718, %v2570
        %v2720 = vadd.f32 %v2719, %v2574
        %v2721 = vadd.f32 %v2720, %v2578
        %v2722 = vadd.f32 %v2721, %v2582
        %v2723 = vadd.f32 %v2722, %v2586
        %v2724 = vadd.f32 %v2723, %v2590
        %v2725 = vadd.f32 %v2724, %v2594
        %v2726 = vadd.f32 %v2725, %v2598
        %v2727 = vadd.f32 %v2726, %v2602
        %v2728 = vadd.f32 %v2727, %v2606
        %v2729 = vadd.f32 %v2728, %v2610
        %v2730 = vadd.f32 %v2729, %v2614
        %v2731 = vadd.f32 %v2730, %v2618
        %v2732 = vadd.f32 %v2731, %v2622
        %v2733 = vadd.f32 %v2732, %v2626
        %v2734 = vadd.f32 %v2733, %v2630
        %v2735 = vadd.f32 %v2734, %v2634
        %v2736 = vadd.f32 %v2735, %v2638
        %v2737 = vadd.f32 %v2736, %v2642
        %v2738 = vadd.f32 %v2737, %v2646
        %v2739 = vadd.f32 %v2738, %v2650
        %v2740 = vadd.f32 %v2739, %v2654
        %v2741 = vadd.f32 %v2740, %v2658
        %v2742 = vadd.f32 %v2741, %v2662
        %v2743 = vadd.f32 %v2742, %v2666
        %v2744 = vadd.f32 %v2743, %v2670
        %v2745 = vadd.f32 %v2744, %v2674
        %v2746 = vadd.f32 %v2745, %v2678
        %v2747 = vrot.slane %v2746, 4
        %v2748 = vadd.f32 %v2746, %v2747
        %v2749 = vrot.slane %v2748, 2
        %v2750 = vadd.f32 %v2748, %v2749
        %v2751 = vrot.slane %v2750, 1
        %v2752 = vadd.f32 %v2750, %v2751
        %v2753 = vrcp.pop %v2715
        %v2754 = vrcp.pop %v2752
        %v2755 = vmul.f32 %v2552, %v2753
        %v2756 = vmul.f32 %v2554, %v2754
        %v2757 = vmul.f32 %v2556, %v2753
        %v2758 = vmul.f32 %v2558, %v2754
        %v2759 = vmul.f32 %v2560, %v2753
        %v2760 = vmul.f32 %v2562, %v2754
        %v2761 = vmul.f32 %v2564, %v2753
        %v2762 = vmul.f32 %v2566, %v2754
        %v2763 = vmul.f32 %v2568, %v2753
        %v2764 = vmul.f32 %v2570, %v2754
        %v2765 = vmul.f32 %v2572, %v2753
        %v2766 = vmul.f32 %v2574, %v2754
        %v2767 = vmul.f32 %v2576, %v2753
        %v2768 = vmul.f32 %v2578, %v2754
        %v2769 = vmul.f32 %v2580, %v2753
        %v2770 = vmul.f32 %v2582, %v2754
        %v2771 = vmul.f32 %v2584, %v2753
        %v2772 = vmul.f32 %v2586, %v2754
        %v2773 = vmul.f32 %v2588, %v2753
        %v2774 = vmul.f32 %v2590, %v2754
        %v2775 = vmul.f32 %v2592, %v2753
        %v2776 = vmul.f32 %v2594, %v2754
        %v2777 = vmul.f32 %v2596, %v2753
        %v2778 = vmul.f32 %v2598, %v2754
        %v2779 = vmul.f32 %v2600, %v2753
        %v2780 = vmul.f32 %v2602, %v2754
        %v2781 = vmul.f32 %v2604, %v2753
        %v2782 = vmul.f32 %v2606, %v2754
        %v2783 = vmul.f32 %v2608, %v2753
        %v2784 = vmul.f32 %v2610, %v2754
        %v2785 = vmul.f32 %v2612, %v2753
        %v2786 = vmul.f32 %v2614, %v2754
        %v2787 = vmul.f32 %v2616, %v2753
        %v2788 = vmul.f32 %v2618, %v2754
        %v2789 = vmul.f32 %v2620, %v2753
        %v2790 = vmul.f32 %v2622, %v2754
        %v2791 = vmul.f32 %v2624, %v2753
        %v2792 = vmul.f32 %v2626, %v2754
        %v2793 = vmul.f32 %v2628, %v2753
        %v2794 = vmul.f32 %v2630, %v2754
        %v2795 = vmul.f32 %v2632, %v2753
        %v2796 = vmul.f32 %v2634, %v2754
        %v2797 = vmul.f32 %v2636, %v2753
        %v2798 = vmul.f32 %v2638, %v2754
        %v2799 = vmul.f32 %v2640, %v2753
        %v2800 = vmul.f32 %v2642, %v2754
        %v2801 = vmul.f32 %v2644, %v2753
        %v2802 = vmul.f32 %v2646, %v2754
        %v2803 = vmul.f32 %v2648, %v2753
        %v2804 = vmul.f32 %v2650, %v2754
        %v2805 = vmul.f32 %v2652, %v2753
        %v2806 = vmul.f32 %v2654, %v2754
        %v2807 = vmul.f32 %v2656, %v2753
        %v2808 = vmul.f32 %v2658, %v2754
        %v2809 = vmul.f32 %v2660, %v2753
        %v2810 = vmul.f32 %v2662, %v2754
        %v2811 = vmul.f32 %v2664, %v2753
        %v2812 = vmul.f32 %v2666, %v2754
        %v2813 = vmul.f32 %v2668, %v2753
        %v2814 = vmul.f32 %v2670, %v2754
        %v2815 = vmul.f32 %v2672, %v2753
        %v2816 = vmul.f32 %v2674, %v2754
        %v2817 = vmul.f32 %v2676, %v2753
        %v2818 = vmul.f32 %v2678, %v2754
        %v2819 = vpack.c.bf16 %v2757, %v2755
        %v2820 = vpack.c.bf16 %v2758, %v2756
        %v2821 = vpack.c.bf16 %v2761, %v2759
        %v2822 = vpack.c.bf16 %v2762, %v2760
        %v2823 = vpack.c.bf16 %v2765, %v2763
        %v2824 = vpack.c.bf16 %v2766, %v2764
        %v2825 = vpack.c.bf16 %v2769, %v2767
        %v2826 = vpack.c.bf16 %v2770, %v2768
        %v2827 = vpack.c.bf16 %v2773, %v2771
        %v2828 = vpack.c.bf16 %v2774, %v2772
        %v2829 = vpack.c.bf16 %v2777, %v2775
        %v2830 = vpack.c.bf16 %v2778, %v2776
        %v2831 = vpack.c.bf16 %v2781, %v2779
        %v2832 = vpack.c.bf16 %v2782, %v2780
        %v2833 = vpack.c.bf16 %v2785, %v2783
        %v2834 = vpack.c.bf16 %v2786, %v2784
        %v2835 = vpack.c.bf16 %v2789, %v2787
        %v2836 = vpack.c.bf16 %v2790, %v2788
        %v2837 = vpack.c.bf16 %v2793, %v2791
        %v2838 = vpack.c.bf16 %v2794, %v2792
        %v2839 = vpack.c.bf16 %v2797, %v2795
        %v2840 = vpack.c.bf16 %v2798, %v2796
        %v2841 = vpack.c.bf16 %v2801, %v2799
        %v2842 = vpack.c.bf16 %v2802, %v2800
        %v2843 = vpack.c.bf16 %v2805, %v2803
        %v2844 = vpack.c.bf16 %v2806, %v2804
        %v2845 = vpack.c.bf16 %v2809, %v2807
        %v2846 = vpack.c.bf16 %v2810, %v2808
        %v2847 = vpack.c.bf16 %v2813, %v2811
        %v2848 = vpack.c.bf16 %v2814, %v2812
        %v2849 = vpack.c.bf16 %v2817, %v2815
        %v2850 = vpack.c.bf16 %v2818, %v2816
        %2851 = vmatpush.bf16.msra.mxu0 %v2833
        %2852 = vmatpush.bf16.msra.mxu0 %v2831
        %2853 = vmatpush.bf16.msra.mxu0 %v2829
        %2854 = vmatpush.bf16.msra.mxu0 %v2827
        %2855 = vmatpush.bf16.msra.mxu0 %v2825
        %2856 = vmatpush.bf16.msra.mxu0 %v2823
        %2857 = vmatpush.bf16.msra.mxu0 %v2821
        %2858 = vmatpush.bf16.msra.mxu0 %v2819
        %2859 = vmatmul.bf16.gmra.mxu0 %v1985
        %v2860 = vpop.f32.mrf.mxu0
        %v2861 = vadd.f32 0.0, %v2860
        %v2862 = vpop.f32.mrf.mxu0
        %2863 = vdwg.mxu0
        %2864 = vmatpush.bf16.msra.mxu0 %v2849
        %2865 = vmatpush.bf16.msra.mxu0 %v2847
        %2866 = vmatpush.bf16.msra.mxu0 %v2845
        %2867 = vmatpush.bf16.msra.mxu0 %v2843
        %2868 = vmatpush.bf16.msra.mxu0 %v2841
        %2869 = vmatpush.bf16.msra.mxu0 %v2839
        %2870 = vmatpush.bf16.msra.mxu0 %v2837
        %2871 = vmatpush.bf16.msra.mxu0 %v2835
        %2872 = vmatmul.bf16.gmra.mxu0 %v1986
        %v2873 = vpop.f32.mrf.mxu0
        %v2874 = vadd.f32 %v2861, %v2873
        %v2875 = vpop.f32.mrf.mxu0
        %2876 = vdwg.mxu0
        %2877 = vmatpush.bf16.msra.mxu0 %v2834
        %2878 = vmatpush.bf16.msra.mxu0 %v2832
        %2879 = vmatpush.bf16.msra.mxu0 %v2830
        %2880 = vmatpush.bf16.msra.mxu0 %v2828
        %2881 = vmatpush.bf16.msra.mxu0 %v2826
        %2882 = vmatpush.bf16.msra.mxu0 %v2824
        %2883 = vmatpush.bf16.msra.mxu0 %v2822
        %2884 = vmatpush.bf16.msra.mxu0 %v2820
        %2885 = vmatmul.bf16.gmra.mxu0 %v1985
        %v2886 = vpop.f32.mrf.mxu0
        %v2887 = vadd.f32 0.0, %v2886
        %v2888 = vpop.f32.mrf.mxu0
        %2889 = vdwg.mxu0
        %2890 = vmatpush.bf16.msra.mxu0 %v2850
        %2891 = vmatpush.bf16.msra.mxu0 %v2848
        %2892 = vmatpush.bf16.msra.mxu0 %v2846
        %2893 = vmatpush.bf16.msra.mxu0 %v2844
        %2894 = vmatpush.bf16.msra.mxu0 %v2842
        %2895 = vmatpush.bf16.msra.mxu0 %v2840
        %2896 = vmatpush.bf16.msra.mxu0 %v2838
        %2897 = vmatpush.bf16.msra.mxu0 %v2836
        %2898 = vmatmul.bf16.gmra.mxu0 %v1986
        %v2899 = vpop.f32.mrf.mxu0
        %v2900 = vadd.f32 %v2887, %v2899
        %v2901 = vpop.f32.mrf.mxu0
        %2902 = vdwg.mxu0
        %2903 = vst [vmem:[#allocation3 + $0x10] sm:$0xff] %v2874
        %2904 = vst [vmem:[#allocation3 + $0x18] sm:$0xff] %v2900
        %v2905 = vpack.c.bf16 %v724, %v724
        %v2906 = vpack.c.bf16 %v743, %v743
        %v2907 = vpack.c.bf16 %v782, %v782
        %v2908 = vpack.c.bf16 %v801, %v801
        %v2909 = vpack.c.bf16 %v840, %v840
        %v2910 = vpack.c.bf16 %v859, %v859
        %2911 = vmatpush.bf16.xpose.msra.mxu0 0
        %2912 = vmatpush.bf16.xpose.msra.mxu0 0
        %2913 = vmatpush.bf16.xpose.msra.mxu0 0
        %2914 = vmatpush.bf16.xpose.msra.mxu0 0
        %2915 = vmatpush.bf16.xpose.msra.mxu0 0
        %2916 = vmatpush.bf16.xpose.msra.mxu0 0
        %2917 = vmatpush.bf16.xpose.msra.mxu0 0
        %2918 = vmatpush.bf16.xpose.msra.mxu0 %v2907
        %2919 = vmatmul.bf16.gmra.mxu0 %v997
        %v2920 = vpop.f32.mrf.mxu0
        %v2921 = vadd.f32 0.0, %v2920
        %v2922 = vpop.f32.mrf.mxu0
        %v2923 = vadd.f32 0.0, %v2922
        %2924 = vmatmul.bf16.gmra.mxu0 %v999
        %v2925 = vpop.f32.mrf.mxu0
        %v2926 = vadd.f32 0.0, %v2925
        %v2927 = vpop.f32.mrf.mxu0
        %v2928 = vadd.f32 0.0, %v2927
        %2929 = vmatmul.bf16.gmra.mxu0 %v1001
        %v2930 = vpop.f32.mrf.mxu0
        %v2931 = vadd.f32 0.0, %v2930
        %v2932 = vpop.f32.mrf.mxu0
        %v2933 = vadd.f32 0.0, %v2932
        %2934 = vmatmul.bf16.gmra.mxu0 %v1003
        %v2935 = vpop.f32.mrf.mxu0
        %v2936 = vadd.f32 0.0, %v2935
        %v2937 = vpop.f32.mrf.mxu0
        %v2938 = vadd.f32 0.0, %v2937
        %2939 = vmatmul.bf16.gmra.mxu0 %v1005
        %v2940 = vpop.f32.mrf.mxu0
        %v2941 = vadd.f32 0.0, %v2940
        %v2942 = vpop.f32.mrf.mxu0
        %v2943 = vadd.f32 0.0, %v2942
        %2944 = vmatmul.bf16.gmra.mxu0 %v1007
        %v2945 = vpop.f32.mrf.mxu0
        %v2946 = vadd.f32 0.0, %v2945
        %v2947 = vpop.f32.mrf.mxu0
        %v2948 = vadd.f32 0.0, %v2947
        %2949 = vmatmul.bf16.gmra.mxu0 %v1009
        %v2950 = vpop.f32.mrf.mxu0
        %v2951 = vadd.f32 0.0, %v2950
        %v2952 = vpop.f32.mrf.mxu0
        %v2953 = vadd.f32 0.0, %v2952
        %2954 = vmatmul.bf16.gmra.mxu0 %v1011
        %v2955 = vpop.f32.mrf.mxu0
        %v2956 = vadd.f32 0.0, %v2955
        %v2957 = vpop.f32.mrf.mxu0
        %v2958 = vadd.f32 0.0, %v2957
        %2959 = vmatmul.bf16.gmra.mxu0 %v1013
        %v2960 = vpop.f32.mrf.mxu0
        %v2961 = vadd.f32 0.0, %v2960
        %v2962 = vpop.f32.mrf.mxu0
        %v2963 = vadd.f32 0.0, %v2962
        %2964 = vmatmul.bf16.gmra.mxu0 %v1015
        %v2965 = vpop.f32.mrf.mxu0
        %v2966 = vadd.f32 0.0, %v2965
        %v2967 = vpop.f32.mrf.mxu0
        %v2968 = vadd.f32 0.0, %v2967
        %2969 = vmatmul.bf16.gmra.mxu0 %v1017
        %v2970 = vpop.f32.mrf.mxu0
        %v2971 = vadd.f32 0.0, %v2970
        %v2972 = vpop.f32.mrf.mxu0
        %v2973 = vadd.f32 0.0, %v2972
        %2974 = vmatmul.bf16.gmra.mxu0 %v1019
        %v2975 = vpop.f32.mrf.mxu0
        %v2976 = vadd.f32 0.0, %v2975
        %v2977 = vpop.f32.mrf.mxu0
        %v2978 = vadd.f32 0.0, %v2977
        %2979 = vmatmul.bf16.gmra.mxu0 %v1021
        %v2980 = vpop.f32.mrf.mxu0
        %v2981 = vadd.f32 0.0, %v2980
        %v2982 = vpop.f32.mrf.mxu0
        %v2983 = vadd.f32 0.0, %v2982
        %2984 = vmatmul.bf16.gmra.mxu0 %v1023
        %v2985 = vpop.f32.mrf.mxu0
        %v2986 = vadd.f32 0.0, %v2985
        %v2987 = vpop.f32.mrf.mxu0
        %v2988 = vadd.f32 0.0, %v2987
        %2989 = vmatmul.bf16.gmra.mxu0 %v1025
        %v2990 = vpop.f32.mrf.mxu0
        %v2991 = vadd.f32 0.0, %v2990
        %v2992 = vpop.f32.mrf.mxu0
        %v2993 = vadd.f32 0.0, %v2992
        %2994 = vmatmul.bf16.gmra.mxu0 %v1027
        %v2995 = vpop.f32.mrf.mxu0
        %v2996 = vadd.f32 0.0, %v2995
        %v2997 = vpop.f32.mrf.mxu0
        %v2998 = vadd.f32 0.0, %v2997
        %2999 = vdwg.mxu0
        %3000 = vmatpush.bf16.xpose.msra.mxu0 0
        %3001 = vmatpush.bf16.xpose.msra.mxu0 0
        %3002 = vmatpush.bf16.xpose.msra.mxu0 0
        %3003 = vmatpush.bf16.xpose.msra.mxu0 0
        %3004 = vmatpush.bf16.xpose.msra.mxu0 0
        %3005 = vmatpush.bf16.xpose.msra.mxu0 0
        %3006 = vmatpush.bf16.xpose.msra.mxu0 0
        %3007 = vmatpush.bf16.xpose.msra.mxu0 %v2908
        %3008 = vmatmul.bf16.gmra.mxu0 %v998
        %v3009 = vpop.f32.mrf.mxu0
        %v3010 = vadd.f32 %v2921, %v3009
        %v3011 = vpop.f32.mrf.mxu0
        %v3012 = vadd.f32 %v2923, %v3011
        %3013 = vmatmul.bf16.gmra.mxu0 %v1000
        %v3014 = vpop.f32.mrf.mxu0
        %v3015 = vadd.f32 %v2926, %v3014
        %v3016 = vpop.f32.mrf.mxu0
        %v3017 = vadd.f32 %v2928, %v3016
        %3018 = vmatmul.bf16.gmra.mxu0 %v1002
        %v3019 = vpop.f32.mrf.mxu0
        %v3020 = vadd.f32 %v2931, %v3019
        %v3021 = vpop.f32.mrf.mxu0
        %v3022 = vadd.f32 %v2933, %v3021
        %3023 = vmatmul.bf16.gmra.mxu0 %v1004
        %v3024 = vpop.f32.mrf.mxu0
        %v3025 = vadd.f32 %v2936, %v3024
        %v3026 = vpop.f32.mrf.mxu0
        %v3027 = vadd.f32 %v2938, %v3026
        %3028 = vmatmul.bf16.gmra.mxu0 %v1006
        %v3029 = vpop.f32.mrf.mxu0
        %v3030 = vadd.f32 %v2941, %v3029
        %v3031 = vpop.f32.mrf.mxu0
        %v3032 = vadd.f32 %v2943, %v3031
        %3033 = vmatmul.bf16.gmra.mxu0 %v1008
        %v3034 = vpop.f32.mrf.mxu0
        %v3035 = vadd.f32 %v2946, %v3034
        %v3036 = vpop.f32.mrf.mxu0
        %v3037 = vadd.f32 %v2948, %v3036
        %3038 = vmatmul.bf16.gmra.mxu0 %v1010
        %v3039 = vpop.f32.mrf.mxu0
        %v3040 = vadd.f32 %v2951, %v3039
        %v3041 = vpop.f32.mrf.mxu0
        %v3042 = vadd.f32 %v2953, %v3041
        %3043 = vmatmul.bf16.gmra.mxu0 %v1012
        %v3044 = vpop.f32.mrf.mxu0
        %v3045 = vadd.f32 %v2956, %v3044
        %v3046 = vpop.f32.mrf.mxu0
        %v3047 = vadd.f32 %v2958, %v3046
        %3048 = vmatmul.bf16.gmra.mxu0 %v1014
        %v3049 = vpop.f32.mrf.mxu0
        %v3050 = vadd.f32 %v2961, %v3049
        %v3051 = vpop.f32.mrf.mxu0
        %v3052 = vadd.f32 %v2963, %v3051
        %3053 = vmatmul.bf16.gmra.mxu0 %v1016
        %v3054 = vpop.f32.mrf.mxu0
        %v3055 = vadd.f32 %v2966, %v3054
        %v3056 = vpop.f32.mrf.mxu0
        %v3057 = vadd.f32 %v2968, %v3056
        %3058 = vmatmul.bf16.gmra.mxu0 %v1018
        %v3059 = vpop.f32.mrf.mxu0
        %v3060 = vadd.f32 %v2971, %v3059
        %v3061 = vpop.f32.mrf.mxu0
        %v3062 = vadd.f32 %v2973, %v3061
        %3063 = vmatmul.bf16.gmra.mxu0 %v1020
        %v3064 = vpop.f32.mrf.mxu0
        %v3065 = vadd.f32 %v2976, %v3064
        %v3066 = vpop.f32.mrf.mxu0
        %v3067 = vadd.f32 %v2978, %v3066
        %3068 = vmatmul.bf16.gmra.mxu0 %v1022
        %v3069 = vpop.f32.mrf.mxu0
        %v3070 = vadd.f32 %v2981, %v3069
        %v3071 = vpop.f32.mrf.mxu0
        %v3072 = vadd.f32 %v2983, %v3071
        %3073 = vmatmul.bf16.gmra.mxu0 %v1024
        %v3074 = vpop.f32.mrf.mxu0
        %v3075 = vadd.f32 %v2986, %v3074
        %v3076 = vpop.f32.mrf.mxu0
        %v3077 = vadd.f32 %v2988, %v3076
        %3078 = vmatmul.bf16.gmra.mxu0 %v1026
        %v3079 = vpop.f32.mrf.mxu0
        %v3080 = vadd.f32 %v2991, %v3079
        %v3081 = vpop.f32.mrf.mxu0
        %v3082 = vadd.f32 %v2993, %v3081
        %3083 = vmatmul.bf16.gmra.mxu0 %v1028
        %v3084 = vpop.f32.mrf.mxu0
        %v3085 = vadd.f32 %v2996, %v3084
        %v3086 = vpop.f32.mrf.mxu0
        %v3087 = vadd.f32 %v2998, %v3086
        %3088 = vdwg.mxu0
        %v3089 = vpack.c.bf16 %v3012, %v3010
        %v3090 = vpack.c.bf16 %v3017, %v3015
        %v3091 = vpack.c.bf16 %v3022, %v3020
        %v3092 = vpack.c.bf16 %v3027, %v3025
        %v3093 = vpack.c.bf16 %v3032, %v3030
        %v3094 = vpack.c.bf16 %v3037, %v3035
        %v3095 = vpack.c.bf16 %v3042, %v3040
        %v3096 = vpack.c.bf16 %v3047, %v3045
        %v3097 = vpack.c.bf16 %v3052, %v3050
        %v3098 = vpack.c.bf16 %v3057, %v3055
        %v3099 = vpack.c.bf16 %v3062, %v3060
        %v3100 = vpack.c.bf16 %v3067, %v3065
        %v3101 = vpack.c.bf16 %v3072, %v3070
        %v3102 = vpack.c.bf16 %v3077, %v3075
        %v3103 = vpack.c.bf16 %v3082, %v3080
        %v3104 = vpack.c.bf16 %v3087, %v3085
        %v3106 = vsel %vm1255, %v3089, 0
        %v3109 = vsel %vm1255, %v3090, 0
        %v3112 = vsel %vm1255, %v3091, 0
        %v3115 = vsel %vm1255, %v3092, 0
        %v3118 = vsel %vm1255, %v3093, 0
        %v3121 = vsel %vm1255, %v3094, 0
        %v3124 = vsel %vm1255, %v3095, 0
        %v3127 = vsel %vm1255, %v3096, 0
        %v3130 = vsel %vm1255, %v3097, 0
        %v3133 = vsel %vm1255, %v3098, 0
        %v3136 = vsel %vm1255, %v3099, 0
        %v3139 = vsel %vm1255, %v3100, 0
        %v3142 = vsel %vm1255, %v3101, 0
        %v3145 = vsel %vm1255, %v3102, 0
        %v3148 = vsel %vm1255, %v3103, 0
        %v3151 = vsel %vm1255, %v3104, 0
        %v3154 = vsel %vm1304, %v2905, 0
        %v3157 = vsel %vm1304, %v2906, 0
        %3159 = vmatpush.bf16.msra.mxu0 0
        %3160 = vmatpush.bf16.msra.mxu0 0
        %3161 = vmatpush.bf16.msra.mxu0 0
        %3162 = vmatpush.bf16.msra.mxu0 0
        %3163 = vmatpush.bf16.msra.mxu0 0
        %3164 = vmatpush.bf16.msra.mxu0 0
        %3165 = vmatpush.bf16.msra.mxu0 0
        %3166 = vmatpush.bf16.msra.mxu0 %v3154
        %3167 = vmatmul.bf16.gmra.mxu0 %v3106
        %v3168 = vpop.f32.mrf.mxu0
        %v3169 = vadd.f32 0.0, %v3168
        %v3170 = vpop.f32.mrf.mxu0
        %v3171 = vadd.f32 0.0, %v3170
        %3172 = vmatmul.bf16.gmra.mxu0 %v3109
        %v3173 = vpop.f32.mrf.mxu0
        %v3174 = vadd.f32 0.0, %v3173
        %v3175 = vpop.f32.mrf.mxu0
        %v3176 = vadd.f32 0.0, %v3175
        %3177 = vmatmul.bf16.gmra.mxu0 %v3112
        %v3178 = vpop.f32.mrf.mxu0
        %v3179 = vadd.f32 0.0, %v3178
        %v3180 = vpop.f32.mrf.mxu0
        %v3181 = vadd.f32 0.0, %v3180
        %3182 = vmatmul.bf16.gmra.mxu0 %v3115
        %v3183 = vpop.f32.mrf.mxu0
        %v3184 = vadd.f32 0.0, %v3183
        %v3185 = vpop.f32.mrf.mxu0
        %v3186 = vadd.f32 0.0, %v3185
        %3187 = vmatmul.bf16.gmra.mxu0 %v3118
        %v3188 = vpop.f32.mrf.mxu0
        %v3189 = vadd.f32 0.0, %v3188
        %v3190 = vpop.f32.mrf.mxu0
        %v3191 = vadd.f32 0.0, %v3190
        %3192 = vmatmul.bf16.gmra.mxu0 %v3121
        %v3193 = vpop.f32.mrf.mxu0
        %v3194 = vadd.f32 0.0, %v3193
        %v3195 = vpop.f32.mrf.mxu0
        %v3196 = vadd.f32 0.0, %v3195
        %3197 = vmatmul.bf16.gmra.mxu0 %v3124
        %v3198 = vpop.f32.mrf.mxu0
        %v3199 = vadd.f32 0.0, %v3198
        %v3200 = vpop.f32.mrf.mxu0
        %v3201 = vadd.f32 0.0, %v3200
        %3202 = vmatmul.bf16.gmra.mxu0 %v3127
        %v3203 = vpop.f32.mrf.mxu0
        %v3204 = vadd.f32 0.0, %v3203
        %v3205 = vpop.f32.mrf.mxu0
        %v3206 = vadd.f32 0.0, %v3205
        %3207 = vmatmul.bf16.gmra.mxu0 %v3130
        %v3208 = vpop.f32.mrf.mxu0
        %v3209 = vadd.f32 0.0, %v3208
        %v3210 = vpop.f32.mrf.mxu0
        %v3211 = vadd.f32 0.0, %v3210
        %3212 = vmatmul.bf16.gmra.mxu0 %v3133
        %v3213 = vpop.f32.mrf.mxu0
        %v3214 = vadd.f32 0.0, %v3213
        %v3215 = vpop.f32.mrf.mxu0
        %v3216 = vadd.f32 0.0, %v3215
        %3217 = vmatmul.bf16.gmra.mxu0 %v3136
        %v3218 = vpop.f32.mrf.mxu0
        %v3219 = vadd.f32 0.0, %v3218
        %v3220 = vpop.f32.mrf.mxu0
        %v3221 = vadd.f32 0.0, %v3220
        %3222 = vmatmul.bf16.gmra.mxu0 %v3139
        %v3223 = vpop.f32.mrf.mxu0
        %v3224 = vadd.f32 0.0, %v3223
        %v3225 = vpop.f32.mrf.mxu0
        %v3226 = vadd.f32 0.0, %v3225
        %3227 = vmatmul.bf16.gmra.mxu0 %v3142
        %v3228 = vpop.f32.mrf.mxu0
        %v3229 = vadd.f32 0.0, %v3228
        %v3230 = vpop.f32.mrf.mxu0
        %v3231 = vadd.f32 0.0, %v3230
        %3232 = vmatmul.bf16.gmra.mxu0 %v3145
        %v3233 = vpop.f32.mrf.mxu0
        %v3234 = vadd.f32 0.0, %v3233
        %v3235 = vpop.f32.mrf.mxu0
        %v3236 = vadd.f32 0.0, %v3235
        %3237 = vmatmul.bf16.gmra.mxu0 %v3148
        %v3238 = vpop.f32.mrf.mxu0
        %v3239 = vadd.f32 0.0, %v3238
        %v3240 = vpop.f32.mrf.mxu0
        %v3241 = vadd.f32 0.0, %v3240
        %3242 = vmatmul.bf16.gmra.mxu0 %v3151
        %v3243 = vpop.f32.mrf.mxu0
        %v3244 = vadd.f32 0.0, %v3243
        %v3245 = vpop.f32.mrf.mxu0
        %v3246 = vadd.f32 0.0, %v3245
        %3247 = vdwg.mxu0
        %3248 = vmatpush.bf16.msra.mxu0 0
        %3249 = vmatpush.bf16.msra.mxu0 0
        %3250 = vmatpush.bf16.msra.mxu0 0
        %3251 = vmatpush.bf16.msra.mxu0 0
        %3252 = vmatpush.bf16.msra.mxu0 0
        %3253 = vmatpush.bf16.msra.mxu0 0
        %3254 = vmatpush.bf16.msra.mxu0 0
        %3255 = vmatpush.bf16.msra.mxu0 %v3157
        %3256 = vmatmul.bf16.gmra.mxu0 %v3106
        %v3257 = vpop.f32.mrf.mxu0
        %v3258 = vadd.f32 0.0, %v3257
        %v3259 = vpop.f32.mrf.mxu0
        %v3260 = vadd.f32 0.0, %v3259
        %3261 = vmatmul.bf16.gmra.mxu0 %v3109
        %v3262 = vpop.f32.mrf.mxu0
        %v3263 = vadd.f32 0.0, %v3262
        %v3264 = vpop.f32.mrf.mxu0
        %v3265 = vadd.f32 0.0, %v3264
        %3266 = vmatmul.bf16.gmra.mxu0 %v3112
        %v3267 = vpop.f32.mrf.mxu0
        %v3268 = vadd.f32 0.0, %v3267
        %v3269 = vpop.f32.mrf.mxu0
        %v3270 = vadd.f32 0.0, %v3269
        %3271 = vmatmul.bf16.gmra.mxu0 %v3115
        %v3272 = vpop.f32.mrf.mxu0
        %v3273 = vadd.f32 0.0, %v3272
        %v3274 = vpop.f32.mrf.mxu0
        %v3275 = vadd.f32 0.0, %v3274
        %3276 = vmatmul.bf16.gmra.mxu0 %v3118
        %v3277 = vpop.f32.mrf.mxu0
        %v3278 = vadd.f32 0.0, %v3277
        %v3279 = vpop.f32.mrf.mxu0
        %v3280 = vadd.f32 0.0, %v3279
        %3281 = vmatmul.bf16.gmra.mxu0 %v3121
        %v3282 = vpop.f32.mrf.mxu0
        %v3283 = vadd.f32 0.0, %v3282
        %v3284 = vpop.f32.mrf.mxu0
        %v3285 = vadd.f32 0.0, %v3284
        %3286 = vmatmul.bf16.gmra.mxu0 %v3124
        %v3287 = vpop.f32.mrf.mxu0
        %v3288 = vadd.f32 0.0, %v3287
        %v3289 = vpop.f32.mrf.mxu0
        %v3290 = vadd.f32 0.0, %v3289
        %3291 = vmatmul.bf16.gmra.mxu0 %v3127
        %v3292 = vpop.f32.mrf.mxu0
        %v3293 = vadd.f32 0.0, %v3292
        %v3294 = vpop.f32.mrf.mxu0
        %v3295 = vadd.f32 0.0, %v3294
        %3296 = vmatmul.bf16.gmra.mxu0 %v3130
        %v3297 = vpop.f32.mrf.mxu0
        %v3298 = vadd.f32 0.0, %v3297
        %v3299 = vpop.f32.mrf.mxu0
        %v3300 = vadd.f32 0.0, %v3299
        %3301 = vmatmul.bf16.gmra.mxu0 %v3133
        %v3302 = vpop.f32.mrf.mxu0
        %v3303 = vadd.f32 0.0, %v3302
        %v3304 = vpop.f32.mrf.mxu0
        %v3305 = vadd.f32 0.0, %v3304
        %3306 = vmatmul.bf16.gmra.mxu0 %v3136
        %v3307 = vpop.f32.mrf.mxu0
        %v3308 = vadd.f32 0.0, %v3307
        %v3309 = vpop.f32.mrf.mxu0
        %v3310 = vadd.f32 0.0, %v3309
        %3311 = vmatmul.bf16.gmra.mxu0 %v3139
        %v3312 = vpop.f32.mrf.mxu0
        %v3313 = vadd.f32 0.0, %v3312
        %v3314 = vpop.f32.mrf.mxu0
        %v3315 = vadd.f32 0.0, %v3314
        %3316 = vmatmul.bf16.gmra.mxu0 %v3142
        %v3317 = vpop.f32.mrf.mxu0
        %v3318 = vadd.f32 0.0, %v3317
        %v3319 = vpop.f32.mrf.mxu0
        %v3320 = vadd.f32 0.0, %v3319
        %3321 = vmatmul.bf16.gmra.mxu0 %v3145
        %v3322 = vpop.f32.mrf.mxu0
        %v3323 = vadd.f32 0.0, %v3322
        %v3324 = vpop.f32.mrf.mxu0
        %v3325 = vadd.f32 0.0, %v3324
        %3326 = vmatmul.bf16.gmra.mxu0 %v3148
        %v3327 = vpop.f32.mrf.mxu0
        %v3328 = vadd.f32 0.0, %v3327
        %v3329 = vpop.f32.mrf.mxu0
        %v3330 = vadd.f32 0.0, %v3329
        %3331 = vmatmul.bf16.gmra.mxu0 %v3151
        %v3332 = vpop.f32.mrf.mxu0
        %v3333 = vadd.f32 0.0, %v3332
        %v3334 = vpop.f32.mrf.mxu0
        %v3335 = vadd.f32 0.0, %v3334
        %3336 = vdwg.mxu0
        %v3337 = vmax.f32 %v3169, %v3174
        %v3338 = vmax.f32 %v3171, %v3176
        %v3339 = vmax.f32 %v3337, %v3179
        %v3340 = vmax.f32 %v3338, %v3181
        %v3341 = vmax.f32 %v3339, %v3184
        %v3342 = vmax.f32 %v3340, %v3186
        %v3343 = vmax.f32 %v3341, %v3189
        %v3344 = vmax.f32 %v3342, %v3191
        %v3345 = vmax.f32 %v3343, %v3194
        %v3346 = vmax.f32 %v3344, %v3196
        %v3347 = vmax.f32 %v3345, %v3199
        %v3348 = vmax.f32 %v3346, %v3201
        %v3349 = vmax.f32 %v3347, %v3204
        %v3350 = vmax.f32 %v3348, %v3206
        %v3351 = vmax.f32 %v3349, %v3209
        %v3352 = vmax.f32 %v3350, %v3211
        %v3353 = vmax.f32 %v3351, %v3214
        %v3354 = vmax.f32 %v3352, %v3216
        %v3355 = vmax.f32 %v3353, %v3219
        %v3356 = vmax.f32 %v3354, %v3221
        %v3357 = vmax.f32 %v3355, %v3224
        %v3358 = vmax.f32 %v3356, %v3226
        %v3359 = vmax.f32 %v3357, %v3229
        %v3360 = vmax.f32 %v3358, %v3231
        %v3361 = vmax.f32 %v3359, %v3234
        %v3362 = vmax.f32 %v3360, %v3236
        %v3363 = vmax.f32 %v3361, %v3239
        %v3364 = vmax.f32 %v3362, %v3241
        %v3365 = vmax.f32 %v3363, %v3244
        %v3366 = vmax.f32 %v3364, %v3246
        %v3367 = vmax.f32 %v3365, %v3366
        %v3368 = vrot.slane %v3367, 4
        %v3369 = vmax.f32 %v3367, %v3368
        %v3370 = vrot.slane %v3369, 2
        %v3371 = vmax.f32 %v3369, %v3370
        %v3372 = vrot.slane %v3371, 1
        %v3373 = vmax.f32 %v3371, %v3372
        %v3374 = vmax.f32 %v3258, %v3263
        %v3375 = vmax.f32 %v3260, %v3265
        %v3376 = vmax.f32 %v3374, %v3268
        %v3377 = vmax.f32 %v3375, %v3270
        %v3378 = vmax.f32 %v3376, %v3273
        %v3379 = vmax.f32 %v3377, %v3275
        %v3380 = vmax.f32 %v3378, %v3278
        %v3381 = vmax.f32 %v3379, %v3280
        %v3382 = vmax.f32 %v3380, %v3283
        %v3383 = vmax.f32 %v3381, %v3285
        %v3384 = vmax.f32 %v3382, %v3288
        %v3385 = vmax.f32 %v3383, %v3290
        %v3386 = vmax.f32 %v3384, %v3293
        %v3387 = vmax.f32 %v3385, %v3295
        %v3388 = vmax.f32 %v3386, %v3298
        %v3389 = vmax.f32 %v3387, %v3300
        %v3390 = vmax.f32 %v3388, %v3303
        %v3391 = vmax.f32 %v3389, %v3305
        %v3392 = vmax.f32 %v3390, %v3308
        %v3393 = vmax.f32 %v3391, %v3310
        %v3394 = vmax.f32 %v3392, %v3313
        %v3395 = vmax.f32 %v3393, %v3315
        %v3396 = vmax.f32 %v3394, %v3318
        %v3397 = vmax.f32 %v3395, %v3320
        %v3398 = vmax.f32 %v3396, %v3323
        %v3399 = vmax.f32 %v3397, %v3325
        %v3400 = vmax.f32 %v3398, %v3328
        %v3401 = vmax.f32 %v3399, %v3330
        %v3402 = vmax.f32 %v3400, %v3333
        %v3403 = vmax.f32 %v3401, %v3335
        %v3404 = vmax.f32 %v3402, %v3403
        %v3405 = vrot.slane %v3404, 4
        %v3406 = vmax.f32 %v3404, %v3405
        %v3407 = vrot.slane %v3406, 2
        %v3408 = vmax.f32 %v3406, %v3407
        %v3409 = vrot.slane %v3408, 1
        %v3410 = vmax.f32 %v3408, %v3409
        %v3411 = vsub.f32 %v3169, %v3373
        %v3412 = vsub.f32 %v3258, %v3410
        %v3413 = vsub.f32 %v3171, %v3373
        %v3414 = vsub.f32 %v3260, %v3410
        %v3415 = vsub.f32 %v3174, %v3373
        %v3416 = vsub.f32 %v3263, %v3410
        %v3417 = vsub.f32 %v3176, %v3373
        %v3418 = vsub.f32 %v3265, %v3410
        %v3419 = vsub.f32 %v3179, %v3373
        %v3420 = vsub.f32 %v3268, %v3410
        %v3421 = vsub.f32 %v3181, %v3373
        %v3422 = vsub.f32 %v3270, %v3410
        %v3423 = vsub.f32 %v3184, %v3373
        %v3424 = vsub.f32 %v3273, %v3410
        %v3425 = vsub.f32 %v3186, %v3373
        %v3426 = vsub.f32 %v3275, %v3410
        %v3427 = vsub.f32 %v3189, %v3373
        %v3428 = vsub.f32 %v3278, %v3410
        %v3429 = vsub.f32 %v3191, %v3373
        %v3430 = vsub.f32 %v3280, %v3410
        %v3431 = vsub.f32 %v3194, %v3373
        %v3432 = vsub.f32 %v3283, %v3410
        %v3433 = vsub.f32 %v3196, %v3373
        %v3434 = vsub.f32 %v3285, %v3410
        %v3435 = vsub.f32 %v3199, %v3373
        %v3436 = vsub.f32 %v3288, %v3410
        %v3437 = vsub.f32 %v3201, %v3373
        %v3438 = vsub.f32 %v3290, %v3410
        %v3439 = vsub.f32 %v3204, %v3373
        %v3440 = vsub.f32 %v3293, %v3410
        %v3441 = vsub.f32 %v3206, %v3373
        %v3442 = vsub.f32 %v3295, %v3410
        %v3443 = vsub.f32 %v3209, %v3373
        %v3444 = vsub.f32 %v3298, %v3410
        %v3445 = vsub.f32 %v3211, %v3373
        %v3446 = vsub.f32 %v3300, %v3410
        %v3447 = vsub.f32 %v3214, %v3373
        %v3448 = vsub.f32 %v3303, %v3410
        %v3449 = vsub.f32 %v3216, %v3373
        %v3450 = vsub.f32 %v3305, %v3410
        %v3451 = vsub.f32 %v3219, %v3373
        %v3452 = vsub.f32 %v3308, %v3410
        %v3453 = vsub.f32 %v3221, %v3373
        %v3454 = vsub.f32 %v3310, %v3410
        %v3455 = vsub.f32 %v3224, %v3373
        %v3456 = vsub.f32 %v3313, %v3410
        %v3457 = vsub.f32 %v3226, %v3373
        %v3458 = vsub.f32 %v3315, %v3410
        %v3459 = vsub.f32 %v3229, %v3373
        %v3460 = vsub.f32 %v3318, %v3410
        %v3461 = vsub.f32 %v3231, %v3373
        %v3462 = vsub.f32 %v3320, %v3410
        %v3463 = vsub.f32 %v3234, %v3373
        %v3464 = vsub.f32 %v3323, %v3410
        %v3465 = vsub.f32 %v3236, %v3373
        %v3466 = vsub.f32 %v3325, %v3410
        %v3467 = vsub.f32 %v3239, %v3373
        %v3468 = vsub.f32 %v3328, %v3410
        %v3469 = vsub.f32 %v3241, %v3373
        %v3470 = vsub.f32 %v3330, %v3410
        %v3471 = vsub.f32 %v3244, %v3373
        %v3472 = vsub.f32 %v3333, %v3410
        %v3473 = vsub.f32 %v3246, %v3373
        %v3474 = vsub.f32 %v3335, %v3410
        %v3475 = vmul.f32 %v3411, 1.442695
        %v3476 = vpow.pop %v3475
        %v3477 = vmul.f32 %v3412, 1.442695
        %v3478 = vpow.pop %v3477
        %v3479 = vmul.f32 %v3413, 1.442695
        %v3480 = vpow.pop %v3479
        %v3481 = vmul.f32 %v3414, 1.442695
        %v3482 = vpow.pop %v3481
        %v3483 = vmul.f32 %v3415, 1.442695
        %v3484 = vpow.pop %v3483
        %v3485 = vmul.f32 %v3416, 1.442695
        %v3486 = vpow.pop %v3485
        %v3487 = vmul.f32 %v3417, 1.442695
        %v3488 = vpow.pop %v3487
        %v3489 = vmul.f32 %v3418, 1.442695
        %v3490 = vpow.pop %v3489
        %v3491 = vmul.f32 %v3419, 1.442695
        %v3492 = vpow.pop %v3491
        %v3493 = vmul.f32 %v3420, 1.442695
        %v3494 = vpow.pop %v3493
        %v3495 = vmul.f32 %v3421, 1.442695
        %v3496 = vpow.pop %v3495
        %v3497 = vmul.f32 %v3422, 1.442695
        %v3498 = vpow.pop %v3497
        %v3499 = vmul.f32 %v3423, 1.442695
        %v3500 = vpow.pop %v3499
        %v3501 = vmul.f32 %v3424, 1.442695
        %v3502 = vpow.pop %v3501
        %v3503 = vmul.f32 %v3425, 1.442695
        %v3504 = vpow.pop %v3503
        %v3505 = vmul.f32 %v3426, 1.442695
        %v3506 = vpow.pop %v3505
        %v3507 = vmul.f32 %v3427, 1.442695
        %v3508 = vpow.pop %v3507
        %v3509 = vmul.f32 %v3428, 1.442695
        %v3510 = vpow.pop %v3509
        %v3511 = vmul.f32 %v3429, 1.442695
        %v3512 = vpow.pop %v3511
        %v3513 = vmul.f32 %v3430, 1.442695
        %v3514 = vpow.pop %v3513
        %v3515 = vmul.f32 %v3431, 1.442695
        %v3516 = vpow.pop %v3515
        %v3517 = vmul.f32 %v3432, 1.442695
        %v3518 = vpow.pop %v3517
        %v3519 = vmul.f32 %v3433, 1.442695
        %v3520 = vpow.pop %v3519
        %v3521 = vmul.f32 %v3434, 1.442695
        %v3522 = vpow.pop %v3521
        %v3523 = vmul.f32 %v3435, 1.442695
        %v3524 = vpow.pop %v3523
        %v3525 = vmul.f32 %v3436, 1.442695
        %v3526 = vpow.pop %v3525
        %v3527 = vmul.f32 %v3437, 1.442695
        %v3528 = vpow.pop %v3527
        %v3529 = vmul.f32 %v3438, 1.442695
        %v3530 = vpow.pop %v3529
        %v3531 = vmul.f32 %v3439, 1.442695
        %v3532 = vpow.pop %v3531
        %v3533 = vmul.f32 %v3440, 1.442695
        %v3534 = vpow.pop %v3533
        %v3535 = vmul.f32 %v3441, 1.442695
        %v3536 = vpow.pop %v3535
        %v3537 = vmul.f32 %v3442, 1.442695
        %v3538 = vpow.pop %v3537
        %v3539 = vmul.f32 %v3443, 1.442695
        %v3540 = vpow.pop %v3539
        %v3541 = vmul.f32 %v3444, 1.442695
        %v3542 = vpow.pop %v3541
        %v3543 = vmul.f32 %v3445, 1.442695
        %v3544 = vpow.pop %v3543
        %v3545 = vmul.f32 %v3446, 1.442695
        %v3546 = vpow.pop %v3545
        %v3547 = vmul.f32 %v3447, 1.442695
        %v3548 = vpow.pop %v3547
        %v3549 = vmul.f32 %v3448, 1.442695
        %v3550 = vpow.pop %v3549
        %v3551 = vmul.f32 %v3449, 1.442695
        %v3552 = vpow.pop %v3551
        %v3553 = vmul.f32 %v3450, 1.442695
        %v3554 = vpow.pop %v3553
        %v3555 = vmul.f32 %v3451, 1.442695
        %v3556 = vpow.pop %v3555
        %v3557 = vmul.f32 %v3452, 1.442695
        %v3558 = vpow.pop %v3557
        %v3559 = vmul.f32 %v3453, 1.442695
        %v3560 = vpow.pop %v3559
        %v3561 = vmul.f32 %v3454, 1.442695
        %v3562 = vpow.pop %v3561
        %v3563 = vmul.f32 %v3455, 1.442695
        %v3564 = vpow.pop %v3563
        %v3565 = vmul.f32 %v3456, 1.442695
        %v3566 = vpow.pop %v3565
        %v3567 = vmul.f32 %v3457, 1.442695
        %v3568 = vpow.pop %v3567
        %v3569 = vmul.f32 %v3458, 1.442695
        %v3570 = vpow.pop %v3569
        %v3571 = vmul.f32 %v3459, 1.442695
        %v3572 = vpow.pop %v3571
        %v3573 = vmul.f32 %v3460, 1.442695
        %v3574 = vpow.pop %v3573
        %v3575 = vmul.f32 %v3461, 1.442695
        %v3576 = vpow.pop %v3575
        %v3577 = vmul.f32 %v3462, 1.442695
        %v3578 = vpow.pop %v3577
        %v3579 = vmul.f32 %v3463, 1.442695
        %v3580 = vpow.pop %v3579
        %v3581 = vmul.f32 %v3464, 1.442695
        %v3582 = vpow.pop %v3581
        %v3583 = vmul.f32 %v3465, 1.442695
        %v3584 = vpow.pop %v3583
        %v3585 = vmul.f32 %v3466, 1.442695
        %v3586 = vpow.pop %v3585
        %v3587 = vmul.f32 %v3467, 1.442695
        %v3588 = vpow.pop %v3587
        %v3589 = vmul.f32 %v3468, 1.442695
        %v3590 = vpow.pop %v3589
        %v3591 = vmul.f32 %v3469, 1.442695
        %v3592 = vpow.pop %v3591
        %v3593 = vmul.f32 %v3470, 1.442695
        %v3594 = vpow.pop %v3593
        %v3595 = vmul.f32 %v3471, 1.442695
        %v3596 = vpow.pop %v3595
        %v3597 = vmul.f32 %v3472, 1.442695
        %v3598 = vpow.pop %v3597
        %v3599 = vmul.f32 %v3473, 1.442695
        %v3600 = vpow.pop %v3599
        %v3601 = vmul.f32 %v3474, 1.442695
        %v3602 = vpow.pop %v3601
        %v3603 = vadd.f32 %v3476, %v3480
        %v3604 = vadd.f32 %v3603, %v3484
        %v3605 = vadd.f32 %v3604, %v3488
        %v3606 = vadd.f32 %v3605, %v3492
        %v3607 = vadd.f32 %v3606, %v3496
        %v3608 = vadd.f32 %v3607, %v3500
        %v3609 = vadd.f32 %v3608, %v3504
        %v3610 = vadd.f32 %v3609, %v3508
        %v3611 = vadd.f32 %v3610, %v3512
        %v3612 = vadd.f32 %v3611, %v3516
        %v3613 = vadd.f32 %v3612, %v3520
        %v3614 = vadd.f32 %v3613, %v3524
        %v3615 = vadd.f32 %v3614, %v3528
        %v3616 = vadd.f32 %v3615, %v3532
        %v3617 = vadd.f32 %v3616, %v3536
        %v3618 = vadd.f32 %v3617, %v3540
        %v3619 = vadd.f32 %v3618, %v3544
        %v3620 = vadd.f32 %v3619, %v3548
        %v3621 = vadd.f32 %v3620, %v3552
        %v3622 = vadd.f32 %v3621, %v3556
        %v3623 = vadd.f32 %v3622, %v3560
        %v3624 = vadd.f32 %v3623, %v3564
        %v3625 = vadd.f32 %v3624, %v3568
        %v3626 = vadd.f32 %v3625, %v3572
        %v3627 = vadd.f32 %v3626, %v3576
        %v3628 = vadd.f32 %v3627, %v3580
        %v3629 = vadd.f32 %v3628, %v3584
        %v3630 = vadd.f32 %v3629, %v3588
        %v3631 = vadd.f32 %v3630, %v3592
        %v3632 = vadd.f32 %v3631, %v3596
        %v3633 = vadd.f32 %v3632, %v3600
        %v3634 = vrot.slane %v3633, 4
        %v3635 = vadd.f32 %v3633, %v3634
        %v3636 = vrot.slane %v3635, 2
        %v3637 = vadd.f32 %v3635, %v3636
        %v3638 = vrot.slane %v3637, 1
        %v3639 = vadd.f32 %v3637, %v3638
        %v3640 = vadd.f32 %v3478, %v3482
        %v3641 = vadd.f32 %v3640, %v3486
        %v3642 = vadd.f32 %v3641, %v3490
        %v3643 = vadd.f32 %v3642, %v3494
        %v3644 = vadd.f32 %v3643, %v3498
        %v3645 = vadd.f32 %v3644, %v3502
        %v3646 = vadd.f32 %v3645, %v3506
        %v3647 = vadd.f32 %v3646, %v3510
        %v3648 = vadd.f32 %v3647, %v3514
        %v3649 = vadd.f32 %v3648, %v3518
        %v3650 = vadd.f32 %v3649, %v3522
        %v3651 = vadd.f32 %v3650, %v3526
        %v3652 = vadd.f32 %v3651, %v3530
        %v3653 = vadd.f32 %v3652, %v3534
        %v3654 = vadd.f32 %v3653, %v3538
        %v3655 = vadd.f32 %v3654, %v3542
        %v3656 = vadd.f32 %v3655, %v3546
        %v3657 = vadd.f32 %v3656, %v3550
        %v3658 = vadd.f32 %v3657, %v3554
        %v3659 = vadd.f32 %v3658, %v3558
        %v3660 = vadd.f32 %v3659, %v3562
        %v3661 = vadd.f32 %v3660, %v3566
        %v3662 = vadd.f32 %v3661, %v3570
        %v3663 = vadd.f32 %v3662, %v3574
        %v3664 = vadd.f32 %v3663, %v3578
        %v3665 = vadd.f32 %v3664, %v3582
        %v3666 = vadd.f32 %v3665, %v3586
        %v3667 = vadd.f32 %v3666, %v3590
        %v3668 = vadd.f32 %v3667, %v3594
        %v3669 = vadd.f32 %v3668, %v3598
        %v3670 = vadd.f32 %v3669, %v3602
        %v3671 = vrot.slane %v3670, 4
        %v3672 = vadd.f32 %v3670, %v3671
        %v3673 = vrot.slane %v3672, 2
        %v3674 = vadd.f32 %v3672, %v3673
        %v3675 = vrot.slane %v3674, 1
        %v3676 = vadd.f32 %v3674, %v3675
        %v3677 = vrcp.pop %v3639
        %v3678 = vrcp.pop %v3676
        %v3679 = vmul.f32 %v3476, %v3677
        %v3680 = vmul.f32 %v3478, %v3678
        %v3681 = vmul.f32 %v3480, %v3677
        %v3682 = vmul.f32 %v3482, %v3678
        %v3683 = vmul.f32 %v3484, %v3677
        %v3684 = vmul.f32 %v3486, %v3678
        %v3685 = vmul.f32 %v3488, %v3677
        %v3686 = vmul.f32 %v3490, %v3678
        %v3687 = vmul.f32 %v3492, %v3677
        %v3688 = vmul.f32 %v3494, %v3678
        %v3689 = vmul.f32 %v3496, %v3677
        %v3690 = vmul.f32 %v3498, %v3678
        %v3691 = vmul.f32 %v3500, %v3677
        %v3692 = vmul.f32 %v3502, %v3678
        %v3693 = vmul.f32 %v3504, %v3677
        %v3694 = vmul.f32 %v3506, %v3678
        %v3695 = vmul.f32 %v3508, %v3677
        %v3696 = vmul.f32 %v3510, %v3678
        %v3697 = vmul.f32 %v3512, %v3677
        %v3698 = vmul.f32 %v3514, %v3678
        %v3699 = vmul.f32 %v3516, %v3677
        %v3700 = vmul.f32 %v3518, %v3678
        %v3701 = vmul.f32 %v3520, %v3677
        %v3702 = vmul.f32 %v3522, %v3678
        %v3703 = vmul.f32 %v3524, %v3677
        %v3704 = vmul.f32 %v3526, %v3678
        %v3705 = vmul.f32 %v3528, %v3677
        %v3706 = vmul.f32 %v3530, %v3678
        %v3707 = vmul.f32 %v3532, %v3677
        %v3708 = vmul.f32 %v3534, %v3678
        %v3709 = vmul.f32 %v3536, %v3677
        %v3710 = vmul.f32 %v3538, %v3678
        %v3711 = vmul.f32 %v3540, %v3677
        %v3712 = vmul.f32 %v3542, %v3678
        %v3713 = vmul.f32 %v3544, %v3677
        %v3714 = vmul.f32 %v3546, %v3678
        %v3715 = vmul.f32 %v3548, %v3677
        %v3716 = vmul.f32 %v3550, %v3678
        %v3717 = vmul.f32 %v3552, %v3677
        %v3718 = vmul.f32 %v3554, %v3678
        %v3719 = vmul.f32 %v3556, %v3677
        %v3720 = vmul.f32 %v3558, %v3678
        %v3721 = vmul.f32 %v3560, %v3677
        %v3722 = vmul.f32 %v3562, %v3678
        %v3723 = vmul.f32 %v3564, %v3677
        %v3724 = vmul.f32 %v3566, %v3678
        %v3725 = vmul.f32 %v3568, %v3677
        %v3726 = vmul.f32 %v3570, %v3678
        %v3727 = vmul.f32 %v3572, %v3677
        %v3728 = vmul.f32 %v3574, %v3678
        %v3729 = vmul.f32 %v3576, %v3677
        %v3730 = vmul.f32 %v3578, %v3678
        %v3731 = vmul.f32 %v3580, %v3677
        %v3732 = vmul.f32 %v3582, %v3678
        %v3733 = vmul.f32 %v3584, %v3677
        %v3734 = vmul.f32 %v3586, %v3678
        %v3735 = vmul.f32 %v3588, %v3677
        %v3736 = vmul.f32 %v3590, %v3678
        %v3737 = vmul.f32 %v3592, %v3677
        %v3738 = vmul.f32 %v3594, %v3678
        %v3739 = vmul.f32 %v3596, %v3677
        %v3740 = vmul.f32 %v3598, %v3678
        %v3741 = vmul.f32 %v3600, %v3677
        %v3742 = vmul.f32 %v3602, %v3678
        %v3743 = vpack.c.bf16 %v3681, %v3679
        %v3744 = vpack.c.bf16 %v3682, %v3680
        %v3745 = vpack.c.bf16 %v3685, %v3683
        %v3746 = vpack.c.bf16 %v3686, %v3684
        %v3747 = vpack.c.bf16 %v3689, %v3687
        %v3748 = vpack.c.bf16 %v3690, %v3688
        %v3749 = vpack.c.bf16 %v3693, %v3691
        %v3750 = vpack.c.bf16 %v3694, %v3692
        %v3751 = vpack.c.bf16 %v3697, %v3695
        %v3752 = vpack.c.bf16 %v3698, %v3696
        %v3753 = vpack.c.bf16 %v3701, %v3699
        %v3754 = vpack.c.bf16 %v3702, %v3700
        %v3755 = vpack.c.bf16 %v3705, %v3703
        %v3756 = vpack.c.bf16 %v3706, %v3704
        %v3757 = vpack.c.bf16 %v3709, %v3707
        %v3758 = vpack.c.bf16 %v3710, %v3708
        %v3759 = vpack.c.bf16 %v3713, %v3711
        %v3760 = vpack.c.bf16 %v3714, %v3712
        %v3761 = vpack.c.bf16 %v3717, %v3715
        %v3762 = vpack.c.bf16 %v3718, %v3716
        %v3763 = vpack.c.bf16 %v3721, %v3719
        %v3764 = vpack.c.bf16 %v3722, %v3720
        %v3765 = vpack.c.bf16 %v3725, %v3723
        %v3766 = vpack.c.bf16 %v3726, %v3724
        %v3767 = vpack.c.bf16 %v3729, %v3727
        %v3768 = vpack.c.bf16 %v3730, %v3728
        %v3769 = vpack.c.bf16 %v3733, %v3731
        %v3770 = vpack.c.bf16 %v3734, %v3732
        %v3771 = vpack.c.bf16 %v3737, %v3735
        %v3772 = vpack.c.bf16 %v3738, %v3736
        %v3773 = vpack.c.bf16 %v3741, %v3739
        %v3774 = vpack.c.bf16 %v3742, %v3740
        %3775 = vmatpush.bf16.msra.mxu0 %v3757
        %3776 = vmatpush.bf16.msra.mxu0 %v3755
        %3777 = vmatpush.bf16.msra.mxu0 %v3753
        %3778 = vmatpush.bf16.msra.mxu0 %v3751
        %3779 = vmatpush.bf16.msra.mxu0 %v3749
        %3780 = vmatpush.bf16.msra.mxu0 %v3747
        %3781 = vmatpush.bf16.msra.mxu0 %v3745
        %3782 = vmatpush.bf16.msra.mxu0 %v3743
        %3783 = vmatmul.bf16.gmra.mxu0 %v2909
        %v3784 = vpop.f32.mrf.mxu0
        %v3785 = vadd.f32 0.0, %v3784
        %v3786 = vpop.f32.mrf.mxu0
        %3787 = vdwg.mxu0
        %3788 = vmatpush.bf16.msra.mxu0 %v3773
        %3789 = vmatpush.bf16.msra.mxu0 %v3771
        %3790 = vmatpush.bf16.msra.mxu0 %v3769
        %3791 = vmatpush.bf16.msra.mxu0 %v3767
        %3792 = vmatpush.bf16.msra.mxu0 %v3765
        %3793 = vmatpush.bf16.msra.mxu0 %v3763
        %3794 = vmatpush.bf16.msra.mxu0 %v3761
        %3795 = vmatpush.bf16.msra.mxu0 %v3759
        %3796 = vmatmul.bf16.gmra.mxu0 %v2910
        %v3797 = vpop.f32.mrf.mxu0
        %v3798 = vadd.f32 %v3785, %v3797
        %v3799 = vpop.f32.mrf.mxu0
        %3800 = vdwg.mxu0
        %3801 = vmatpush.bf16.msra.mxu0 %v3758
        %3802 = vmatpush.bf16.msra.mxu0 %v3756
        %3803 = vmatpush.bf16.msra.mxu0 %v3754
        %3804 = vmatpush.bf16.msra.mxu0 %v3752
        %3805 = vmatpush.bf16.msra.mxu0 %v3750
        %3806 = vmatpush.bf16.msra.mxu0 %v3748
        %3807 = vmatpush.bf16.msra.mxu0 %v3746
        %3808 = vmatpush.bf16.msra.mxu0 %v3744
        %3809 = vmatmul.bf16.gmra.mxu0 %v2909
        %v3810 = vpop.f32.mrf.mxu0
        %v3811 = vadd.f32 0.0, %v3810
        %v3812 = vpop.f32.mrf.mxu0
        %3813 = vdwg.mxu0
        %3814 = vmatpush.bf16.msra.mxu0 %v3774
        %3815 = vmatpush.bf16.msra.mxu0 %v3772
        %3816 = vmatpush.bf16.msra.mxu0 %v3770
        %3817 = vmatpush.bf16.msra.mxu0 %v3768
        %3818 = vmatpush.bf16.msra.mxu0 %v3766
        %3819 = vmatpush.bf16.msra.mxu0 %v3764
        %3820 = vmatpush.bf16.msra.mxu0 %v3762
        %3821 = vmatpush.bf16.msra.mxu0 %v3760
        %3822 = vmatmul.bf16.gmra.mxu0 %v2910
        %v3823 = vpop.f32.mrf.mxu0
        %v3824 = vadd.f32 %v3811, %v3823
        %v3825 = vpop.f32.mrf.mxu0
        %3826 = vdwg.mxu0
        %3827 = vst [vmem:[#allocation3 + $0x20] sm:$0xff] %v3798
        %3828 = vst [vmem:[#allocation3 + $0x28] sm:$0xff] %v3824
        %v3829 = vpack.c.bf16 %v726, %v726
        %v3830 = vpack.c.bf16 %v745, %v745
        %v3831 = vpack.c.bf16 %v784, %v784
        %v3832 = vpack.c.bf16 %v803, %v803
        %v3833 = vpack.c.bf16 %v842, %v842
        %v3834 = vpack.c.bf16 %v861, %v861
        %3835 = vmatpush.bf16.xpose.msra.mxu0 0
        %3836 = vmatpush.bf16.xpose.msra.mxu0 0
        %3837 = vmatpush.bf16.xpose.msra.mxu0 0
        %3838 = vmatpush.bf16.xpose.msra.mxu0 0
        %3839 = vmatpush.bf16.xpose.msra.mxu0 0
        %3840 = vmatpush.bf16.xpose.msra.mxu0 0
        %3841 = vmatpush.bf16.xpose.msra.mxu0 0
        %3842 = vmatpush.bf16.xpose.msra.mxu0 %v3831
        %3843 = vmatmul.bf16.gmra.mxu0 %v997
        %v3844 = vpop.f32.mrf.mxu0
        %v3845 = vadd.f32 0.0, %v3844
        %v3846 = vpop.f32.mrf.mxu0
        %v3847 = vadd.f32 0.0, %v3846
        %3848 = vmatmul.bf16.gmra.mxu0 %v999
        %v3849 = vpop.f32.mrf.mxu0
        %v3850 = vadd.f32 0.0, %v3849
        %v3851 = vpop.f32.mrf.mxu0
        %v3852 = vadd.f32 0.0, %v3851
        %3853 = vmatmul.bf16.gmra.mxu0 %v1001
        %v3854 = vpop.f32.mrf.mxu0
        %v3855 = vadd.f32 0.0, %v3854
        %v3856 = vpop.f32.mrf.mxu0
        %v3857 = vadd.f32 0.0, %v3856
        %3858 = vmatmul.bf16.gmra.mxu0 %v1003
        %v3859 = vpop.f32.mrf.mxu0
        %v3860 = vadd.f32 0.0, %v3859
        %v3861 = vpop.f32.mrf.mxu0
        %v3862 = vadd.f32 0.0, %v3861
        %3863 = vmatmul.bf16.gmra.mxu0 %v1005
        %v3864 = vpop.f32.mrf.mxu0
        %v3865 = vadd.f32 0.0, %v3864
        %v3866 = vpop.f32.mrf.mxu0
        %v3867 = vadd.f32 0.0, %v3866
        %3868 = vmatmul.bf16.gmra.mxu0 %v1007
        %v3869 = vpop.f32.mrf.mxu0
        %v3870 = vadd.f32 0.0, %v3869
        %v3871 = vpop.f32.mrf.mxu0
        %v3872 = vadd.f32 0.0, %v3871
        %3873 = vmatmul.bf16.gmra.mxu0 %v1009
        %v3874 = vpop.f32.mrf.mxu0
        %v3875 = vadd.f32 0.0, %v3874
        %v3876 = vpop.f32.mrf.mxu0
        %v3877 = vadd.f32 0.0, %v3876
        %3878 = vmatmul.bf16.gmra.mxu0 %v1011
        %v3879 = vpop.f32.mrf.mxu0
        %v3880 = vadd.f32 0.0, %v3879
        %v3881 = vpop.f32.mrf.mxu0
        %v3882 = vadd.f32 0.0, %v3881
        %3883 = vmatmul.bf16.gmra.mxu0 %v1013
        %v3884 = vpop.f32.mrf.mxu0
        %v3885 = vadd.f32 0.0, %v3884
        %v3886 = vpop.f32.mrf.mxu0
        %v3887 = vadd.f32 0.0, %v3886
        %3888 = vmatmul.bf16.gmra.mxu0 %v1015
        %v3889 = vpop.f32.mrf.mxu0
        %v3890 = vadd.f32 0.0, %v3889
        %v3891 = vpop.f32.mrf.mxu0
        %v3892 = vadd.f32 0.0, %v3891
        %3893 = vmatmul.bf16.gmra.mxu0 %v1017
        %v3894 = vpop.f32.mrf.mxu0
        %v3895 = vadd.f32 0.0, %v3894
        %v3896 = vpop.f32.mrf.mxu0
        %v3897 = vadd.f32 0.0, %v3896
        %3898 = vmatmul.bf16.gmra.mxu0 %v1019
        %v3899 = vpop.f32.mrf.mxu0
        %v3900 = vadd.f32 0.0, %v3899
        %v3901 = vpop.f32.mrf.mxu0
        %v3902 = vadd.f32 0.0, %v3901
        %3903 = vmatmul.bf16.gmra.mxu0 %v1021
        %v3904 = vpop.f32.mrf.mxu0
        %v3905 = vadd.f32 0.0, %v3904
        %v3906 = vpop.f32.mrf.mxu0
        %v3907 = vadd.f32 0.0, %v3906
        %3908 = vmatmul.bf16.gmra.mxu0 %v1023
        %v3909 = vpop.f32.mrf.mxu0
        %v3910 = vadd.f32 0.0, %v3909
        %v3911 = vpop.f32.mrf.mxu0
        %v3912 = vadd.f32 0.0, %v3911
        %3913 = vmatmul.bf16.gmra.mxu0 %v1025
        %v3914 = vpop.f32.mrf.mxu0
        %v3915 = vadd.f32 0.0, %v3914
        %v3916 = vpop.f32.mrf.mxu0
        %v3917 = vadd.f32 0.0, %v3916
        %3918 = vmatmul.bf16.gmra.mxu0 %v1027
        %v3919 = vpop.f32.mrf.mxu0
        %v3920 = vadd.f32 0.0, %v3919
        %v3921 = vpop.f32.mrf.mxu0
        %v3922 = vadd.f32 0.0, %v3921
        %3923 = vdwg.mxu0
        %3924 = vmatpush.bf16.xpose.msra.mxu0 0
        %3925 = vmatpush.bf16.xpose.msra.mxu0 0
        %3926 = vmatpush.bf16.xpose.msra.mxu0 0
        %3927 = vmatpush.bf16.xpose.msra.mxu0 0
        %3928 = vmatpush.bf16.xpose.msra.mxu0 0
        %3929 = vmatpush.bf16.xpose.msra.mxu0 0
        %3930 = vmatpush.bf16.xpose.msra.mxu0 0
        %3931 = vmatpush.bf16.xpose.msra.mxu0 %v3832
        %3932 = vmatmul.bf16.gmra.mxu0 %v998
        %v3933 = vpop.f32.mrf.mxu0
        %v3934 = vadd.f32 %v3845, %v3933
        %v3935 = vpop.f32.mrf.mxu0
        %v3936 = vadd.f32 %v3847, %v3935
        %3937 = vmatmul.bf16.gmra.mxu0 %v1000
        %v3938 = vpop.f32.mrf.mxu0
        %v3939 = vadd.f32 %v3850, %v3938
        %v3940 = vpop.f32.mrf.mxu0
        %v3941 = vadd.f32 %v3852, %v3940
        %3942 = vmatmul.bf16.gmra.mxu0 %v1002
        %v3943 = vpop.f32.mrf.mxu0
        %v3944 = vadd.f32 %v3855, %v3943
        %v3945 = vpop.f32.mrf.mxu0
        %v3946 = vadd.f32 %v3857, %v3945
        %3947 = vmatmul.bf16.gmra.mxu0 %v1004
        %v3948 = vpop.f32.mrf.mxu0
        %v3949 = vadd.f32 %v3860, %v3948
        %v3950 = vpop.f32.mrf.mxu0
        %v3951 = vadd.f32 %v3862, %v3950
        %3952 = vmatmul.bf16.gmra.mxu0 %v1006
        %v3953 = vpop.f32.mrf.mxu0
        %v3954 = vadd.f32 %v3865, %v3953
        %v3955 = vpop.f32.mrf.mxu0
        %v3956 = vadd.f32 %v3867, %v3955
        %3957 = vmatmul.bf16.gmra.mxu0 %v1008
        %v3958 = vpop.f32.mrf.mxu0
        %v3959 = vadd.f32 %v3870, %v3958
        %v3960 = vpop.f32.mrf.mxu0
        %v3961 = vadd.f32 %v3872, %v3960
        %3962 = vmatmul.bf16.gmra.mxu0 %v1010
        %v3963 = vpop.f32.mrf.mxu0
        %v3964 = vadd.f32 %v3875, %v3963
        %v3965 = vpop.f32.mrf.mxu0
        %v3966 = vadd.f32 %v3877, %v3965
        %3967 = vmatmul.bf16.gmra.mxu0 %v1012
        %v3968 = vpop.f32.mrf.mxu0
        %v3969 = vadd.f32 %v3880, %v3968
        %v3970 = vpop.f32.mrf.mxu0
        %v3971 = vadd.f32 %v3882, %v3970
        %3972 = vmatmul.bf16.gmra.mxu0 %v1014
        %v3973 = vpop.f32.mrf.mxu0
        %v3974 = vadd.f32 %v3885, %v3973
        %v3975 = vpop.f32.mrf.mxu0
        %v3976 = vadd.f32 %v3887, %v3975
        %3977 = vmatmul.bf16.gmra.mxu0 %v1016
        %v3978 = vpop.f32.mrf.mxu0
        %v3979 = vadd.f32 %v3890, %v3978
        %v3980 = vpop.f32.mrf.mxu0
        %v3981 = vadd.f32 %v3892, %v3980
        %3982 = vmatmul.bf16.gmra.mxu0 %v1018
        %v3983 = vpop.f32.mrf.mxu0
        %v3984 = vadd.f32 %v3895, %v3983
        %v3985 = vpop.f32.mrf.mxu0
        %v3986 = vadd.f32 %v3897, %v3985
        %3987 = vmatmul.bf16.gmra.mxu0 %v1020
        %v3988 = vpop.f32.mrf.mxu0
        %v3989 = vadd.f32 %v3900, %v3988
        %v3990 = vpop.f32.mrf.mxu0
        %v3991 = vadd.f32 %v3902, %v3990
        %3992 = vmatmul.bf16.gmra.mxu0 %v1022
        %v3993 = vpop.f32.mrf.mxu0
        %v3994 = vadd.f32 %v3905, %v3993
        %v3995 = vpop.f32.mrf.mxu0
        %v3996 = vadd.f32 %v3907, %v3995
        %3997 = vmatmul.bf16.gmra.mxu0 %v1024
        %v3998 = vpop.f32.mrf.mxu0
        %v3999 = vadd.f32 %v3910, %v3998
        %v4000 = vpop.f32.mrf.mxu0
        %v4001 = vadd.f32 %v3912, %v4000
        %4002 = vmatmul.bf16.gmra.mxu0 %v1026
        %v4003 = vpop.f32.mrf.mxu0
        %v4004 = vadd.f32 %v3915, %v4003
        %v4005 = vpop.f32.mrf.mxu0
        %v4006 = vadd.f32 %v3917, %v4005
        %4007 = vmatmul.bf16.gmra.mxu0 %v1028
        %v4008 = vpop.f32.mrf.mxu0
        %v4009 = vadd.f32 %v3920, %v4008
        %v4010 = vpop.f32.mrf.mxu0
        %v4011 = vadd.f32 %v3922, %v4010
        %4012 = vdwg.mxu0
        %v4013 = vpack.c.bf16 %v3936, %v3934
        %v4014 = vpack.c.bf16 %v3941, %v3939
        %v4015 = vpack.c.bf16 %v3946, %v3944
        %v4016 = vpack.c.bf16 %v3951, %v3949
        %v4017 = vpack.c.bf16 %v3956, %v3954
        %v4018 = vpack.c.bf16 %v3961, %v3959
        %v4019 = vpack.c.bf16 %v3966, %v3964
        %v4020 = vpack.c.bf16 %v3971, %v3969
        %v4021 = vpack.c.bf16 %v3976, %v3974
        %v4022 = vpack.c.bf16 %v3981, %v3979
        %v4023 = vpack.c.bf16 %v3986, %v3984
        %v4024 = vpack.c.bf16 %v3991, %v3989
        %v4025 = vpack.c.bf16 %v3996, %v3994
        %v4026 = vpack.c.bf16 %v4001, %v3999
        %v4027 = vpack.c.bf16 %v4006, %v4004
        %v4028 = vpack.c.bf16 %v4011, %v4009
        %v4030 = vsel %vm1255, %v4013, 0
        %v4033 = vsel %vm1255, %v4014, 0
        %v4036 = vsel %vm1255, %v4015, 0
        %v4039 = vsel %vm1255, %v4016, 0
        %v4042 = vsel %vm1255, %v4017, 0
        %v4045 = vsel %vm1255, %v4018, 0
        %v4048 = vsel %vm1255, %v4019, 0
        %v4051 = vsel %vm1255, %v4020, 0
        %v4054 = vsel %vm1255, %v4021, 0
        %v4057 = vsel %vm1255, %v4022, 0
        %v4060 = vsel %vm1255, %v4023, 0
        %v4063 = vsel %vm1255, %v4024, 0
        %v4066 = vsel %vm1255, %v4025, 0
        %v4069 = vsel %vm1255, %v4026, 0
        %v4072 = vsel %vm1255, %v4027, 0
        %v4075 = vsel %vm1255, %v4028, 0
        %v4078 = vsel %vm1304, %v3829, 0
        %v4081 = vsel %vm1304, %v3830, 0
        %4083 = vmatpush.bf16.msra.mxu0 0
        %4084 = vmatpush.bf16.msra.mxu0 0
        %4085 = vmatpush.bf16.msra.mxu0 0
        %4086 = vmatpush.bf16.msra.mxu0 0
        %4087 = vmatpush.bf16.msra.mxu0 0
        %4088 = vmatpush.bf16.msra.mxu0 0
        %4089 = vmatpush.bf16.msra.mxu0 0
        %4090 = vmatpush.bf16.msra.mxu0 %v4078
        %4091 = vmatmul.bf16.gmra.mxu0 %v4030
        %v4092 = vpop.f32.mrf.mxu0
        %v4093 = vadd.f32 0.0, %v4092
        %v4094 = vpop.f32.mrf.mxu0
        %v4095 = vadd.f32 0.0, %v4094
        %4096 = vmatmul.bf16.gmra.mxu0 %v4033
        %v4097 = vpop.f32.mrf.mxu0
        %v4098 = vadd.f32 0.0, %v4097
        %v4099 = vpop.f32.mrf.mxu0
        %v4100 = vadd.f32 0.0, %v4099
        %4101 = vmatmul.bf16.gmra.mxu0 %v4036
        %v4102 = vpop.f32.mrf.mxu0
        %v4103 = vadd.f32 0.0, %v4102
        %v4104 = vpop.f32.mrf.mxu0
        %v4105 = vadd.f32 0.0, %v4104
        %4106 = vmatmul.bf16.gmra.mxu0 %v4039
        %v4107 = vpop.f32.mrf.mxu0
        %v4108 = vadd.f32 0.0, %v4107
        %v4109 = vpop.f32.mrf.mxu0
        %v4110 = vadd.f32 0.0, %v4109
        %4111 = vmatmul.bf16.gmra.mxu0 %v4042
        %v4112 = vpop.f32.mrf.mxu0
        %v4113 = vadd.f32 0.0, %v4112
        %v4114 = vpop.f32.mrf.mxu0
        %v4115 = vadd.f32 0.0, %v4114
        %4116 = vmatmul.bf16.gmra.mxu0 %v4045
        %v4117 = vpop.f32.mrf.mxu0
        %v4118 = vadd.f32 0.0, %v4117
        %v4119 = vpop.f32.mrf.mxu0
        %v4120 = vadd.f32 0.0, %v4119
        %4121 = vmatmul.bf16.gmra.mxu0 %v4048
        %v4122 = vpop.f32.mrf.mxu0
        %v4123 = vadd.f32 0.0, %v4122
        %v4124 = vpop.f32.mrf.mxu0
        %v4125 = vadd.f32 0.0, %v4124
        %4126 = vmatmul.bf16.gmra.mxu0 %v4051
        %v4127 = vpop.f32.mrf.mxu0
        %v4128 = vadd.f32 0.0, %v4127
        %v4129 = vpop.f32.mrf.mxu0
        %v4130 = vadd.f32 0.0, %v4129
        %4131 = vmatmul.bf16.gmra.mxu0 %v4054
        %v4132 = vpop.f32.mrf.mxu0
        %v4133 = vadd.f32 0.0, %v4132
        %v4134 = vpop.f32.mrf.mxu0
        %v4135 = vadd.f32 0.0, %v4134
        %4136 = vmatmul.bf16.gmra.mxu0 %v4057
        %v4137 = vpop.f32.mrf.mxu0
        %v4138 = vadd.f32 0.0, %v4137
        %v4139 = vpop.f32.mrf.mxu0
        %v4140 = vadd.f32 0.0, %v4139
        %4141 = vmatmul.bf16.gmra.mxu0 %v4060
        %v4142 = vpop.f32.mrf.mxu0
        %v4143 = vadd.f32 0.0, %v4142
        %v4144 = vpop.f32.mrf.mxu0
        %v4145 = vadd.f32 0.0, %v4144
        %4146 = vmatmul.bf16.gmra.mxu0 %v4063
        %v4147 = vpop.f32.mrf.mxu0
        %v4148 = vadd.f32 0.0, %v4147
        %v4149 = vpop.f32.mrf.mxu0
        %v4150 = vadd.f32 0.0, %v4149
        %4151 = vmatmul.bf16.gmra.mxu0 %v4066
        %v4152 = vpop.f32.mrf.mxu0
        %v4153 = vadd.f32 0.0, %v4152
        %v4154 = vpop.f32.mrf.mxu0
        %v4155 = vadd.f32 0.0, %v4154
        %4156 = vmatmul.bf16.gmra.mxu0 %v4069
        %v4157 = vpop.f32.mrf.mxu0
        %v4158 = vadd.f32 0.0, %v4157
        %v4159 = vpop.f32.mrf.mxu0
        %v4160 = vadd.f32 0.0, %v4159
        %4161 = vmatmul.bf16.gmra.mxu0 %v4072
        %v4162 = vpop.f32.mrf.mxu0
        %v4163 = vadd.f32 0.0, %v4162
        %v4164 = vpop.f32.mrf.mxu0
        %v4165 = vadd.f32 0.0, %v4164
        %4166 = vmatmul.bf16.gmra.mxu0 %v4075
        %v4167 = vpop.f32.mrf.mxu0
        %v4168 = vadd.f32 0.0, %v4167
        %v4169 = vpop.f32.mrf.mxu0
        %v4170 = vadd.f32 0.0, %v4169
        %4171 = vdwg.mxu0
        %4172 = vmatpush.bf16.msra.mxu0 0
        %4173 = vmatpush.bf16.msra.mxu0 0
        %4174 = vmatpush.bf16.msra.mxu0 0
        %4175 = vmatpush.bf16.msra.mxu0 0
        %4176 = vmatpush.bf16.msra.mxu0 0
        %4177 = vmatpush.bf16.msra.mxu0 0
        %4178 = vmatpush.bf16.msra.mxu0 0
        %4179 = vmatpush.bf16.msra.mxu0 %v4081
        %4180 = vmatmul.bf16.gmra.mxu0 %v4030
        %v4181 = vpop.f32.mrf.mxu0
        %v4182 = vadd.f32 0.0, %v4181
        %v4183 = vpop.f32.mrf.mxu0
        %v4184 = vadd.f32 0.0, %v4183
        %4185 = vmatmul.bf16.gmra.mxu0 %v4033
        %v4186 = vpop.f32.mrf.mxu0
        %v4187 = vadd.f32 0.0, %v4186
        %v4188 = vpop.f32.mrf.mxu0
        %v4189 = vadd.f32 0.0, %v4188
        %4190 = vmatmul.bf16.gmra.mxu0 %v4036
        %v4191 = vpop.f32.mrf.mxu0
        %v4192 = vadd.f32 0.0, %v4191
        %v4193 = vpop.f32.mrf.mxu0
        %v4194 = vadd.f32 0.0, %v4193
        %4195 = vmatmul.bf16.gmra.mxu0 %v4039
        %v4196 = vpop.f32.mrf.mxu0
        %v4197 = vadd.f32 0.0, %v4196
        %v4198 = vpop.f32.mrf.mxu0
        %v4199 = vadd.f32 0.0, %v4198
        %4200 = vmatmul.bf16.gmra.mxu0 %v4042
        %v4201 = vpop.f32.mrf.mxu0
        %v4202 = vadd.f32 0.0, %v4201
        %v4203 = vpop.f32.mrf.mxu0
        %v4204 = vadd.f32 0.0, %v4203
        %4205 = vmatmul.bf16.gmra.mxu0 %v4045
        %v4206 = vpop.f32.mrf.mxu0
        %v4207 = vadd.f32 0.0, %v4206
        %v4208 = vpop.f32.mrf.mxu0
        %v4209 = vadd.f32 0.0, %v4208
        %4210 = vmatmul.bf16.gmra.mxu0 %v4048
        %v4211 = vpop.f32.mrf.mxu0
        %v4212 = vadd.f32 0.0, %v4211
        %v4213 = vpop.f32.mrf.mxu0
        %v4214 = vadd.f32 0.0, %v4213
        %4215 = vmatmul.bf16.gmra.mxu0 %v4051
        %v4216 = vpop.f32.mrf.mxu0
        %v4217 = vadd.f32 0.0, %v4216
        %v4218 = vpop.f32.mrf.mxu0
        %v4219 = vadd.f32 0.0, %v4218
        %4220 = vmatmul.bf16.gmra.mxu0 %v4054
        %v4221 = vpop.f32.mrf.mxu0
        %v4222 = vadd.f32 0.0, %v4221
        %v4223 = vpop.f32.mrf.mxu0
        %v4224 = vadd.f32 0.0, %v4223
        %4225 = vmatmul.bf16.gmra.mxu0 %v4057
        %v4226 = vpop.f32.mrf.mxu0
        %v4227 = vadd.f32 0.0, %v4226
        %v4228 = vpop.f32.mrf.mxu0
        %v4229 = vadd.f32 0.0, %v4228
        %4230 = vmatmul.bf16.gmra.mxu0 %v4060
        %v4231 = vpop.f32.mrf.mxu0
        %v4232 = vadd.f32 0.0, %v4231
        %v4233 = vpop.f32.mrf.mxu0
        %v4234 = vadd.f32 0.0, %v4233
        %4235 = vmatmul.bf16.gmra.mxu0 %v4063
        %v4236 = vpop.f32.mrf.mxu0
        %v4237 = vadd.f32 0.0, %v4236
        %v4238 = vpop.f32.mrf.mxu0
        %v4239 = vadd.f32 0.0, %v4238
        %4240 = vmatmul.bf16.gmra.mxu0 %v4066
        %v4241 = vpop.f32.mrf.mxu0
        %v4242 = vadd.f32 0.0, %v4241
        %v4243 = vpop.f32.mrf.mxu0
        %v4244 = vadd.f32 0.0, %v4243
        %4245 = vmatmul.bf16.gmra.mxu0 %v4069
        %v4246 = vpop.f32.mrf.mxu0
        %v4247 = vadd.f32 0.0, %v4246
        %v4248 = vpop.f32.mrf.mxu0
        %v4249 = vadd.f32 0.0, %v4248
        %4250 = vmatmul.bf16.gmra.mxu0 %v4072
        %v4251 = vpop.f32.mrf.mxu0
        %v4252 = vadd.f32 0.0, %v4251
        %v4253 = vpop.f32.mrf.mxu0
        %v4254 = vadd.f32 0.0, %v4253
        %4255 = vmatmul.bf16.gmra.mxu0 %v4075
        %v4256 = vpop.f32.mrf.mxu0
        %v4257 = vadd.f32 0.0, %v4256
        %v4258 = vpop.f32.mrf.mxu0
        %v4259 = vadd.f32 0.0, %v4258
        %4260 = vdwg.mxu0
        %v4261 = vmax.f32 %v4093, %v4098
        %v4262 = vmax.f32 %v4095, %v4100
        %v4263 = vmax.f32 %v4261, %v4103
        %v4264 = vmax.f32 %v4262, %v4105
        %v4265 = vmax.f32 %v4263, %v4108
        %v4266 = vmax.f32 %v4264, %v4110
        %v4267 = vmax.f32 %v4265, %v4113
        %v4268 = vmax.f32 %v4266, %v4115
        %v4269 = vmax.f32 %v4267, %v4118
        %v4270 = vmax.f32 %v4268, %v4120
        %v4271 = vmax.f32 %v4269, %v4123
        %v4272 = vmax.f32 %v4270, %v4125
        %v4273 = vmax.f32 %v4271, %v4128
        %v4274 = vmax.f32 %v4272, %v4130
        %v4275 = vmax.f32 %v4273, %v4133
        %v4276 = vmax.f32 %v4274, %v4135
        %v4277 = vmax.f32 %v4275, %v4138
        %v4278 = vmax.f32 %v4276, %v4140
        %v4279 = vmax.f32 %v4277, %v4143
        %v4280 = vmax.f32 %v4278, %v4145
        %v4281 = vmax.f32 %v4279, %v4148
        %v4282 = vmax.f32 %v4280, %v4150
        %v4283 = vmax.f32 %v4281, %v4153
        %v4284 = vmax.f32 %v4282, %v4155
        %v4285 = vmax.f32 %v4283, %v4158
        %v4286 = vmax.f32 %v4284, %v4160
        %v4287 = vmax.f32 %v4285, %v4163
        %v4288 = vmax.f32 %v4286, %v4165
        %v4289 = vmax.f32 %v4287, %v4168
        %v4290 = vmax.f32 %v4288, %v4170
        %v4291 = vmax.f32 %v4289, %v4290
        %v4292 = vrot.slane %v4291, 4
        %v4293 = vmax.f32 %v4291, %v4292
        %v4294 = vrot.slane %v4293, 2
        %v4295 = vmax.f32 %v4293, %v4294
        %v4296 = vrot.slane %v4295, 1
        %v4297 = vmax.f32 %v4295, %v4296
        %v4298 = vmax.f32 %v4182, %v4187
        %v4299 = vmax.f32 %v4184, %v4189
        %v4300 = vmax.f32 %v4298, %v4192
        %v4301 = vmax.f32 %v4299, %v4194
        %v4302 = vmax.f32 %v4300, %v4197
        %v4303 = vmax.f32 %v4301, %v4199
        %v4304 = vmax.f32 %v4302, %v4202
        %v4305 = vmax.f32 %v4303, %v4204
        %v4306 = vmax.f32 %v4304, %v4207
        %v4307 = vmax.f32 %v4305, %v4209
        %v4308 = vmax.f32 %v4306, %v4212
        %v4309 = vmax.f32 %v4307, %v4214
        %v4310 = vmax.f32 %v4308, %v4217
        %v4311 = vmax.f32 %v4309, %v4219
        %v4312 = vmax.f32 %v4310, %v4222
        %v4313 = vmax.f32 %v4311, %v4224
        %v4314 = vmax.f32 %v4312, %v4227
        %v4315 = vmax.f32 %v4313, %v4229
        %v4316 = vmax.f32 %v4314, %v4232
        %v4317 = vmax.f32 %v4315, %v4234
        %v4318 = vmax.f32 %v4316, %v4237
        %v4319 = vmax.f32 %v4317, %v4239
        %v4320 = vmax.f32 %v4318, %v4242
        %v4321 = vmax.f32 %v4319, %v4244
        %v4322 = vmax.f32 %v4320, %v4247
        %v4323 = vmax.f32 %v4321, %v4249
        %v4324 = vmax.f32 %v4322, %v4252
        %v4325 = vmax.f32 %v4323, %v4254
        %v4326 = vmax.f32 %v4324, %v4257
        %v4327 = vmax.f32 %v4325, %v4259
        %v4328 = vmax.f32 %v4326, %v4327
        %v4329 = vrot.slane %v4328, 4
        %v4330 = vmax.f32 %v4328, %v4329
        %v4331 = vrot.slane %v4330, 2
        %v4332 = vmax.f32 %v4330, %v4331
        %v4333 = vrot.slane %v4332, 1
        %v4334 = vmax.f32 %v4332, %v4333
        %v4335 = vsub.f32 %v4093, %v4297
        %v4336 = vsub.f32 %v4182, %v4334
        %v4337 = vsub.f32 %v4095, %v4297
        %v4338 = vsub.f32 %v4184, %v4334
        %v4339 = vsub.f32 %v4098, %v4297
        %v4340 = vsub.f32 %v4187, %v4334
        %v4341 = vsub.f32 %v4100, %v4297
        %v4342 = vsub.f32 %v4189, %v4334
        %v4343 = vsub.f32 %v4103, %v4297
        %v4344 = vsub.f32 %v4192, %v4334
        %v4345 = vsub.f32 %v4105, %v4297
        %v4346 = vsub.f32 %v4194, %v4334
        %v4347 = vsub.f32 %v4108, %v4297
        %v4348 = vsub.f32 %v4197, %v4334
        %v4349 = vsub.f32 %v4110, %v4297
        %v4350 = vsub.f32 %v4199, %v4334
        %v4351 = vsub.f32 %v4113, %v4297
        %v4352 = vsub.f32 %v4202, %v4334
        %v4353 = vsub.f32 %v4115, %v4297
        %v4354 = vsub.f32 %v4204, %v4334
        %v4355 = vsub.f32 %v4118, %v4297
        %v4356 = vsub.f32 %v4207, %v4334
        %v4357 = vsub.f32 %v4120, %v4297
        %v4358 = vsub.f32 %v4209, %v4334
        %v4359 = vsub.f32 %v4123, %v4297
        %v4360 = vsub.f32 %v4212, %v4334
        %v4361 = vsub.f32 %v4125, %v4297
        %v4362 = vsub.f32 %v4214, %v4334
        %v4363 = vsub.f32 %v4128, %v4297
        %v4364 = vsub.f32 %v4217, %v4334
        %v4365 = vsub.f32 %v4130, %v4297
        %v4366 = vsub.f32 %v4219, %v4334
        %v4367 = vsub.f32 %v4133, %v4297
        %v4368 = vsub.f32 %v4222, %v4334
        %v4369 = vsub.f32 %v4135, %v4297
        %v4370 = vsub.f32 %v4224, %v4334
        %v4371 = vsub.f32 %v4138, %v4297
        %v4372 = vsub.f32 %v4227, %v4334
        %v4373 = vsub.f32 %v4140, %v4297
        %v4374 = vsub.f32 %v4229, %v4334
        %v4375 = vsub.f32 %v4143, %v4297
        %v4376 = vsub.f32 %v4232, %v4334
        %v4377 = vsub.f32 %v4145, %v4297
        %v4378 = vsub.f32 %v4234, %v4334
        %v4379 = vsub.f32 %v4148, %v4297
        %v4380 = vsub.f32 %v4237, %v4334
        %v4381 = vsub.f32 %v4150, %v4297
        %v4382 = vsub.f32 %v4239, %v4334
        %v4383 = vsub.f32 %v4153, %v4297
        %v4384 = vsub.f32 %v4242, %v4334
        %v4385 = vsub.f32 %v4155, %v4297
        %v4386 = vsub.f32 %v4244, %v4334
        %v4387 = vsub.f32 %v4158, %v4297
        %v4388 = vsub.f32 %v4247, %v4334
        %v4389 = vsub.f32 %v4160, %v4297
        %v4390 = vsub.f32 %v4249, %v4334
        %v4391 = vsub.f32 %v4163, %v4297
        %v4392 = vsub.f32 %v4252, %v4334
        %v4393 = vsub.f32 %v4165, %v4297
        %v4394 = vsub.f32 %v4254, %v4334
        %v4395 = vsub.f32 %v4168, %v4297
        %v4396 = vsub.f32 %v4257, %v4334
        %v4397 = vsub.f32 %v4170, %v4297
        %v4398 = vsub.f32 %v4259, %v4334
        %v4399 = vmul.f32 %v4335, 1.442695
        %v4400 = vpow.pop %v4399
        %v4401 = vmul.f32 %v4336, 1.442695
        %v4402 = vpow.pop %v4401
        %v4403 = vmul.f32 %v4337, 1.442695
        %v4404 = vpow.pop %v4403
        %v4405 = vmul.f32 %v4338, 1.442695
        %v4406 = vpow.pop %v4405
        %v4407 = vmul.f32 %v4339, 1.442695
        %v4408 = vpow.pop %v4407
        %v4409 = vmul.f32 %v4340, 1.442695
        %v4410 = vpow.pop %v4409
        %v4411 = vmul.f32 %v4341, 1.442695
        %v4412 = vpow.pop %v4411
        %v4413 = vmul.f32 %v4342, 1.442695
        %v4414 = vpow.pop %v4413
        %v4415 = vmul.f32 %v4343, 1.442695
        %v4416 = vpow.pop %v4415
        %v4417 = vmul.f32 %v4344, 1.442695
        %v4418 = vpow.pop %v4417
        %v4419 = vmul.f32 %v4345, 1.442695
        %v4420 = vpow.pop %v4419
        %v4421 = vmul.f32 %v4346, 1.442695
        %v4422 = vpow.pop %v4421
        %v4423 = vmul.f32 %v4347, 1.442695
        %v4424 = vpow.pop %v4423
        %v4425 = vmul.f32 %v4348, 1.442695
        %v4426 = vpow.pop %v4425
        %v4427 = vmul.f32 %v4349, 1.442695
        %v4428 = vpow.pop %v4427
        %v4429 = vmul.f32 %v4350, 1.442695
        %v4430 = vpow.pop %v4429
        %v4431 = vmul.f32 %v4351, 1.442695
        %v4432 = vpow.pop %v4431
        %v4433 = vmul.f32 %v4352, 1.442695
        %v4434 = vpow.pop %v4433
        %v4435 = vmul.f32 %v4353, 1.442695
        %v4436 = vpow.pop %v4435
        %v4437 = vmul.f32 %v4354, 1.442695
        %v4438 = vpow.pop %v4437
        %v4439 = vmul.f32 %v4355, 1.442695
        %v4440 = vpow.pop %v4439
        %v4441 = vmul.f32 %v4356, 1.442695
        %v4442 = vpow.pop %v4441
        %v4443 = vmul.f32 %v4357, 1.442695
        %v4444 = vpow.pop %v4443
        %v4445 = vmul.f32 %v4358, 1.442695
        %v4446 = vpow.pop %v4445
        %v4447 = vmul.f32 %v4359, 1.442695
        %v4448 = vpow.pop %v4447
        %v4449 = vmul.f32 %v4360, 1.442695
        %v4450 = vpow.pop %v4449
        %v4451 = vmul.f32 %v4361, 1.442695
        %v4452 = vpow.pop %v4451
        %v4453 = vmul.f32 %v4362, 1.442695
        %v4454 = vpow.pop %v4453
        %v4455 = vmul.f32 %v4363, 1.442695
        %v4456 = vpow.pop %v4455
        %v4457 = vmul.f32 %v4364, 1.442695
        %v4458 = vpow.pop %v4457
        %v4459 = vmul.f32 %v4365, 1.442695
        %v4460 = vpow.pop %v4459
        %v4461 = vmul.f32 %v4366, 1.442695
        %v4462 = vpow.pop %v4461
        %v4463 = vmul.f32 %v4367, 1.442695
        %v4464 = vpow.pop %v4463
        %v4465 = vmul.f32 %v4368, 1.442695
        %v4466 = vpow.pop %v4465
        %v4467 = vmul.f32 %v4369, 1.442695
        %v4468 = vpow.pop %v4467
        %v4469 = vmul.f32 %v4370, 1.442695
        %v4470 = vpow.pop %v4469
        %v4471 = vmul.f32 %v4371, 1.442695
        %v4472 = vpow.pop %v4471
        %v4473 = vmul.f32 %v4372, 1.442695
        %v4474 = vpow.pop %v4473
        %v4475 = vmul.f32 %v4373, 1.442695
        %v4476 = vpow.pop %v4475
        %v4477 = vmul.f32 %v4374, 1.442695
        %v4478 = vpow.pop %v4477
        %v4479 = vmul.f32 %v4375, 1.442695
        %v4480 = vpow.pop %v4479
        %v4481 = vmul.f32 %v4376, 1.442695
        %v4482 = vpow.pop %v4481
        %v4483 = vmul.f32 %v4377, 1.442695
        %v4484 = vpow.pop %v4483
        %v4485 = vmul.f32 %v4378, 1.442695
        %v4486 = vpow.pop %v4485
        %v4487 = vmul.f32 %v4379, 1.442695
        %v4488 = vpow.pop %v4487
        %v4489 = vmul.f32 %v4380, 1.442695
        %v4490 = vpow.pop %v4489
        %v4491 = vmul.f32 %v4381, 1.442695
        %v4492 = vpow.pop %v4491
        %v4493 = vmul.f32 %v4382, 1.442695
        %v4494 = vpow.pop %v4493
        %v4495 = vmul.f32 %v4383, 1.442695
        %v4496 = vpow.pop %v4495
        %v4497 = vmul.f32 %v4384, 1.442695
        %v4498 = vpow.pop %v4497
        %v4499 = vmul.f32 %v4385, 1.442695
        %v4500 = vpow.pop %v4499
        %v4501 = vmul.f32 %v4386, 1.442695
        %v4502 = vpow.pop %v4501
        %v4503 = vmul.f32 %v4387, 1.442695
        %v4504 = vpow.pop %v4503
        %v4505 = vmul.f32 %v4388, 1.442695
        %v4506 = vpow.pop %v4505
        %v4507 = vmul.f32 %v4389, 1.442695
        %v4508 = vpow.pop %v4507
        %v4509 = vmul.f32 %v4390, 1.442695
        %v4510 = vpow.pop %v4509
        %v4511 = vmul.f32 %v4391, 1.442695
        %v4512 = vpow.pop %v4511
        %v4513 = vmul.f32 %v4392, 1.442695
        %v4514 = vpow.pop %v4513
        %v4515 = vmul.f32 %v4393, 1.442695
        %v4516 = vpow.pop %v4515
        %v4517 = vmul.f32 %v4394, 1.442695
        %v4518 = vpow.pop %v4517
        %v4519 = vmul.f32 %v4395, 1.442695
        %v4520 = vpow.pop %v4519
        %v4521 = vmul.f32 %v4396, 1.442695
        %v4522 = vpow.pop %v4521
        %v4523 = vmul.f32 %v4397, 1.442695
        %v4524 = vpow.pop %v4523
        %v4525 = vmul.f32 %v4398, 1.442695
        %v4526 = vpow.pop %v4525
        %v4527 = vadd.f32 %v4400, %v4404
        %v4528 = vadd.f32 %v4527, %v4408
        %v4529 = vadd.f32 %v4528, %v4412
        %v4530 = vadd.f32 %v4529, %v4416
        %v4531 = vadd.f32 %v4530, %v4420
        %v4532 = vadd.f32 %v4531, %v4424
        %v4533 = vadd.f32 %v4532, %v4428
        %v4534 = vadd.f32 %v4533, %v4432
        %v4535 = vadd.f32 %v4534, %v4436
        %v4536 = vadd.f32 %v4535, %v4440
        %v4537 = vadd.f32 %v4536, %v4444
        %v4538 = vadd.f32 %v4537, %v4448
        %v4539 = vadd.f32 %v4538, %v4452
        %v4540 = vadd.f32 %v4539, %v4456
        %v4541 = vadd.f32 %v4540, %v4460
        %v4542 = vadd.f32 %v4541, %v4464
        %v4543 = vadd.f32 %v4542, %v4468
        %v4544 = vadd.f32 %v4543, %v4472
        %v4545 = vadd.f32 %v4544, %v4476
        %v4546 = vadd.f32 %v4545, %v4480
        %v4547 = vadd.f32 %v4546, %v4484
        %v4548 = vadd.f32 %v4547, %v4488
        %v4549 = vadd.f32 %v4548, %v4492
        %v4550 = vadd.f32 %v4549, %v4496
        %v4551 = vadd.f32 %v4550, %v4500
        %v4552 = vadd.f32 %v4551, %v4504
        %v4553 = vadd.f32 %v4552, %v4508
        %v4554 = vadd.f32 %v4553, %v4512
        %v4555 = vadd.f32 %v4554, %v4516
        %v4556 = vadd.f32 %v4555, %v4520
        %v4557 = vadd.f32 %v4556, %v4524
        %v4558 = vrot.slane %v4557, 4
        %v4559 = vadd.f32 %v4557, %v4558
        %v4560 = vrot.slane %v4559, 2
        %v4561 = vadd.f32 %v4559, %v4560
        %v4562 = vrot.slane %v4561, 1
        %v4563 = vadd.f32 %v4561, %v4562
        %v4564 = vadd.f32 %v4402, %v4406
        %v4565 = vadd.f32 %v4564, %v4410
        %v4566 = vadd.f32 %v4565, %v4414
        %v4567 = vadd.f32 %v4566, %v4418
        %v4568 = vadd.f32 %v4567, %v4422
        %v4569 = vadd.f32 %v4568, %v4426
        %v4570 = vadd.f32 %v4569, %v4430
        %v4571 = vadd.f32 %v4570, %v4434
        %v4572 = vadd.f32 %v4571, %v4438
        %v4573 = vadd.f32 %v4572, %v4442
        %v4574 = vadd.f32 %v4573, %v4446
        %v4575 = vadd.f32 %v4574, %v4450
        %v4576 = vadd.f32 %v4575, %v4454
        %v4577 = vadd.f32 %v4576, %v4458
        %v4578 = vadd.f32 %v4577, %v4462
        %v4579 = vadd.f32 %v4578, %v4466
        %v4580 = vadd.f32 %v4579, %v4470
        %v4581 = vadd.f32 %v4580, %v4474
        %v4582 = vadd.f32 %v4581, %v4478
        %v4583 = vadd.f32 %v4582, %v4482
        %v4584 = vadd.f32 %v4583, %v4486
        %v4585 = vadd.f32 %v4584, %v4490
        %v4586 = vadd.f32 %v4585, %v4494
        %v4587 = vadd.f32 %v4586, %v4498
        %v4588 = vadd.f32 %v4587, %v4502
        %v4589 = vadd.f32 %v4588, %v4506
        %v4590 = vadd.f32 %v4589, %v4510
        %v4591 = vadd.f32 %v4590, %v4514
        %v4592 = vadd.f32 %v4591, %v4518
        %v4593 = vadd.f32 %v4592, %v4522
        %v4594 = vadd.f32 %v4593, %v4526
        %v4595 = vrot.slane %v4594, 4
        %v4596 = vadd.f32 %v4594, %v4595
        %v4597 = vrot.slane %v4596, 2
        %v4598 = vadd.f32 %v4596, %v4597
        %v4599 = vrot.slane %v4598, 1
        %v4600 = vadd.f32 %v4598, %v4599
        %v4601 = vrcp.pop %v4563
        %v4602 = vrcp.pop %v4600
        %v4603 = vmul.f32 %v4400, %v4601
        %v4604 = vmul.f32 %v4402, %v4602
        %v4605 = vmul.f32 %v4404, %v4601
        %v4606 = vmul.f32 %v4406, %v4602
        %v4607 = vmul.f32 %v4408, %v4601
        %v4608 = vmul.f32 %v4410, %v4602
        %v4609 = vmul.f32 %v4412, %v4601
        %v4610 = vmul.f32 %v4414, %v4602
        %v4611 = vmul.f32 %v4416, %v4601
        %v4612 = vmul.f32 %v4418, %v4602
        %v4613 = vmul.f32 %v4420, %v4601
        %v4614 = vmul.f32 %v4422, %v4602
        %v4615 = vmul.f32 %v4424, %v4601
        %v4616 = vmul.f32 %v4426, %v4602
        %v4617 = vmul.f32 %v4428, %v4601
        %v4618 = vmul.f32 %v4430, %v4602
        %v4619 = vmul.f32 %v4432, %v4601
        %v4620 = vmul.f32 %v4434, %v4602
        %v4621 = vmul.f32 %v4436, %v4601
        %v4622 = vmul.f32 %v4438, %v4602
        %v4623 = vmul.f32 %v4440, %v4601
        %v4624 = vmul.f32 %v4442, %v4602
        %v4625 = vmul.f32 %v4444, %v4601
        %v4626 = vmul.f32 %v4446, %v4602
        %v4627 = vmul.f32 %v4448, %v4601
        %v4628 = vmul.f32 %v4450, %v4602
        %v4629 = vmul.f32 %v4452, %v4601
        %v4630 = vmul.f32 %v4454, %v4602
        %v4631 = vmul.f32 %v4456, %v4601
        %v4632 = vmul.f32 %v4458, %v4602
        %v4633 = vmul.f32 %v4460, %v4601
        %v4634 = vmul.f32 %v4462, %v4602
        %v4635 = vmul.f32 %v4464, %v4601
        %v4636 = vmul.f32 %v4466, %v4602
        %v4637 = vmul.f32 %v4468, %v4601
        %v4638 = vmul.f32 %v4470, %v4602
        %v4639 = vmul.f32 %v4472, %v4601
        %v4640 = vmul.f32 %v4474, %v4602
        %v4641 = vmul.f32 %v4476, %v4601
        %v4642 = vmul.f32 %v4478, %v4602
        %v4643 = vmul.f32 %v4480, %v4601
        %v4644 = vmul.f32 %v4482, %v4602
        %v4645 = vmul.f32 %v4484, %v4601
        %v4646 = vmul.f32 %v4486, %v4602
        %v4647 = vmul.f32 %v4488, %v4601
        %v4648 = vmul.f32 %v4490, %v4602
        %v4649 = vmul.f32 %v4492, %v4601
        %v4650 = vmul.f32 %v4494, %v4602
        %v4651 = vmul.f32 %v4496, %v4601
        %v4652 = vmul.f32 %v4498, %v4602
        %v4653 = vmul.f32 %v4500, %v4601
        %v4654 = vmul.f32 %v4502, %v4602
        %v4655 = vmul.f32 %v4504, %v4601
        %v4656 = vmul.f32 %v4506, %v4602
        %v4657 = vmul.f32 %v4508, %v4601
        %v4658 = vmul.f32 %v4510, %v4602
        %v4659 = vmul.f32 %v4512, %v4601
        %v4660 = vmul.f32 %v4514, %v4602
        %v4661 = vmul.f32 %v4516, %v4601
        %v4662 = vmul.f32 %v4518, %v4602
        %v4663 = vmul.f32 %v4520, %v4601
        %v4664 = vmul.f32 %v4522, %v4602
        %v4665 = vmul.f32 %v4524, %v4601
        %v4666 = vmul.f32 %v4526, %v4602
        %v4667 = vpack.c.bf16 %v4605, %v4603
        %v4668 = vpack.c.bf16 %v4606, %v4604
        %v4669 = vpack.c.bf16 %v4609, %v4607
        %v4670 = vpack.c.bf16 %v4610, %v4608
        %v4671 = vpack.c.bf16 %v4613, %v4611
        %v4672 = vpack.c.bf16 %v4614, %v4612
        %v4673 = vpack.c.bf16 %v4617, %v4615
        %v4674 = vpack.c.bf16 %v4618, %v4616
        %v4675 = vpack.c.bf16 %v4621, %v4619
        %v4676 = vpack.c.bf16 %v4622, %v4620
        %v4677 = vpack.c.bf16 %v4625, %v4623
        %v4678 = vpack.c.bf16 %v4626, %v4624
        %v4679 = vpack.c.bf16 %v4629, %v4627
        %v4680 = vpack.c.bf16 %v4630, %v4628
        %v4681 = vpack.c.bf16 %v4633, %v4631
        %v4682 = vpack.c.bf16 %v4634, %v4632
        %v4683 = vpack.c.bf16 %v4637, %v4635
        %v4684 = vpack.c.bf16 %v4638, %v4636
        %v4685 = vpack.c.bf16 %v4641, %v4639
        %v4686 = vpack.c.bf16 %v4642, %v4640
        %v4687 = vpack.c.bf16 %v4645, %v4643
        %v4688 = vpack.c.bf16 %v4646, %v4644
        %v4689 = vpack.c.bf16 %v4649, %v4647
        %v4690 = vpack.c.bf16 %v4650, %v4648
        %v4691 = vpack.c.bf16 %v4653, %v4651
        %v4692 = vpack.c.bf16 %v4654, %v4652
        %v4693 = vpack.c.bf16 %v4657, %v4655
        %v4694 = vpack.c.bf16 %v4658, %v4656
        %v4695 = vpack.c.bf16 %v4661, %v4659
        %v4696 = vpack.c.bf16 %v4662, %v4660
        %v4697 = vpack.c.bf16 %v4665, %v4663
        %v4698 = vpack.c.bf16 %v4666, %v4664
        %4699 = vmatpush.bf16.msra.mxu0 %v4681
        %4700 = vmatpush.bf16.msra.mxu0 %v4679
        %4701 = vmatpush.bf16.msra.mxu0 %v4677
        %4702 = vmatpush.bf16.msra.mxu0 %v4675
        %4703 = vmatpush.bf16.msra.mxu0 %v4673
        %4704 = vmatpush.bf16.msra.mxu0 %v4671
        %4705 = vmatpush.bf16.msra.mxu0 %v4669
        %4706 = vmatpush.bf16.msra.mxu0 %v4667
        %4707 = vmatmul.bf16.gmra.mxu0 %v3833
        %v4708 = vpop.f32.mrf.mxu0
        %v4709 = vadd.f32 0.0, %v4708
        %v4710 = vpop.f32.mrf.mxu0
        %4711 = vdwg.mxu0
        %4712 = vmatpush.bf16.msra.mxu0 %v4697
        %4713 = vmatpush.bf16.msra.mxu0 %v4695
        %4714 = vmatpush.bf16.msra.mxu0 %v4693
        %4715 = vmatpush.bf16.msra.mxu0 %v4691
        %4716 = vmatpush.bf16.msra.mxu0 %v4689
        %4717 = vmatpush.bf16.msra.mxu0 %v4687
        %4718 = vmatpush.bf16.msra.mxu0 %v4685
        %4719 = vmatpush.bf16.msra.mxu0 %v4683
        %4720 = vmatmul.bf16.gmra.mxu0 %v3834
        %v4721 = vpop.f32.mrf.mxu0
        %v4722 = vadd.f32 %v4709, %v4721
        %v4723 = vpop.f32.mrf.mxu0
        %4724 = vdwg.mxu0
        %4725 = vmatpush.bf16.msra.mxu0 %v4682
        %4726 = vmatpush.bf16.msra.mxu0 %v4680
        %4727 = vmatpush.bf16.msra.mxu0 %v4678
        %4728 = vmatpush.bf16.msra.mxu0 %v4676
        %4729 = vmatpush.bf16.msra.mxu0 %v4674
        %4730 = vmatpush.bf16.msra.mxu0 %v4672
        %4731 = vmatpush.bf16.msra.mxu0 %v4670
        %4732 = vmatpush.bf16.msra.mxu0 %v4668
        %4733 = vmatmul.bf16.gmra.mxu0 %v3833
        %v4734 = vpop.f32.mrf.mxu0
        %v4735 = vadd.f32 0.0, %v4734
        %v4736 = vpop.f32.mrf.mxu0
        %4737 = vdwg.mxu0
        %4738 = vmatpush.bf16.msra.mxu0 %v4698
        %4739 = vmatpush.bf16.msra.mxu0 %v4696
        %4740 = vmatpush.bf16.msra.mxu0 %v4694
        %4741 = vmatpush.bf16.msra.mxu0 %v4692
        %4742 = vmatpush.bf16.msra.mxu0 %v4690
        %4743 = vmatpush.bf16.msra.mxu0 %v4688
        %4744 = vmatpush.bf16.msra.mxu0 %v4686
        %4745 = vmatpush.bf16.msra.mxu0 %v4684
        %4746 = vmatmul.bf16.gmra.mxu0 %v3834
        %v4747 = vpop.f32.mrf.mxu0
        %v4748 = vadd.f32 %v4735, %v4747
        %v4749 = vpop.f32.mrf.mxu0
        %4750 = vdwg.mxu0
        %4751 = vst [vmem:[#allocation3 + $0x30] sm:$0xff] %v4722
        %4752 = vst [vmem:[#allocation3 + $0x38] sm:$0xff] %v4748
        %v4753 = vld [vmem:[%s578] sm:$0xf]
        %v4754 = vld [vmem:[%s578 + $0x4] sm:$0xf]
        %v4755 = vld [vmem:[%s578 + $0x8] sm:$0xf]
        %v4756 = vld [vmem:[%s578 + $0xc] sm:$0xf]
        %v4757 = vld [vmem:[#allocation3] sm:$0xff]
        %v4758 = vld [vmem:[#allocation3 + $0x8] sm:$0xff]
        %v4759 = vld [vmem:[#allocation3 + $0x10] sm:$0xff]
        %v4760 = vld [vmem:[#allocation3 + $0x18] sm:$0xff]
        %v4761 = vld [vmem:[#allocation3 + $0x20] sm:$0xff]
        %v4762 = vld [vmem:[#allocation3 + $0x28] sm:$0xff]
        %v4763 = vld [vmem:[#allocation3 + $0x30] sm:$0xff]
        %v4764 = vld [vmem:[#allocation3 + $0x38] sm:$0xff]
        %v4765 = vpack.c.bf16 %v4759, %v4757
        %v4766 = vpack.c.bf16 %v4760, %v4758
        %v4767 = vpack.c.bf16 %v4763, %v4761
        %v4768 = vpack.c.bf16 %v4764, %v4762
        %v4769 = vld [vmem:[%s583] sm:$0xff]
        %v4770 = vld [vmem:[%s583 + $0x8] sm:$0xff]
        %v4771 = vld [vmem:[%s583 + $0x10] sm:$0xff]
        %v4772 = vld [vmem:[%s583 + $0x18] sm:$0xff]
        %4774 = vset.pattern.permute.xlu0 0
        %4775 = vperm.xlu0 %4774, %v4769
        %v4776 = vpop.permute.xlu0 %4775
        %4779 = vset.pattern.permute.xlu0 0
        %4780 = vperm.xlu0 %4779, %v4770
        %v4781 = vpop.permute.xlu0 %4780
        %4784 = vset.pattern.permute.xlu0 0
        %4785 = vperm.xlu0 %4784, %v4771
        %v4786 = vpop.permute.xlu0 %4785
        %4789 = vset.pattern.permute.xlu0 0
        %4790 = vperm.xlu0 %4789, %v4772
        %v4791 = vpop.permute.xlu0 %4790
        %v4797 = vunpack.c.l.b16 %v4753
        %v4798 = vunpack.c.l.b16 %v4754
        %v4799 = vunpack.c.l.b16 %v4755
        %v4800 = vunpack.c.l.b16 %v4756
        %v4801 = vpack.c.b16 %v4798, %v4797
        %v4802 = vpack.c.b16 %v4800, %v4799
        %v4804 = vsel %vm702, %v4801, 0
        %v4807 = vsel %vm702, %v4802, 0
        %4809 = vmatpush.bf16.msra.mxu0 0
        %4810 = vmatpush.bf16.msra.mxu0 0
        %4811 = vmatpush.bf16.msra.mxu0 0
        %4812 = vmatpush.bf16.msra.mxu0 0
        %4813 = vmatpush.bf16.msra.mxu0 0
        %4814 = vmatpush.bf16.msra.mxu0 0
        %4815 = vmatpush.bf16.msra.mxu0 %v4767
        %4816 = vmatpush.bf16.msra.mxu0 %v4765
        %4817 = vmatmul.bf16.gmra.mxu0 %v4804
        %v4818 = vpop.f32.mrf.mxu0
        %v4819 = vadd.f32 %v4776, %v4818
        %v4820 = vpop.f32.mrf.mxu0
        %v4821 = vadd.f32 %v4781, %v4820
        %4822 = vmatmul.bf16.gmra.mxu0 %v4807
        %v4823 = vpop.f32.mrf.mxu0
        %v4824 = vadd.f32 %v4786, %v4823
        %v4825 = vpop.f32.mrf.mxu0
        %v4826 = vadd.f32 %v4791, %v4825
        %4827 = vdwg.mxu0
        %4828 = vmatpush.bf16.msra.mxu0 0
        %4829 = vmatpush.bf16.msra.mxu0 0
        %4830 = vmatpush.bf16.msra.mxu0 0
        %4831 = vmatpush.bf16.msra.mxu0 0
        %4832 = vmatpush.bf16.msra.mxu0 0
        %4833 = vmatpush.bf16.msra.mxu0 0
        %4834 = vmatpush.bf16.msra.mxu0 %v4768
        %4835 = vmatpush.bf16.msra.mxu0 %v4766
        %4836 = vmatmul.bf16.gmra.mxu0 %v4804
        %v4837 = vpop.f32.mrf.mxu0
        %v4838 = vadd.f32 %v4776, %v4837
        %v4839 = vpop.f32.mrf.mxu0
        %v4840 = vadd.f32 %v4781, %v4839
        %4841 = vmatmul.bf16.gmra.mxu0 %v4807
        %v4842 = vpop.f32.mrf.mxu0
        %v4843 = vadd.f32 %v4786, %v4842
        %v4844 = vpop.f32.mrf.mxu0
        %v4845 = vadd.f32 %v4791, %v4844
        %4846 = vdwg.mxu0
        %v4847 = vadd.f32 %v620, %v4819
        %v4848 = vadd.f32 %v621, %v4838
        %v4849 = vadd.f32 %v622, %v4821
        %v4850 = vadd.f32 %v623, %v4840
        %v4851 = vadd.f32 %v624, %v4824
        %v4852 = vadd.f32 %v625, %v4843
        %v4853 = vadd.f32 %v626, %v4826
        %v4854 = vadd.f32 %v627, %v4845
        %v4855 = vmul.f32 %v4847, %v4847
        %v4856 = vmul.f32 %v4848, %v4848
        %v4857 = vmul.f32 %v4849, %v4849
        %v4858 = vmul.f32 %v4850, %v4850
        %v4859 = vmul.f32 %v4851, %v4851
        %v4860 = vmul.f32 %v4852, %v4852
        %v4861 = vmul.f32 %v4853, %v4853
        %v4862 = vmul.f32 %v4854, %v4854
        %v4863 = vadd.f32 %v4855, %v4857
        %v4864 = vadd.f32 %v4863, %v4859
        %v4865 = vadd.f32 %v4864, %v4861
        %v4866 = vrot.slane %v4865, 4
        %v4867 = vadd.f32 %v4865, %v4866
        %v4868 = vrot.slane %v4867, 2
        %v4869 = vadd.f32 %v4867, %v4868
        %v4870 = vrot.slane %v4869, 1
        %v4871 = vadd.f32 %v4869, %v4870
        %v4872 = vadd.f32 %v4856, %v4858
        %v4873 = vadd.f32 %v4872, %v4860
        %v4874 = vadd.f32 %v4873, %v4862
        %v4875 = vrot.slane %v4874, 4
        %v4876 = vadd.f32 %v4874, %v4875
        %v4877 = vrot.slane %v4876, 2
        %v4878 = vadd.f32 %v4876, %v4877
        %v4879 = vrot.slane %v4878, 1
        %v4880 = vadd.f32 %v4878, %v4879
        %v4881 = vmax.f32 %v4871, 1e-24
        %v4882 = vmax.f32 %v4880, 1e-24
        %v4883 = vrsqrt.pop %v4881
        %v4884 = vmul.f32 %v4883, %v4881
        %v4885 = vmul.f32 %v4884, %v4883
        %v4886 = vmul.f32 0.5, %v4885
        %v4887 = vsub.f32 1.5, %v4886
        %v4888 = vmul.f32 %v4883, %v4887
        %vm4889 = vweird.f32 %v4881
        %vm4890 = vweird.f32 %v4883
        %vm4891 = vmor %vm4889, %vm4890
        %v4892 = vsel %vm4891, %v4883, %v4888
        %v4893 = vrsqrt.pop %v4882
        %v4894 = vmul.f32 %v4893, %v4882
        %v4895 = vmul.f32 %v4894, %v4893
        %v4896 = vmul.f32 0.5, %v4895
        %v4897 = vsub.f32 1.5, %v4896
        %v4898 = vmul.f32 %v4893, %v4897
        %vm4899 = vweird.f32 %v4882
        %vm4900 = vweird.f32 %v4893
        %vm4901 = vmor %vm4899, %vm4900
        %v4902 = vsel %vm4901, %v4893, %v4898
        %v4903 = vmul.f32 %v4847, %v4892
        %v4904 = vmul.f32 %v4848, %v4902
        %v4905 = vmul.f32 %v4849, %v4892
        %v4906 = vmul.f32 %v4850, %v4902
        %v4907 = vmul.f32 %v4851, %v4892
        %v4908 = vmul.f32 %v4852, %v4902
        %v4909 = vmul.f32 %v4853, %v4892
        %v4910 = vmul.f32 %v4854, %v4902
        %v4911 = vpack.c.bf16 %v4905, %v4903
        %v4912 = vpack.c.bf16 %v4906, %v4904
        %v4913 = vpack.c.bf16 %v4909, %v4907
        %v4914 = vpack.c.bf16 %v4910, %v4908
        %v4915 = vld [vmem:[%s588] sm:$0xf]
        %v4916 = vld [vmem:[%s588 + $0x4] sm:$0xf]
        %v4917 = vld [vmem:[%s588 + $0x8] sm:$0xf]
        %v4918 = vld [vmem:[%s588 + $0xc] sm:$0xf]
        %v4919 = vld [vmem:[%s588 + $0x10] sm:$0xf]
        %v4920 = vld [vmem:[%s588 + $0x14] sm:$0xf]
        %v4921 = vld [vmem:[%s588 + $0x18] sm:$0xf]
        %v4922 = vld [vmem:[%s588 + $0x1c] sm:$0xf]
        %v4923 = vld [vmem:[%s588 + $0x20] sm:$0xf]
        %v4924 = vld [vmem:[%s588 + $0x24] sm:$0xf]
        %v4925 = vld [vmem:[%s588 + $0x28] sm:$0xf]
        %v4926 = vld [vmem:[%s588 + $0x2c] sm:$0xf]
        %v4927 = vld [vmem:[%s588 + $0x30] sm:$0xf]
        %v4928 = vld [vmem:[%s588 + $0x34] sm:$0xf]
        %v4929 = vld [vmem:[%s588 + $0x38] sm:$0xf]
        %v4930 = vld [vmem:[%s588 + $0x3c] sm:$0xf]
        %v4931 = vld [vmem:[%s593] sm:$0xff]
        %v4932 = vld [vmem:[%s593 + $0x8] sm:$0xff]
        %v4933 = vld [vmem:[%s593 + $0x10] sm:$0xff]
        %v4934 = vld [vmem:[%s593 + $0x18] sm:$0xff]
        %v4935 = vld [vmem:[%s593 + $0x20] sm:$0xff]
        %v4936 = vld [vmem:[%s593 + $0x28] sm:$0xff]
        %v4937 = vld [vmem:[%s593 + $0x30] sm:$0xff]
        %v4938 = vld [vmem:[%s593 + $0x38] sm:$0xff]
        %v4939 = vld [vmem:[%s593 + $0x40] sm:$0xff]
        %v4940 = vld [vmem:[%s593 + $0x48] sm:$0xff]
        %v4941 = vld [vmem:[%s593 + $0x50] sm:$0xff]
        %v4942 = vld [vmem:[%s593 + $0x58] sm:$0xff]
        %v4943 = vld [vmem:[%s593 + $0x60] sm:$0xff]
        %v4944 = vld [vmem:[%s593 + $0x68] sm:$0xff]
        %v4945 = vld [vmem:[%s593 + $0x70] sm:$0xff]
        %v4946 = vld [vmem:[%s593 + $0x78] sm:$0xff]
        %4948 = vset.pattern.permute.xlu0 0
        %4949 = vperm.xlu0 %4948, %v4931
        %v4950 = vpop.permute.xlu0 %4949
        %4953 = vset.pattern.permute.xlu0 0
        %4954 = vperm.xlu0 %4953, %v4932
        %v4955 = vpop.permute.xlu0 %4954
        %4958 = vset.pattern.permute.xlu0 0
        %4959 = vperm.xlu0 %4958, %v4933
        %v4960 = vpop.permute.xlu0 %4959
        %4963 = vset.pattern.permute.xlu0 0
        %4964 = vperm.xlu0 %4963, %v4934
        %v4965 = vpop.permute.xlu0 %4964
        %4968 = vset.pattern.permute.xlu0 0
        %4969 = vperm.xlu0 %4968, %v4935
        %v4970 = vpop.permute.xlu0 %4969
        %4973 = vset.pattern.permute.xlu0 0
        %4974 = vperm.xlu0 %4973, %v4936
        %v4975 = vpop.permute.xlu0 %4974
        %4978 = vset.pattern.permute.xlu0 0
        %4979 = vperm.xlu0 %4978, %v4937
        %v4980 = vpop.permute.xlu0 %4979
        %4983 = vset.pattern.permute.xlu0 0
        %4984 = vperm.xlu0 %4983, %v4938
        %v4985 = vpop.permute.xlu0 %4984
        %4988 = vset.pattern.permute.xlu0 0
        %4989 = vperm.xlu0 %4988, %v4939
        %v4990 = vpop.permute.xlu0 %4989
        %4993 = vset.pattern.permute.xlu0 0
        %4994 = vperm.xlu0 %4993, %v4940
        %v4995 = vpop.permute.xlu0 %4994
        %4998 = vset.pattern.permute.xlu0 0
        %4999 = vperm.xlu0 %4998, %v4941
        %v5000 = vpop.permute.xlu0 %4999
        %5003 = vset.pattern.permute.xlu0 0
        %5004 = vperm.xlu0 %5003, %v4942
        %v5005 = vpop.permute.xlu0 %5004
        %5008 = vset.pattern.permute.xlu0 0
        %5009 = vperm.xlu0 %5008, %v4943
        %v5010 = vpop.permute.xlu0 %5009
        %5013 = vset.pattern.permute.xlu0 0
        %5014 = vperm.xlu0 %5013, %v4944
        %v5015 = vpop.permute.xlu0 %5014
        %5018 = vset.pattern.permute.xlu0 0
        %5019 = vperm.xlu0 %5018, %v4945
        %v5020 = vpop.permute.xlu0 %5019
        %5023 = vset.pattern.permute.xlu0 0
        %5024 = vperm.xlu0 %5023, %v4946
        %v5025 = vpop.permute.xlu0 %5024
        %v5043 = vunpack.c.l.b16 %v4915
        %v5044 = vunpack.c.l.b16 %v4916
        %v5045 = vunpack.c.l.b16 %v4917
        %v5046 = vunpack.c.l.b16 %v4918
        %v5047 = vunpack.c.l.b16 %v4919
        %v5048 = vunpack.c.l.b16 %v4920
        %v5049 = vunpack.c.l.b16 %v4921
        %v5050 = vunpack.c.l.b16 %v4922
        %v5051 = vunpack.c.l.b16 %v4923
        %v5052 = vunpack.c.l.b16 %v4924
        %v5053 = vunpack.c.l.b16 %v4925
        %v5054 = vunpack.c.l.b16 %v4926
        %v5055 = vunpack.c.l.b16 %v4927
        %v5056 = vunpack.c.l.b16 %v4928
        %v5057 = vunpack.c.l.b16 %v4929
        %v5058 = vunpack.c.l.b16 %v4930
        %v5059 = vpack.c.b16 %v5044, %v5043
        %v5060 = vpack.c.b16 %v5046, %v5045
        %v5061 = vpack.c.b16 %v5048, %v5047
        %v5062 = vpack.c.b16 %v5050, %v5049
        %v5063 = vpack.c.b16 %v5052, %v5051
        %v5064 = vpack.c.b16 %v5054, %v5053
        %v5065 = vpack.c.b16 %v5056, %v5055
        %v5066 = vpack.c.b16 %v5058, %v5057
        %v5068 = vsel %vm702, %v5059, 0
        %v5071 = vsel %vm702, %v5060, 0
        %v5074 = vsel %vm702, %v5061, 0
        %v5077 = vsel %vm702, %v5062, 0
        %v5080 = vsel %vm702, %v5063, 0
        %v5083 = vsel %vm702, %v5064, 0
        %v5086 = vsel %vm702, %v5065, 0
        %v5089 = vsel %vm702, %v5066, 0
        %5091 = vmatpush.bf16.msra.mxu0 0
        %5092 = vmatpush.bf16.msra.mxu0 0
        %5093 = vmatpush.bf16.msra.mxu0 0
        %5094 = vmatpush.bf16.msra.mxu0 0
        %5095 = vmatpush.bf16.msra.mxu0 0
        %5096 = vmatpush.bf16.msra.mxu0 0
        %5097 = vmatpush.bf16.msra.mxu0 %v4913
        %5098 = vmatpush.bf16.msra.mxu0 %v4911
        %5099 = vmatmul.bf16.gmra.mxu0 %v5068
        %v5100 = vpop.f32.mrf.mxu0
        %v5101 = vadd.f32 %v4950, %v5100
        %v5102 = vpop.f32.mrf.mxu0
        %v5103 = vadd.f32 %v4955, %v5102
        %5104 = vmatmul.bf16.gmra.mxu0 %v5071
        %v5105 = vpop.f32.mrf.mxu0
        %v5106 = vadd.f32 %v4960, %v5105
        %v5107 = vpop.f32.mrf.mxu0
        %v5108 = vadd.f32 %v4965, %v5107
        %5109 = vmatmul.bf16.gmra.mxu0 %v5074
        %v5110 = vpop.f32.mrf.mxu0
        %v5111 = vadd.f32 %v4970, %v5110
        %v5112 = vpop.f32.mrf.mxu0
        %v5113 = vadd.f32 %v4975, %v5112
        %5114 = vmatmul.bf16.gmra.mxu0 %v5077
        %v5115 = vpop.f32.mrf.mxu0
        %v5116 = vadd.f32 %v4980, %v5115
        %v5117 = vpop.f32.mrf.mxu0
        %v5118 = vadd.f32 %v4985, %v5117
        %5119 = vmatmul.bf16.gmra.mxu0 %v5080
        %v5120 = vpop.f32.mrf.mxu0
        %v5121 = vadd.f32 %v4990, %v5120
        %v5122 = vpop.f32.mrf.mxu0
        %v5123 = vadd.f32 %v4995, %v5122
        %5124 = vmatmul.bf16.gmra.mxu0 %v5083
        %v5125 = vpop.f32.mrf.mxu0
        %v5126 = vadd.f32 %v5000, %v5125
        %v5127 = vpop.f32.mrf.mxu0
        %v5128 = vadd.f32 %v5005, %v5127
        %5129 = vmatmul.bf16.gmra.mxu0 %v5086
        %v5130 = vpop.f32.mrf.mxu0
        %v5131 = vadd.f32 %v5010, %v5130
        %v5132 = vpop.f32.mrf.mxu0
        %v5133 = vadd.f32 %v5015, %v5132
        %5134 = vmatmul.bf16.gmra.mxu0 %v5089
        %v5135 = vpop.f32.mrf.mxu0
        %v5136 = vadd.f32 %v5020, %v5135
        %v5137 = vpop.f32.mrf.mxu0
        %v5138 = vadd.f32 %v5025, %v5137
        %5139 = vdwg.mxu0
        %5140 = vmatpush.bf16.msra.mxu0 0
        %5141 = vmatpush.bf16.msra.mxu0 0
        %5142 = vmatpush.bf16.msra.mxu0 0
        %5143 = vmatpush.bf16.msra.mxu0 0
        %5144 = vmatpush.bf16.msra.mxu0 0
        %5145 = vmatpush.bf16.msra.mxu0 0
        %5146 = vmatpush.bf16.msra.mxu0 %v4914
        %5147 = vmatpush.bf16.msra.mxu0 %v4912
        %5148 = vmatmul.bf16.gmra.mxu0 %v5068
        %v5149 = vpop.f32.mrf.mxu0
        %v5150 = vadd.f32 %v4950, %v5149
        %v5151 = vpop.f32.mrf.mxu0
        %v5152 = vadd.f32 %v4955, %v5151
        %5153 = vmatmul.bf16.gmra.mxu0 %v5071
        %v5154 = vpop.f32.mrf.mxu0
        %v5155 = vadd.f32 %v4960, %v5154
        %v5156 = vpop.f32.mrf.mxu0
        %v5157 = vadd.f32 %v4965, %v5156
        %5158 = vmatmul.bf16.gmra.mxu0 %v5074
        %v5159 = vpop.f32.mrf.mxu0
        %v5160 = vadd.f32 %v4970, %v5159
        %v5161 = vpop.f32.mrf.mxu0
        %v5162 = vadd.f32 %v4975, %v5161
        %5163 = vmatmul.bf16.gmra.mxu0 %v5077
        %v5164 = vpop.f32.mrf.mxu0
        %v5165 = vadd.f32 %v4980, %v5164
        %v5166 = vpop.f32.mrf.mxu0
        %v5167 = vadd.f32 %v4985, %v5166
        %5168 = vmatmul.bf16.gmra.mxu0 %v5080
        %v5169 = vpop.f32.mrf.mxu0
        %v5170 = vadd.f32 %v4990, %v5169
        %v5171 = vpop.f32.mrf.mxu0
        %v5172 = vadd.f32 %v4995, %v5171
        %5173 = vmatmul.bf16.gmra.mxu0 %v5083
        %v5174 = vpop.f32.mrf.mxu0
        %v5175 = vadd.f32 %v5000, %v5174
        %v5176 = vpop.f32.mrf.mxu0
        %v5177 = vadd.f32 %v5005, %v5176
        %5178 = vmatmul.bf16.gmra.mxu0 %v5086
        %v5179 = vpop.f32.mrf.mxu0
        %v5180 = vadd.f32 %v5010, %v5179
        %v5181 = vpop.f32.mrf.mxu0
        %v5182 = vadd.f32 %v5015, %v5181
        %5183 = vmatmul.bf16.gmra.mxu0 %v5089
        %v5184 = vpop.f32.mrf.mxu0
        %v5185 = vadd.f32 %v5020, %v5184
        %v5186 = vpop.f32.mrf.mxu0
        %v5187 = vadd.f32 %v5025, %v5186
        %5188 = vdwg.mxu0
        %v5189 = vmul.f32 %v5101, 0.70710677
        %v5190 = vmul.f32 %v5150, 0.70710677
        %v5191 = vmul.f32 %v5103, 0.70710677
        %v5192 = vmul.f32 %v5152, 0.70710677
        %v5193 = vmul.f32 %v5106, 0.70710677
        %v5194 = vmul.f32 %v5155, 0.70710677
        %v5195 = vmul.f32 %v5108, 0.70710677
        %v5196 = vmul.f32 %v5157, 0.70710677
        %v5197 = vmul.f32 %v5111, 0.70710677
        %v5198 = vmul.f32 %v5160, 0.70710677
        %v5199 = vmul.f32 %v5113, 0.70710677
        %v5200 = vmul.f32 %v5162, 0.70710677
        %v5201 = vmul.f32 %v5116, 0.70710677
        %v5202 = vmul.f32 %v5165, 0.70710677
        %v5203 = vmul.f32 %v5118, 0.70710677
        %v5204 = vmul.f32 %v5167, 0.70710677
        %v5205 = vmul.f32 %v5121, 0.70710677
        %v5206 = vmul.f32 %v5170, 0.70710677
        %v5207 = vmul.f32 %v5123, 0.70710677
        %v5208 = vmul.f32 %v5172, 0.70710677
        %v5209 = vmul.f32 %v5126, 0.70710677
        %v5210 = vmul.f32 %v5175, 0.70710677
        %v5211 = vmul.f32 %v5128, 0.70710677
        %v5212 = vmul.f32 %v5177, 0.70710677
        %v5213 = vmul.f32 %v5131, 0.70710677
        %v5214 = vmul.f32 %v5180, 0.70710677
        %v5215 = vmul.f32 %v5133, 0.70710677
        %v5216 = vmul.f32 %v5182, 0.70710677
        %v5217 = vmul.f32 %v5136, 0.70710677
        %v5218 = vmul.f32 %v5185, 0.70710677
        %v5219 = vmul.f32 %v5138, 0.70710677
        %v5220 = vmul.f32 %v5187, 0.70710677
        %v5221 = vand.u32 2147483647, %v5189
        %v5222 = vand.u32 2147483647, %v5190
        %v5223 = vand.u32 2147483647, %v5191
        %v5224 = vand.u32 2147483647, %v5192
        %v5225 = vand.u32 2147483647, %v5193
        %v5226 = vand.u32 2147483647, %v5194
        %v5227 = vand.u32 2147483647, %v5195
        %v5228 = vand.u32 2147483647, %v5196
        %v5229 = vand.u32 2147483647, %v5197
        %v5230 = vand.u32 2147483647, %v5198
        %v5231 = vand.u32 2147483647, %v5199
        %v5232 = vand.u32 2147483647, %v5200
        %v5233 = vand.u32 2147483647, %v5201
        %v5234 = vand.u32 2147483647, %v5202
        %v5235 = vand.u32 2147483647, %v5203
        %v5236 = vand.u32 2147483647, %v5204
        %v5237 = vand.u32 2147483647, %v5205
        %v5238 = vand.u32 2147483647, %v5206
        %v5239 = vand.u32 2147483647, %v5207
        %v5240 = vand.u32 2147483647, %v5208
        %v5241 = vand.u32 2147483647, %v5209
        %v5242 = vand.u32 2147483647, %v5210
        %v5243 = vand.u32 2147483647, %v5211
        %v5244 = vand.u32 2147483647, %v5212
        %v5245 = vand.u32 2147483647, %v5213
        %v5246 = vand.u32 2147483647, %v5214
        %v5247 = vand.u32 2147483647, %v5215
        %v5248 = vand.u32 2147483647, %v5216
        %v5249 = vand.u32 2147483647, %v5217
        %v5250 = vand.u32 2147483647, %v5218
        %v5251 = vand.u32 2147483647, %v5219
        %v5252 = vand.u32 2147483647, %v5220
        %v5253 = vmul.f32 %v5221, 0.3275911
        %v5254 = vmul.f32 %v5222, 0.3275911
        %v5255 = vmul.f32 %v5223, 0.3275911
        %v5256 = vmul.f32 %v5224, 0.3275911
        %v5257 = vmul.f32 %v5225, 0.3275911
        %v5258 = vmul.f32 %v5226, 0.3275911
        %v5259 = vmul.f32 %v5227, 0.3275911
        %v5260 = vmul.f32 %v5228, 0.3275911
        %v5261 = vmul.f32 %v5229, 0.3275911
        %v5262 = vmul.f32 %v5230, 0.3275911
        %v5263 = vmul.f32 %v5231, 0.3275911
        %v5264 = vmul.f32 %v5232, 0.3275911
        %v5265 = vmul.f32 %v5233, 0.3275911
        %v5266 = vmul.f32 %v5234, 0.3275911
        %v5267 = vmul.f32 %v5235, 0.3275911
        %v5268 = vmul.f32 %v5236, 0.3275911
        %v5269 = vmul.f32 %v5237, 0.3275911
        %v5270 = vmul.f32 %v5238, 0.3275911
        %v5271 = vmul.f32 %v5239, 0.3275911
        %v5272 = vmul.f32 %v5240, 0.3275911
        %v5273 = vmul.f32 %v5241, 0.3275911
        %v5274 = vmul.f32 %v5242, 0.3275911
        %v5275 = vmul.f32 %v5243, 0.3275911
        %v5276 = vmul.f32 %v5244, 0.3275911
        %v5277 = vmul.f32 %v5245, 0.3275911
        %v5278 = vmul.f32 %v5246, 0.3275911
        %v5279 = vmul.f32 %v5247, 0.3275911
        %v5280 = vmul.f32 %v5248, 0.3275911
        %v5281 = vmul.f32 %v5249, 0.3275911
        %v5282 = vmul.f32 %v5250, 0.3275911
        %v5283 = vmul.f32 %v5251, 0.3275911
        %v5284 = vmul.f32 %v5252, 0.3275911
        %v5285 = vadd.f32 %v5253, 1.0
        %v5286 = vadd.f32 %v5254, 1.0
        %v5287 = vadd.f32 %v5255, 1.0
        %v5288 = vadd.f32 %v5256, 1.0
        %v5289 = vadd.f32 %v5257, 1.0
        %v5290 = vadd.f32 %v5258, 1.0
        %v5291 = vadd.f32 %v5259, 1.0
        %v5292 = vadd.f32 %v5260, 1.0
        %v5293 = vadd.f32 %v5261, 1.0
        %v5294 = vadd.f32 %v5262, 1.0
        %v5295 = vadd.f32 %v5263, 1.0
        %v5296 = vadd.f32 %v5264, 1.0
        %v5297 = vadd.f32 %v5265, 1.0
        %v5298 = vadd.f32 %v5266, 1.0
        %v5299 = vadd.f32 %v5267, 1.0
        %v5300 = vadd.f32 %v5268, 1.0
        %v5301 = vadd.f32 %v5269, 1.0
        %v5302 = vadd.f32 %v5270, 1.0
        %v5303 = vadd.f32 %v5271, 1.0
        %v5304 = vadd.f32 %v5272, 1.0
        %v5305 = vadd.f32 %v5273, 1.0
        %v5306 = vadd.f32 %v5274, 1.0
        %v5307 = vadd.f32 %v5275, 1.0
        %v5308 = vadd.f32 %v5276, 1.0
        %v5309 = vadd.f32 %v5277, 1.0
        %v5310 = vadd.f32 %v5278, 1.0
        %v5311 = vadd.f32 %v5279, 1.0
        %v5312 = vadd.f32 %v5280, 1.0
        %v5313 = vadd.f32 %v5281, 1.0
        %v5314 = vadd.f32 %v5282, 1.0
        %v5315 = vadd.f32 %v5283, 1.0
        %v5316 = vadd.f32 %v5284, 1.0
        %v5317 = vrcp.pop %v5285
        %v5318 = vrcp.pop %v5286
        %v5319 = vrcp.pop %v5287
        %v5320 = vrcp.pop %v5288
        %v5321 = vrcp.pop %v5289
        %v5322 = vrcp.pop %v5290
        %v5323 = vrcp.pop %v5291
        %v5324 = vrcp.pop %v5292
        %v5325 = vrcp.pop %v5293
        %v5326 = vrcp.pop %v5294
        %v5327 = vrcp.pop %v5295
        %v5328 = vrcp.pop %v5296
        %v5329 = vrcp.pop %v5297
        %v5330 = vrcp.pop %v5298
        %v5331 = vrcp.pop %v5299
        %v5332 = vrcp.pop %v5300
        %v5333 = vrcp.pop %v5301
        %v5334 = vrcp.pop %v5302
        %v5335 = vrcp.pop %v5303
        %v5336 = vrcp.pop %v5304
        %v5337 = vrcp.pop %v5305
        %v5338 = vrcp.pop %v5306
        %v5339 = vrcp.pop %v5307
        %v5340 = vrcp.pop %v5308
        %v5341 = vrcp.pop %v5309
        %v5342 = vrcp.pop %v5310
        %v5343 = vrcp.pop %v5311
        %v5344 = vrcp.pop %v5312
        %v5345 = vrcp.pop %v5313
        %v5346 = vrcp.pop %v5314
        %v5347 = vrcp.pop %v5315
        %v5348 = vrcp.pop %v5316
        %v5349 = vmul.f32 %v5317, 1.0614054
        %v5350 = vmul.f32 %v5318, 1.0614054
        %v5351 = vmul.f32 %v5319, 1.0614054
        %v5352 = vmul.f32 %v5320, 1.0614054
        %v5353 = vmul.f32 %v5321, 1.0614054
        %v5354 = vmul.f32 %v5322, 1.0614054
        %v5355 = vmul.f32 %v5323, 1.0614054
        %v5356 = vmul.f32 %v5324, 1.0614054
        %v5357 = vmul.f32 %v5325, 1.0614054
        %v5358 = vmul.f32 %v5326, 1.0614054
        %v5359 = vmul.f32 %v5327, 1.0614054
        %v5360 = vmul.f32 %v5328, 1.0614054
        %v5361 = vmul.f32 %v5329, 1.0614054
        %v5362 = vmul.f32 %v5330, 1.0614054
        %v5363 = vmul.f32 %v5331, 1.0614054
        %v5364 = vmul.f32 %v5332, 1.0614054
        %v5365 = vmul.f32 %v5333, 1.0614054
        %v5366 = vmul.f32 %v5334, 1.0614054
        %v5367 = vmul.f32 %v5335, 1.0614054
        %v5368 = vmul.f32 %v5336, 1.0614054
        %v5369 = vmul.f32 %v5337, 1.0614054
        %v5370 = vmul.f32 %v5338, 1.0614054
        %v5371 = vmul.f32 %v5339, 1.0614054
        %v5372 = vmul.f32 %v5340, 1.0614054
        %v5373 = vmul.f32 %v5341, 1.0614054
        %v5374 = vmul.f32 %v5342, 1.0614054
        %v5375 = vmul.f32 %v5343, 1.0614054
        %v5376 = vmul.f32 %v5344, 1.0614054
        %v5377 = vmul.f32 %v5345, 1.0614054
        %v5378 = vmul.f32 %v5346, 1.0614054
        %v5379 = vmul.f32 %v5347, 1.0614054
        %v5380 = vmul.f32 %v5348, 1.0614054
        %v5381 = vadd.f32 %v5349, -1.4531521
        %v5382 = vadd.f32 %v5350, -1.4531521
        %v5383 = vadd.f32 %v5351, -1.4531521
        %v5384 = vadd.f32 %v5352, -1.4531521
        %v5385 = vadd.f32 %v5353, -1.4531521
        %v5386 = vadd.f32 %v5354, -1.4531521
        %v5387 = vadd.f32 %v5355, -1.4531521
        %v5388 = vadd.f32 %v5356, -1.4531521
        %v5389 = vadd.f32 %v5357, -1.4531521
        %v5390 = vadd.f32 %v5358, -1.4531521
        %v5391 = vadd.f32 %v5359, -1.4531521
        %v5392 = vadd.f32 %v5360, -1.4531521
        %v5393 = vadd.f32 %v5361, -1.4531521
        %v5394 = vadd.f32 %v5362, -1.4531521
        %v5395 = vadd.f32 %v5363, -1.4531521
        %v5396 = vadd.f32 %v5364, -1.4531521
        %v5397 = vadd.f32 %v5365, -1.4531521
        %v5398 = vadd.f32 %v5366, -1.4531521
        %v5399 = vadd.f32 %v5367, -1.4531521
        %v5400 = vadd.f32 %v5368, -1.4531521
        %v5401 = vadd.f32 %v5369, -1.4531521
        %v5402 = vadd.f32 %v5370, -1.4531521
        %v5403 = vadd.f32 %v5371, -1.4531521
        %v5404 = vadd.f32 %v5372, -1.4531521
        %v5405 = vadd.f32 %v5373, -1.4531521
        %v5406 = vadd.f32 %v5374, -1.4531521
        %v5407 = vadd.f32 %v5375, -1.4531521
        %v5408 = vadd.f32 %v5376, -1.4531521
        %v5409 = vadd.f32 %v5377, -1.4531521
        %v5410 = vadd.f32 %v5378, -1.4531521
        %v5411 = vadd.f32 %v5379, -1.4531521
        %v5412 = vadd.f32 %v5380, -1.4531521
        %v5413 = vmul.f32 %v5381, %v5317
        %v5414 = vmul.f32 %v5382, %v5318
        %v5415 = vmul.f32 %v5383, %v5319
        %v5416 = vmul.f32 %v5384, %v5320
        %v5417 = vmul.f32 %v5385, %v5321
        %v5418 = vmul.f32 %v5386, %v5322
        %v5419 = vmul.f32 %v5387, %v5323
        %v5420 = vmul.f32 %v5388, %v5324
        %v5421 = vmul.f32 %v5389, %v5325
        %v5422 = vmul.f32 %v5390, %v5326
        %v5423 = vmul.f32 %v5391, %v5327
        %v5424 = vmul.f32 %v5392, %v5328
        %v5425 = vmul.f32 %v5393, %v5329
        %v5426 = vmul.f32 %v5394, %v5330
        %v5427 = vmul.f32 %v5395, %v5331
        %v5428 = vmul.f32 %v5396, %v5332
        %v5429 = vmul.f32 %v5397, %v5333
        %v5430 = vmul.f32 %v5398, %v5334
        %v5431 = vmul.f32 %v5399, %v5335
        %v5432 = vmul.f32 %v5400, %v5336
        %v5433 = vmul.f32 %v5401, %v5337
        %v5434 = vmul.f32 %v5402, %v5338
        %v5435 = vmul.f32 %v5403, %v5339
        %v5436 = vmul.f32 %v5404, %v5340
        %v5437 = vmul.f32 %v5405, %v5341
        %v5438 = vmul.f32 %v5406, %v5342
        %v5439 = vmul.f32 %v5407, %v5343
        %v5440 = vmul.f32 %v5408, %v5344
        %v5441 = vmul.f32 %v5409, %v5345
        %v5442 = vmul.f32 %v5410, %v5346
        %v5443 = vmul.f32 %v5411, %v5347
        %v5444 = vmul.f32 %v5412, %v5348
        %v5445 = vadd.f32 %v5413, 1.4214138
        %v5446 = vadd.f32 %v5414, 1.4214138
        %v5447 = vadd.f32 %v5415, 1.4214138
        %v5448 = vadd.f32 %v5416, 1.4214138
        %v5449 = vadd.f32 %v5417, 1.4214138
        %v5450 = vadd.f32 %v5418, 1.4214138
        %v5451 = vadd.f32 %v5419, 1.4214138
        %v5452 = vadd.f32 %v5420, 1.4214138
        %v5453 = vadd.f32 %v5421, 1.4214138
        %v5454 = vadd.f32 %v5422, 1.4214138
        %v5455 = vadd.f32 %v5423, 1.4214138
        %v5456 = vadd.f32 %v5424, 1.4214138
        %v5457 = vadd.f32 %v5425, 1.4214138
        %v5458 = vadd.f32 %v5426, 1.4214138
        %v5459 = vadd.f32 %v5427, 1.4214138
        %v5460 = vadd.f32 %v5428, 1.4214138
        %v5461 = vadd.f32 %v5429, 1.4214138
        %v5462 = vadd.f32 %v5430, 1.4214138
        %v5463 = vadd.f32 %v5431, 1.4214138
        %v5464 = vadd.f32 %v5432, 1.4214138
        %v5465 = vadd.f32 %v5433, 1.4214138
        %v5466 = vadd.f32 %v5434, 1.4214138
        %v5467 = vadd.f32 %v5435, 1.4214138
        %v5468 = vadd.f32 %v5436, 1.4214138
        %v5469 = vadd.f32 %v5437, 1.4214138
        %v5470 = vadd.f32 %v5438, 1.4214138
        %v5471 = vadd.f32 %v5439, 1.4214138
        %v5472 = vadd.f32 %v5440, 1.4214138
        %v5473 = vadd.f32 %v5441, 1.4214138
        %v5474 = vadd.f32 %v5442, 1.4214138
        %v5475 = vadd.f32 %v5443, 1.4214138
        %v5476 = vadd.f32 %v5444, 1.4214138
        %v5477 = vmul.f32 %v5445, %v5317
        %v5478 = vmul.f32 %v5446, %v5318
        %v5479 = vmul.f32 %v5447, %v5319
        %v5480 = vmul.f32 %v5448, %v5320
        %v5481 = vmul.f32 %v5449, %v5321
        %v5482 = vmul.f32 %v5450, %v5322
        %v5483 = vmul.f32 %v5451, %v5323
        %v5484 = vmul.f32 %v5452, %v5324
        %v5485 = vmul.f32 %v5453, %v5325
        %v5486 = vmul.f32 %v5454, %v5326
        %v5487 = vmul.f32 %v5455, %v5327
        %v5488 = vmul.f32 %v5456, %v5328
        %v5489 = vmul.f32 %v5457, %v5329
        %v5490 = vmul.f32 %v5458, %v5330
        %v5491 = vmul.f32 %v5459, %v5331
        %v5492 = vmul.f32 %v5460, %v5332
        %v5493 = vmul.f32 %v5461, %v5333
        %v5494 = vmul.f32 %v5462, %v5334
        %v5495 = vmul.f32 %v5463, %v5335
        %v5496 = vmul.f32 %v5464, %v5336
        %v5497 = vmul.f32 %v5465, %v5337
        %v5498 = vmul.f32 %v5466, %v5338
        %v5499 = vmul.f32 %v5467, %v5339
        %v5500 = vmul.f32 %v5468, %v5340
        %v5501 = vmul.f32 %v5469, %v5341
        %v5502 = vmul.f32 %v5470, %v5342
        %v5503 = vmul.f32 %v5471, %v5343
        %v5504 = vmul.f32 %v5472, %v5344
        %v5505 = vmul.f32 %v5473, %v5345
        %v5506 = vmul.f32 %v5474, %v5346
        %v5507 = vmul.f32 %v5475, %v5347
        %v5508 = vmul.f32 %v5476, %v5348
        %v5509 = vadd.f32 %v5477, -0.28449672
        %v5510 = vadd.f32 %v5478, -0.28449672
        %v5511 = vadd.f32 %v5479, -0.28449672
        %v5512 = vadd.f32 %v5480, -0.28449672
        %v5513 = vadd.f32 %v5481, -0.28449672
        %v5514 = vadd.f32 %v5482, -0.28449672
        %v5515 = vadd.f32 %v5483, -0.28449672
        %v5516 = vadd.f32 %v5484, -0.28449672
        %v5517 = vadd.f32 %v5485, -0.28449672
        %v5518 = vadd.f32 %v5486, -0.28449672
        %v5519 = vadd.f32 %v5487, -0.28449672
        %v5520 = vadd.f32 %v5488, -0.28449672
        %v5521 = vadd.f32 %v5489, -0.28449672
        %v5522 = vadd.f32 %v5490, -0.28449672
        %v5523 = vadd.f32 %v5491, -0.28449672
        %v5524 = vadd.f32 %v5492, -0.28449672
        %v5525 = vadd.f32 %v5493, -0.28449672
        %v5526 = vadd.f32 %v5494, -0.28449672
        %v5527 = vadd.f32 %v5495, -0.28449672
        %v5528 = vadd.f32 %v5496, -0.28449672
        %v5529 = vadd.f32 %v5497, -0.28449672
        %v5530 = vadd.f32 %v5498, -0.28449672
        %v5531 = vadd.f32 %v5499, -0.28449672
        %v5532 = vadd.f32 %v5500, -0.28449672
        %v5533 = vadd.f32 %v5501, -0.28449672
        %v5534 = vadd.f32 %v5502, -0.28449672
        %v5535 = vadd.f32 %v5503, -0.28449672
        %v5536 = vadd.f32 %v5504, -0.28449672
        %v5537 = vadd.f32 %v5505, -0.28449672
        %v5538 = vadd.f32 %v5506, -0.28449672
        %v5539 = vadd.f32 %v5507, -0.28449672
        %v5540 = vadd.f32 %v5508, -0.28449672
        %v5541 = vmul.f32 %v5509, %v5317
        %v5542 = vmul.f32 %v5510, %v5318
        %v5543 = vmul.f32 %v5511, %v5319
        %v5544 = vmul.f32 %v5512, %v5320
        %v5545 = vmul.f32 %v5513, %v5321
        %v5546 = vmul.f32 %v5514, %v5322
        %v5547 = vmul.f32 %v5515, %v5323
        %v5548 = vmul.f32 %v5516, %v5324
        %v5549 = vmul.f32 %v5517, %v5325
        %v5550 = vmul.f32 %v5518, %v5326
        %v5551 = vmul.f32 %v5519, %v5327
        %v5552 = vmul.f32 %v5520, %v5328
        %v5553 = vmul.f32 %v5521, %v5329
        %v5554 = vmul.f32 %v5522, %v5330
        %v5555 = vmul.f32 %v5523, %v5331
        %v5556 = vmul.f32 %v5524, %v5332
        %v5557 = vmul.f32 %v5525, %v5333
        %v5558 = vmul.f32 %v5526, %v5334
        %v5559 = vmul.f32 %v5527, %v5335
        %v5560 = vmul.f32 %v5528, %v5336
        %v5561 = vmul.f32 %v5529, %v5337
        %v5562 = vmul.f32 %v5530, %v5338
        %v5563 = vmul.f32 %v5531, %v5339
        %v5564 = vmul.f32 %v5532, %v5340
        %v5565 = vmul.f32 %v5533, %v5341
        %v5566 = vmul.f32 %v5534, %v5342
        %v5567 = vmul.f32 %v5535, %v5343
        %v5568 = vmul.f32 %v5536, %v5344
        %v5569 = vmul.f32 %v5537, %v5345
        %v5570 = vmul.f32 %v5538, %v5346
        %v5571 = vmul.f32 %v5539, %v5347
        %v5572 = vmul.f32 %v5540, %v5348
        %v5573 = vadd.f32 %v5541, 0.2548296
        %v5574 = vadd.f32 %v5542, 0.2548296
        %v5575 = vadd.f32 %v5543, 0.2548296
        %v5576 = vadd.f32 %v5544, 0.2548296
        %v5577 = vadd.f32 %v5545, 0.2548296
        %v5578 = vadd.f32 %v5546, 0.2548296
        %v5579 = vadd.f32 %v5547, 0.2548296
        %v5580 = vadd.f32 %v5548, 0.2548296
        %v5581 = vadd.f32 %v5549, 0.2548296
        %v5582 = vadd.f32 %v5550, 0.2548296
        %v5583 = vadd.f32 %v5551, 0.2548296
        %v5584 = vadd.f32 %v5552, 0.2548296
        %v5585 = vadd.f32 %v5553, 0.2548296
        %v5586 = vadd.f32 %v5554, 0.2548296
        %v5587 = vadd.f32 %v5555, 0.2548296
        %v5588 = vadd.f32 %v5556, 0.2548296
        %v5589 = vadd.f32 %v5557, 0.2548296
        %v5590 = vadd.f32 %v5558, 0.2548296
        %v5591 = vadd.f32 %v5559, 0.2548296
        %v5592 = vadd.f32 %v5560, 0.2548296
        %v5593 = vadd.f32 %v5561, 0.2548296
        %v5594 = vadd.f32 %v5562, 0.2548296
        %v5595 = vadd.f32 %v5563, 0.2548296
        %v5596 = vadd.f32 %v5564, 0.2548296
        %v5597 = vadd.f32 %v5565, 0.2548296
        %v5598 = vadd.f32 %v5566, 0.2548296
        %v5599 = vadd.f32 %v5567, 0.2548296
        %v5600 = vadd.f32 %v5568, 0.2548296
        %v5601 = vadd.f32 %v5569, 0.2548296
        %v5602 = vadd.f32 %v5570, 0.2548296
        %v5603 = vadd.f32 %v5571, 0.2548296
        %v5604 = vadd.f32 %v5572, 0.2548296
        %v5605 = vmul.f32 %v5573, %v5317
        %v5606 = vmul.f32 %v5574, %v5318
        %v5607 = vmul.f32 %v5575, %v5319
        %v5608 = vmul.f32 %v5576, %v5320
        %v5609 = vmul.f32 %v5577, %v5321
        %v5610 = vmul.f32 %v5578, %v5322
        %v5611 = vmul.f32 %v5579, %v5323
        %v5612 = vmul.f32 %v5580, %v5324
        %v5613 = vmul.f32 %v5581, %v5325
        %v5614 = vmul.f32 %v5582, %v5326
        %v5615 = vmul.f32 %v5583, %v5327
        %v5616 = vmul.f32 %v5584, %v5328
        %v5617 = vmul.f32 %v5585, %v5329
        %v5618 = vmul.f32 %v5586, %v5330
        %v5619 = vmul.f32 %v5587, %v5331
        %v5620 = vmul.f32 %v5588, %v5332
        %v5621 = vmul.f32 %v5589, %v5333
        %v5622 = vmul.f32 %v5590, %v5334
        %v5623 = vmul.f32 %v5591, %v5335
        %v5624 = vmul.f32 %v5592, %v5336
        %v5625 = vmul.f32 %v5593, %v5337
        %v5626 = vmul.f32 %v5594, %v5338
        %v5627 = vmul.f32 %v5595, %v5339
        %v5628 = vmul.f32 %v5596, %v5340
        %v5629 = vmul.f32 %v5597, %v5341
        %v5630 = vmul.f32 %v5598, %v5342
        %v5631 = vmul.f32 %v5599, %v5343
        %v5632 = vmul.f32 %v5600, %v5344
        %v5633 = vmul.f32 %v5601, %v5345
        %v5634 = vmul.f32 %v5602, %v5346
        %v5635 = vmul.f32 %v5603, %v5347
        %v5636 = vmul.f32 %v5604, %v5348
        %v5637 = vsub.f32 0.0, %v5221
        %v5638 = vsub.f32 0.0, %v5222
        %v5639 = vsub.f32 0.0, %v5223
        %v5640 = vsub.f32 0.0, %v5224
        %v5641 = vsub.f32 0.0, %v5225
        %v5642 = vsub.f32 0.0, %v5226
        %v5643 = vsub.f32 0.0, %v5227
        %v5644 = vsub.f32 0.0, %v5228
        %v5645 = vsub.f32 0.0, %v5229
        %v5646 = vsub.f32 0.0, %v5230
        %v5647 = vsub.f32 0.0, %v5231
        %v5648 = vsub.f32 0.0, %v5232
        %v5649 = vsub.f32 0.0, %v5233
        %v5650 = vsub.f32 0.0, %v5234
        %v5651 = vsub.f32 0.0, %v5235
        %v5652 = vsub.f32 0.0, %v5236
        %v5653 = vsub.f32 0.0, %v5237
        %v5654 = vsub.f32 0.0, %v5238
        %v5655 = vsub.f32 0.0, %v5239
        %v5656 = vsub.f32 0.0, %v5240
        %v5657 = vsub.f32 0.0, %v5241
        %v5658 = vsub.f32 0.0, %v5242
        %v5659 = vsub.f32 0.0, %v5243
        %v5660 = vsub.f32 0.0, %v5244
        %v5661 = vsub.f32 0.0, %v5245
        %v5662 = vsub.f32 0.0, %v5246
        %v5663 = vsub.f32 0.0, %v5247
        %v5664 = vsub.f32 0.0, %v5248
        %v5665 = vsub.f32 0.0, %v5249
        %v5666 = vsub.f32 0.0, %v5250
        %v5667 = vsub.f32 0.0, %v5251
        %v5668 = vsub.f32 0.0, %v5252
        %v5669 = vmul.f32 %v5637, %v5221
        %v5670 = vmul.f32 %v5638, %v5222
        %v5671 = vmul.f32 %v5639, %v5223
        %v5672 = vmul.f32 %v5640, %v5224
        %v5673 = vmul.f32 %v5641, %v5225
        %v5674 = vmul.f32 %v5642, %v5226
        %v5675 = vmul.f32 %v5643, %v5227
        %v5676 = vmul.f32 %v5644, %v5228
        %v5677 = vmul.f32 %v5645, %v5229
        %v5678 = vmul.f32 %v5646, %v5230
        %v5679 = vmul.f32 %v5647, %v5231
        %v5680 = vmul.f32 %v5648, %v5232
        %v5681 = vmul.f32 %v5649, %v5233
        %v5682 = vmul.f32 %v5650, %v5234
        %v5683 = vmul.f32 %v5651, %v5235
        %v5684 = vmul.f32 %v5652, %v5236
        %v5685 = vmul.f32 %v5653, %v5237
        %v5686 = vmul.f32 %v5654, %v5238
        %v5687 = vmul.f32 %v5655, %v5239
        %v5688 = vmul.f32 %v5656, %v5240
        %v5689 = vmul.f32 %v5657, %v5241
        %v5690 = vmul.f32 %v5658, %v5242
        %v5691 = vmul.f32 %v5659, %v5243
        %v5692 = vmul.f32 %v5660, %v5244
        %v5693 = vmul.f32 %v5661, %v5245
        %v5694 = vmul.f32 %v5662, %v5246
        %v5695 = vmul.f32 %v5663, %v5247
        %v5696 = vmul.f32 %v5664, %v5248
        %v5697 = vmul.f32 %v5665, %v5249
        %v5698 = vmul.f32 %v5666, %v5250
        %v5699 = vmul.f32 %v5667, %v5251
        %v5700 = vmul.f32 %v5668, %v5252
        %v5701 = vmul.f32 %v5669, 1.442695
        %v5702 = vpow.pop %v5701
        %v5703 = vmul.f32 %v5670, 1.442695
        %v5704 = vpow.pop %v5703
        %v5705 = vmul.f32 %v5671, 1.442695
        %v5706 = vpow.pop %v5705
        %v5707 = vmul.f32 %v5672, 1.442695
        %v5708 = vpow.pop %v5707
        %v5709 = vmul.f32 %v5673, 1.442695
        %v5710 = vpow.pop %v5709
        %v5711 = vmul.f32 %v5674, 1.442695
        %v5712 = vpow.pop %v5711
        %v5713 = vmul.f32 %v5675, 1.442695
        %v5714 = vpow.pop %v5713
        %v5715 = vmul.f32 %v5676, 1.442695
        %v5716 = vpow.pop %v5715
        %v5717 = vmul.f32 %v5677, 1.442695
        %v5718 = vpow.pop %v5717
        %v5719 = vmul.f32 %v5678, 1.442695
        %v5720 = vpow.pop %v5719
        %v5721 = vmul.f32 %v5679, 1.442695
        %v5722 = vpow.pop %v5721
        %v5723 = vmul.f32 %v5680, 1.442695
        %v5724 = vpow.pop %v5723
        %v5725 = vmul.f32 %v5681, 1.442695
        %v5726 = vpow.pop %v5725
        %v5727 = vmul.f32 %v5682, 1.442695
        %v5728 = vpow.pop %v5727
        %v5729 = vmul.f32 %v5683, 1.442695
        %v5730 = vpow.pop %v5729
        %v5731 = vmul.f32 %v5684, 1.442695
        %v5732 = vpow.pop %v5731
        %v5733 = vmul.f32 %v5685, 1.442695
        %v5734 = vpow.pop %v5733
        %v5735 = vmul.f32 %v5686, 1.442695
        %v5736 = vpow.pop %v5735
        %v5737 = vmul.f32 %v5687, 1.442695
        %v5738 = vpow.pop %v5737
        %v5739 = vmul.f32 %v5688, 1.442695
        %v5740 = vpow.pop %v5739
        %v5741 = vmul.f32 %v5689, 1.442695
        %v5742 = vpow.pop %v5741
        %v5743 = vmul.f32 %v5690, 1.442695
        %v5744 = vpow.pop %v5743
        %v5745 = vmul.f32 %v5691, 1.442695
        %v5746 = vpow.pop %v5745
        %v5747 = vmul.f32 %v5692, 1.442695
        %v5748 = vpow.pop %v5747
        %v5749 = vmul.f32 %v5693, 1.442695
        %v5750 = vpow.pop %v5749
        %v5751 = vmul.f32 %v5694, 1.442695
        %v5752 = vpow.pop %v5751
        %v5753 = vmul.f32 %v5695, 1.442695
        %v5754 = vpow.pop %v5753
        %v5755 = vmul.f32 %v5696, 1.442695
        %v5756 = vpow.pop %v5755
        %v5757 = vmul.f32 %v5697, 1.442695
        %v5758 = vpow.pop %v5757
        %v5759 = vmul.f32 %v5698, 1.442695
        %v5760 = vpow.pop %v5759
        %v5761 = vmul.f32 %v5699, 1.442695
        %v5762 = vpow.pop %v5761
        %v5763 = vmul.f32 %v5700, 1.442695
        %v5764 = vpow.pop %v5763
        %v5765 = vmul.f32 %v5605, %v5702
        %v5766 = vmul.f32 %v5606, %v5704
        %v5767 = vmul.f32 %v5607, %v5706
        %v5768 = vmul.f32 %v5608, %v5708
        %v5769 = vmul.f32 %v5609, %v5710
        %v5770 = vmul.f32 %v5610, %v5712
        %v5771 = vmul.f32 %v5611, %v5714
        %v5772 = vmul.f32 %v5612, %v5716
        %v5773 = vmul.f32 %v5613, %v5718
        %v5774 = vmul.f32 %v5614, %v5720
        %v5775 = vmul.f32 %v5615, %v5722
        %v5776 = vmul.f32 %v5616, %v5724
        %v5777 = vmul.f32 %v5617, %v5726
        %v5778 = vmul.f32 %v5618, %v5728
        %v5779 = vmul.f32 %v5619, %v5730
        %v5780 = vmul.f32 %v5620, %v5732
        %v5781 = vmul.f32 %v5621, %v5734
        %v5782 = vmul.f32 %v5622, %v5736
        %v5783 = vmul.f32 %v5623, %v5738
        %v5784 = vmul.f32 %v5624, %v5740
        %v5785 = vmul.f32 %v5625, %v5742
        %v5786 = vmul.f32 %v5626, %v5744
        %v5787 = vmul.f32 %v5627, %v5746
        %v5788 = vmul.f32 %v5628, %v5748
        %v5789 = vmul.f32 %v5629, %v5750
        %v5790 = vmul.f32 %v5630, %v5752
        %v5791 = vmul.f32 %v5631, %v5754
        %v5792 = vmul.f32 %v5632, %v5756
        %v5793 = vmul.f32 %v5633, %v5758
        %v5794 = vmul.f32 %v5634, %v5760
        %v5795 = vmul.f32 %v5635, %v5762
        %v5796 = vmul.f32 %v5636, %v5764
        %v5797 = vsub.f32 1.0, %v5765
        %v5798 = vsub.f32 1.0, %v5766
        %v5799 = vsub.f32 1.0, %v5767
        %v5800 = vsub.f32 1.0, %v5768
        %v5801 = vsub.f32 1.0, %v5769
        %v5802 = vsub.f32 1.0, %v5770
        %v5803 = vsub.f32 1.0, %v5771
        %v5804 = vsub.f32 1.0, %v5772
        %v5805 = vsub.f32 1.0, %v5773
        %v5806 = vsub.f32 1.0, %v5774
        %v5807 = vsub.f32 1.0, %v5775
        %v5808 = vsub.f32 1.0, %v5776
        %v5809 = vsub.f32 1.0, %v5777
        %v5810 = vsub.f32 1.0, %v5778
        %v5811 = vsub.f32 1.0, %v5779
        %v5812 = vsub.f32 1.0, %v5780
        %v5813 = vsub.f32 1.0, %v5781
        %v5814 = vsub.f32 1.0, %v5782
        %v5815 = vsub.f32 1.0, %v5783
        %v5816 = vsub.f32 1.0, %v5784
        %v5817 = vsub.f32 1.0, %v5785
        %v5818 = vsub.f32 1.0, %v5786
        %v5819 = vsub.f32 1.0, %v5787
        %v5820 = vsub.f32 1.0, %v5788
        %v5821 = vsub.f32 1.0, %v5789
        %v5822 = vsub.f32 1.0, %v5790
        %v5823 = vsub.f32 1.0, %v5791
        %v5824 = vsub.f32 1.0, %v5792
        %v5825 = vsub.f32 1.0, %v5793
        %v5826 = vsub.f32 1.0, %v5794
        %v5827 = vsub.f32 1.0, %v5795
        %v5828 = vsub.f32 1.0, %v5796
        %vm5829 = vcmp.ge.f32.partialorder %v5189, 0.0
        %vm5830 = vcmp.ge.f32.partialorder %v5190, 0.0
        %vm5831 = vcmp.ge.f32.partialorder %v5191, 0.0
        %vm5832 = vcmp.ge.f32.partialorder %v5192, 0.0
        %vm5833 = vcmp.ge.f32.partialorder %v5193, 0.0
        %vm5834 = vcmp.ge.f32.partialorder %v5194, 0.0
        %vm5835 = vcmp.ge.f32.partialorder %v5195, 0.0
        %vm5836 = vcmp.ge.f32.partialorder %v5196, 0.0
        %vm5837 = vcmp.ge.f32.partialorder %v5197, 0.0
        %vm5838 = vcmp.ge.f32.partialorder %v5198, 0.0
        %vm5839 = vcmp.ge.f32.partialorder %v5199, 0.0
        %vm5840 = vcmp.ge.f32.partialorder %v5200, 0.0
        %vm5841 = vcmp.ge.f32.partialorder %v5201, 0.0
        %vm5842 = vcmp.ge.f32.partialorder %v5202, 0.0
        %vm5843 = vcmp.ge.f32.partialorder %v5203, 0.0
        %vm5844 = vcmp.ge.f32.partialorder %v5204, 0.0
        %vm5845 = vcmp.ge.f32.partialorder %v5205, 0.0
        %vm5846 = vcmp.ge.f32.partialorder %v5206, 0.0
        %vm5847 = vcmp.ge.f32.partialorder %v5207, 0.0
        %vm5848 = vcmp.ge.f32.partialorder %v5208, 0.0
        %vm5849 = vcmp.ge.f32.partialorder %v5209, 0.0
        %vm5850 = vcmp.ge.f32.partialorder %v5210, 0.0
        %vm5851 = vcmp.ge.f32.partialorder %v5211, 0.0
        %vm5852 = vcmp.ge.f32.partialorder %v5212, 0.0
        %vm5853 = vcmp.ge.f32.partialorder %v5213, 0.0
        %vm5854 = vcmp.ge.f32.partialorder %v5214, 0.0
        %vm5855 = vcmp.ge.f32.partialorder %v5215, 0.0
        %vm5856 = vcmp.ge.f32.partialorder %v5216, 0.0
        %vm5857 = vcmp.ge.f32.partialorder %v5217, 0.0
        %vm5858 = vcmp.ge.f32.partialorder %v5218, 0.0
        %vm5859 = vcmp.ge.f32.partialorder %v5219, 0.0
        %vm5860 = vcmp.ge.f32.partialorder %v5220, 0.0
        %v5861 = vsub.f32 0.0, %v5797
        %v5862 = vsub.f32 0.0, %v5798
        %v5863 = vsub.f32 0.0, %v5799
        %v5864 = vsub.f32 0.0, %v5800
        %v5865 = vsub.f32 0.0, %v5801
        %v5866 = vsub.f32 0.0, %v5802
        %v5867 = vsub.f32 0.0, %v5803
        %v5868 = vsub.f32 0.0, %v5804
        %v5869 = vsub.f32 0.0, %v5805
        %v5870 = vsub.f32 0.0, %v5806
        %v5871 = vsub.f32 0.0, %v5807
        %v5872 = vsub.f32 0.0, %v5808
        %v5873 = vsub.f32 0.0, %v5809
        %v5874 = vsub.f32 0.0, %v5810
        %v5875 = vsub.f32 0.0, %v5811
        %v5876 = vsub.f32 0.0, %v5812
        %v5877 = vsub.f32 0.0, %v5813
        %v5878 = vsub.f32 0.0, %v5814
        %v5879 = vsub.f32 0.0, %v5815
        %v5880 = vsub.f32 0.0, %v5816
        %v5881 = vsub.f32 0.0, %v5817
        %v5882 = vsub.f32 0.0, %v5818
        %v5883 = vsub.f32 0.0, %v5819
        %v5884 = vsub.f32 0.0, %v5820
        %v5885 = vsub.f32 0.0, %v5821
        %v5886 = vsub.f32 0.0, %v5822
        %v5887 = vsub.f32 0.0, %v5823
        %v5888 = vsub.f32 0.0, %v5824
        %v5889 = vsub.f32 0.0, %v5825
        %v5890 = vsub.f32 0.0, %v5826
        %v5891 = vsub.f32 0.0, %v5827
        %v5892 = vsub.f32 0.0, %v5828
        %v5893 = vsel %vm5829, %v5797, %v5861
        %v5894 = vsel %vm5830, %v5798, %v5862
        %v5895 = vsel %vm5831, %v5799, %v5863
        %v5896 = vsel %vm5832, %v5800, %v5864
        %v5897 = vsel %vm5833, %v5801, %v5865
        %v5898 = vsel %vm5834, %v5802, %v5866
        %v5899 = vsel %vm5835, %v5803, %v5867
        %v5900 = vsel %vm5836, %v5804, %v5868
        %v5901 = vsel %vm5837, %v5805, %v5869
        %v5902 = vsel %vm5838, %v5806, %v5870
        %v5903 = vsel %vm5839, %v5807, %v5871
        %v5904 = vsel %vm5840, %v5808, %v5872
        %v5905 = vsel %vm5841, %v5809, %v5873
        %v5906 = vsel %vm5842, %v5810, %v5874
        %v5907 = vsel %vm5843, %v5811, %v5875
        %v5908 = vsel %vm5844, %v5812, %v5876
        %v5909 = vsel %vm5845, %v5813, %v5877
        %v5910 = vsel %vm5846, %v5814, %v5878
        %v5911 = vsel %vm5847, %v5815, %v5879
        %v5912 = vsel %vm5848, %v5816, %v5880
        %v5913 = vsel %vm5849, %v5817, %v5881
        %v5914 = vsel %vm5850, %v5818, %v5882
        %v5915 = vsel %vm5851, %v5819, %v5883
        %v5916 = vsel %vm5852, %v5820, %v5884
        %v5917 = vsel %vm5853, %v5821, %v5885
        %v5918 = vsel %vm5854, %v5822, %v5886
        %v5919 = vsel %vm5855, %v5823, %v5887
        %v5920 = vsel %vm5856, %v5824, %v5888
        %v5921 = vsel %vm5857, %v5825, %v5889
        %v5922 = vsel %vm5858, %v5826, %v5890
        %v5923 = vsel %vm5859, %v5827, %v5891
        %v5924 = vsel %vm5860, %v5828, %v5892
        %v5925 = vadd.f32 %v5893, 1.0
        %v5926 = vadd.f32 %v5894, 1.0
        %v5927 = vadd.f32 %v5895, 1.0
        %v5928 = vadd.f32 %v5896, 1.0
        %v5929 = vadd.f32 %v5897, 1.0
        %v5930 = vadd.f32 %v5898, 1.0
        %v5931 = vadd.f32 %v5899, 1.0
        %v5932 = vadd.f32 %v5900, 1.0
        %v5933 = vadd.f32 %v5901, 1.0
        %v5934 = vadd.f32 %v5902, 1.0
        %v5935 = vadd.f32 %v5903, 1.0
        %v5936 = vadd.f32 %v5904, 1.0
        %v5937 = vadd.f32 %v5905, 1.0
        %v5938 = vadd.f32 %v5906, 1.0
        %v5939 = vadd.f32 %v5907, 1.0
        %v5940 = vadd.f32 %v5908, 1.0
        %v5941 = vadd.f32 %v5909, 1.0
        %v5942 = vadd.f32 %v5910, 1.0
        %v5943 = vadd.f32 %v5911, 1.0
        %v5944 = vadd.f32 %v5912, 1.0
        %v5945 = vadd.f32 %v5913, 1.0
        %v5946 = vadd.f32 %v5914, 1.0
        %v5947 = vadd.f32 %v5915, 1.0
        %v5948 = vadd.f32 %v5916, 1.0
        %v5949 = vadd.f32 %v5917, 1.0
        %v5950 = vadd.f32 %v5918, 1.0
        %v5951 = vadd.f32 %v5919, 1.0
        %v5952 = vadd.f32 %v5920, 1.0
        %v5953 = vadd.f32 %v5921, 1.0
        %v5954 = vadd.f32 %v5922, 1.0
        %v5955 = vadd.f32 %v5923, 1.0
        %v5956 = vadd.f32 %v5924, 1.0
        %v5957 = vmul.f32 %v5101, %v5925
        %v5958 = vmul.f32 %v5150, %v5926
        %v5959 = vmul.f32 %v5103, %v5927
        %v5960 = vmul.f32 %v5152, %v5928
        %v5961 = vmul.f32 %v5106, %v5929
        %v5962 = vmul.f32 %v5155, %v5930
        %v5963 = vmul.f32 %v5108, %v5931
        %v5964 = vmul.f32 %v5157, %v5932
        %v5965 = vmul.f32 %v5111, %v5933
        %v5966 = vmul.f32 %v5160, %v5934
        %v5967 = vmul.f32 %v5113, %v5935
        %v5968 = vmul.f32 %v5162, %v5936
        %v5969 = vmul.f32 %v5116, %v5937
        %v5970 = vmul.f32 %v5165, %v5938
        %v5971 = vmul.f32 %v5118, %v5939
        %v5972 = vmul.f32 %v5167, %v5940
        %v5973 = vmul.f32 %v5121, %v5941
        %v5974 = vmul.f32 %v5170, %v5942
        %v5975 = vmul.f32 %v5123, %v5943
        %v5976 = vmul.f32 %v5172, %v5944
        %v5977 = vmul.f32 %v5126, %v5945
        %v5978 = vmul.f32 %v5175, %v5946
        %v5979 = vmul.f32 %v5128, %v5947
        %v5980 = vmul.f32 %v5177, %v5948
        %v5981 = vmul.f32 %v5131, %v5949
        %v5982 = vmul.f32 %v5180, %v5950
        %v5983 = vmul.f32 %v5133, %v5951
        %v5984 = vmul.f32 %v5182, %v5952
        %v5985 = vmul.f32 %v5136, %v5953
        %v5986 = vmul.f32 %v5185, %v5954
        %v5987 = vmul.f32 %v5138, %v5955
        %v5988 = vmul.f32 %v5187, %v5956
        %v5989 = vld [vmem:[%s469] sm:$0xf]
        %v5990 = vld [vmem:[%s469 + $0x4] sm:$0xf]
        %v5991 = vld [vmem:[%s469 + $0x8] sm:$0xf]
        %v5992 = vld [vmem:[%s469 + $0xc] sm:$0xf]
        %v5993 = vpack.c.bf16 %v5959, %v5957
        %v5994 = vpack.c.bf16 %v5960, %v5958
        %v5995 = vpack.c.bf16 %v5963, %v5961
        %v5996 = vpack.c.bf16 %v5964, %v5962
        %v5997 = vpack.c.bf16 %v5967, %v5965
        %v5998 = vpack.c.bf16 %v5968, %v5966
        %v5999 = vpack.c.bf16 %v5971, %v5969
        %v6000 = vpack.c.bf16 %v5972, %v5970
        %v6001 = vpack.c.bf16 %v5975, %v5973
        %v6002 = vpack.c.bf16 %v5976, %v5974
        %v6003 = vpack.c.bf16 %v5979, %v5977
        %v6004 = vpack.c.bf16 %v5980, %v5978
        %v6005 = vpack.c.bf16 %v5983, %v5981
        %v6006 = vpack.c.bf16 %v5984, %v5982
        %v6007 = vpack.c.bf16 %v5987, %v5985
        %v6008 = vpack.c.bf16 %v5988, %v5986
        %v6009 = vld [vmem:[%s598] sm:$0xff]
        %v6010 = vld [vmem:[%s598 + $0x8] sm:$0xff]
        %v6011 = vld [vmem:[%s598 + $0x10] sm:$0xff]
        %v6012 = vld [vmem:[%s598 + $0x18] sm:$0xff]
        %6014 = vset.pattern.permute.xlu0 0
        %6015 = vperm.xlu0 %6014, %v6009
        %v6016 = vpop.permute.xlu0 %6015
        %6019 = vset.pattern.permute.xlu0 0
        %6020 = vperm.xlu0 %6019, %v6010
        %v6021 = vpop.permute.xlu0 %6020
        %6024 = vset.pattern.permute.xlu0 0
        %6025 = vperm.xlu0 %6024, %v6011
        %v6026 = vpop.permute.xlu0 %6025
        %6029 = vset.pattern.permute.xlu0 0
        %6030 = vperm.xlu0 %6029, %v6012
        %v6031 = vpop.permute.xlu0 %6030
        %v6037 = vunpack.c.l.b16 %v5989
        %v6038 = vunpack.c.l.b16 %v5990
        %v6039 = vunpack.c.l.b16 %v5991
        %v6040 = vunpack.c.l.b16 %v5992
        %v6041 = vpack.c.b16 %v6038, %v6037
        %v6042 = vpack.c.b16 %v6040, %v6039
        %6045 = vmatpush.bf16.msra.mxu0 %v6007
        %6046 = vmatpush.bf16.msra.mxu0 %v6005
        %6047 = vmatpush.bf16.msra.mxu0 %v6003
        %6048 = vmatpush.bf16.msra.mxu0 %v6001
        %6049 = vmatpush.bf16.msra.mxu0 %v5999
        %6050 = vmatpush.bf16.msra.mxu0 %v5997
        %6051 = vmatpush.bf16.msra.mxu0 %v5995
        %6052 = vmatpush.bf16.msra.mxu0 %v5993
        %6053 = vmatmul.bf16.gmra.mxu0 %v6041
        %v6054 = vpop.f32.mrf.mxu0
        %v6055 = vadd.f32 %v6016, %v6054
        %v6056 = vpop.f32.mrf.mxu0
        %v6057 = vadd.f32 %v6021, %v6056
        %6058 = vmatmul.bf16.gmra.mxu0 %v6042
        %v6059 = vpop.f32.mrf.mxu0
        %v6060 = vadd.f32 %v6026, %v6059
        %v6061 = vpop.f32.mrf.mxu0
        %v6062 = vadd.f32 %v6031, %v6061
        %6063 = vdwg.mxu0
        %6064 = vmatpush.bf16.msra.mxu0 %v6008
        %6065 = vmatpush.bf16.msra.mxu0 %v6006
        %6066 = vmatpush.bf16.msra.mxu0 %v6004
        %6067 = vmatpush.bf16.msra.mxu0 %v6002
        %6068 = vmatpush.bf16.msra.mxu0 %v6000
        %6069 = vmatpush.bf16.msra.mxu0 %v5998
        %6070 = vmatpush.bf16.msra.mxu0 %v5996
        %6071 = vmatpush.bf16.msra.mxu0 %v5994
        %6072 = vmatmul.bf16.gmra.mxu0 %v6041
        %v6073 = vpop.f32.mrf.mxu0
        %v6074 = vadd.f32 %v6016, %v6073
        %v6075 = vpop.f32.mrf.mxu0
        %v6076 = vadd.f32 %v6021, %v6075
        %6077 = vmatmul.bf16.gmra.mxu0 %v6042
        %v6078 = vpop.f32.mrf.mxu0
        %v6079 = vadd.f32 %v6026, %v6078
        %v6080 = vpop.f32.mrf.mxu0
        %v6081 = vadd.f32 %v6031, %v6080
        %6082 = vdwg.mxu0
        %v6083 = vadd.f32 %v4847, %v6055
        %v6084 = vadd.f32 %v4848, %v6074
        %v6085 = vadd.f32 %v4849, %v6057
        %v6086 = vadd.f32 %v4850, %v6076
        %v6087 = vadd.f32 %v4851, %v6060
        %v6088 = vadd.f32 %v4852, %v6079
        %v6089 = vadd.f32 %v4853, %v6062
        %v6090 = vadd.f32 %v4854, %v6081
        %6091 = vst [vmem:[#allocation2] sm:$0xff] %v6083
        %6092 = vst [vmem:[#allocation2 + $0x8] sm:$0xff] %v6084
        %6093 = vst [vmem:[#allocation2 + $0x10] sm:$0xff] %v6085
        %6094 = vst [vmem:[#allocation2 + $0x18] sm:$0xff] %v6086
        %6095 = vst [vmem:[#allocation2 + $0x20] sm:$0xff] %v6087
        %6096 = vst [vmem:[#allocation2 + $0x28] sm:$0xff] %v6088
        %6097 = vst [vmem:[#allocation2 + $0x30] sm:$0xff] %v6089
        %6098 = vst [vmem:[#allocation2 + $0x38] sm:$0xff] %v6090
        %p6099 = scmp.eq.s32.totalorder %s33, 1
        // Predicated region
        $region73: #{tpu_custom_call.1} parent=63 // pred_check
          %p6100 = pneg %p6099
        $region74: #{tpu_custom_call.1} parent=63 // pred_check_branch
          %6102 = sbr.rel (%p6100) target = $region76
        $region75: #{tpu_custom_call.1} parent=63 // pred_region
          %6103 = vst [vmem:[%s553] sm:$0xff] %v6083
          %6104 = vst [vmem:[%s553 + $0x8] sm:$0xff] %v6084
          %6105 = vst [vmem:[%s553 + $0x10] sm:$0xff] %v6085
          %6106 = vst [vmem:[%s553 + $0x18] sm:$0xff] %v6086
          %6107 = vst [vmem:[%s553 + $0x20] sm:$0xff] %v6087
          %6108 = vst [vmem:[%s553 + $0x28] sm:$0xff] %v6088
          %6109 = vst [vmem:[%s553 + $0x30] sm:$0xff] %v6089
          %6110 = vst [vmem:[%s553 + $0x38] sm:$0xff] %v6090
        $region76: #{tpu_custom_call.1} parent=63 // pred_fallthru
          _
        %s6111 = sand.u32 %s329, 1
        %s6112 = scalar_lea.sflag [#allocation6], %s6111
        %s6113 = sand.u32 %s329, 1
        %s6114 = smul.addr %s6113, 64
        %s6115 = scalar_lea.vmem [#allocation7], %s6114
        // Predicated region
        $region77: #{tpu_custom_call.1} parent=63 // pred_check
          %p6116 = pneg %p339
        $region78: #{tpu_custom_call.1} parent=63 // pred_check_branch
          %6118 = sbr.rel (%p6116) target = $region80
        $region79: #{tpu_custom_call.1} parent=63 // pred_region
          %6120 = vsyncadd %s6112, 0
          %s6121 = smul.addr %s32, 8
          %s6122 = smul.addr %s6121, 8
          %s6123 = scalar_lea.hbm %s11, %s6122
          %s6124 = sshll.u32 %s6115, 4
          %s6125 = int_to_ptr.vmem [resolvable:$true] %s6124
          %s6126 = sshll.u32 %s6123, 4
          %s6127 = int_to_ptr.hbm [resolvable:$true] %s6126
          %6132 = dma.vmem_to_hbm [thread:$0]  %s6125, 1024, %s6127, %s6112, 256, 256, 16
        $region80: #{tpu_custom_call.1} parent=63 // pred_fallthru
          _
      $region64: #{tpu_custom_call.1} parent=5 // pred_fallthru
        _
      %p6133 = scmp.le.s32.totalorder 2, %s23
      // Predicated region
      $region81: #{tpu_custom_call.1} parent=5 // pred_check
        %p6134 = pneg %p6133
      $region82: #{tpu_custom_call.1} parent=5 // pred_check_branch
        %6136 = sbr.rel (%p6134) target = $region84
      $region83: #{tpu_custom_call.1} parent=5 // pred_region
        %s6137 = ssub.s32 %s23, 2
        // Predicated region
        $region85: #{tpu_custom_call.1} parent=83 // pred_check
          %p6138 = pneg %p345
        $region86: #{tpu_custom_call.1} parent=83 // pred_check_branch
          %6140 = sbr.rel (%p6138) target = $region88
        $region87: #{tpu_custom_call.1} parent=83 // pred_region
          %s6141 = sand.u32 %s330, 1
          %s6142 = scalar_lea.sflag [#allocation6], %s6141
          %s6143 = sand.u32 %s330, 1
          %s6144 = smul.addr %s6143, 64
          %s6145 = scalar_lea.vmem [#allocation7], %s6144
          %6147 = dma.done %s6142, 1024
        $region88: #{tpu_custom_call.1} parent=83 // pred_fallthru
          _
      $region84: #{tpu_custom_call.1} parent=5 // pred_fallthru
        _
    $region6: #{tpu_custom_call.1} parent=1 // loop_footer
      %s27 = sadd.s32 1, %s23
    $region7: #{tpu_custom_call.1} parent=1 // loop_footer_branch
      %22 = sbr.rel target = $region3
    $region8: #{tpu_custom_call.1} parent=1 // loop_exit
      _
    %6148 = vsyncpa [#allocation5], 1
    %s6149 = scalar_lea.sflag [#allocation5], 1
    %6150 = vsyncpa %s6149, 1
    %6151 = vsyncpa [#allocation6], 1
    %s6152 = scalar_lea.sflag [#allocation6], 1
    %6153 = vsyncpa %s6152, 1

</llo_original>
